<compile_context>
chip_gen: v6e
topology: v6e:2x2x1
jax: 0.10.0
libtpu: 0.0.40
codegen_flags: <defaults>
</compile_context>

<pallas_src>
import functools
import math

import jax
import jax.numpy as jnp
from jax import lax
from jax.experimental import pallas as pl
from jax.experimental.pallas import tpu as pltpu


# ---------------------------- tile-size selection ---------------------------

def _tile_rows(m, preferred=256):
    """Row (sublane) tile: multiple of 8, or the full dim for small problems."""
    if m <= preferred:
        return m
    for t in (preferred, 512, 256, 128, 64, 32, 16, 8):
        if t <= preferred and m % t == 0:
            return t
    return m


def _tile_seq(s, preferred=128):
    """Query tile along the sequence (sublane dim): multiple of 8, or full."""
    if s <= preferred:
        return s
    for t in (preferred, 256, 128, 64, 32, 16, 8):
        if t <= preferred and s % t == 0:
            return t
    return s


def _tile_kv(s, preferred=512):
    """KV tile along the sequence: multiple of 128 (mask lane dim), or full."""
    if s <= preferred:
        return s
    for t in (preferred, 1024, 512, 256, 128):
        if t <= preferred and s % t == 0:
            return t
    return s


def _tile_lane(n, preferred=512):
    """Lane-dim tile (N / K of matmuls): multiple of 128, or full."""
    if n <= preferred:
        return n
    for t in (preferred, 1024, 512, 256, 128):
        if t <= preferred and n % t == 0:
            return t
    return n


# --------------------------------- kernels ----------------------------------

def _ln_qkv_kernel(x_ref, a_ref, b_ref,
                   wq_ref, bq_ref, wk_ref, bk_ref, wv_ref, bv_ref,
                   q_ref, k_ref, v_ref, *, eps, features):
    """Fused pre-norm LayerNorm + Q/K/V projections for one row tile."""
    x = x_ref[...].astype(jnp.float32)
    mean = jnp.mean(x, axis=-1, keepdims=True)
    # torch.Tensor.std(): UNBIASED estimator (divide by D-1), (std + eps) denom.
    var = jnp.sum((x - mean) ** 2, axis=-1, keepdims=True) / (features - 1)
    xn = a_ref[...] * (x - mean) / (jnp.sqrt(var) + eps) + b_ref[...]
    xn = xn.astype(wq_ref.dtype)
    q_ref[...] = (jnp.dot(xn, wq_ref[...], preferred_element_type=jnp.float32)
                  + bq_ref[...]).astype(q_ref.dtype)
    k_ref[...] = (jnp.dot(xn, wk_ref[...], preferred_element_type=jnp.float32)
                  + bk_ref[...]).astype(k_ref.dtype)
    v_ref[...] = (jnp.dot(xn, wv_ref[...], preferred_element_type=jnp.float32)
                  + bv_ref[...]).astype(v_ref.dtype)


def ln_qkv(x2d, ln_a, ln_b, attn_p, eps=1e-6):
    """x2d: [M, D] -> (q, k, v) each [M, D], with LayerNorm fused in."""
    M, D = x2d.shape
    tm = _tile_rows(M)
    row_spec = pl.BlockSpec((tm, D), lambda i: (i, 0))
    vec_spec = pl.BlockSpec((1, D), lambda i: (0, 0))
    w_spec = pl.BlockSpec((D, D), lambda i: (0, 0))
    return pl.pallas_call(
        functools.partial(_ln_qkv_kernel, eps=eps, features=D),
        out_shape=tuple(jax.ShapeDtypeStruct((M, D), x2d.dtype) for _ in range(3)),
        grid=(M // tm,),
        in_specs=[row_spec, vec_spec, vec_spec,
                  w_spec, vec_spec, w_spec, vec_spec, w_spec, vec_spec],
        out_specs=(row_spec, row_spec, row_spec),
        compiler_params=pltpu.CompilerParams(dimension_semantics=("parallel",)),
    )(x2d, ln_a.reshape(1, D), ln_b.reshape(1, D),
      attn_p["wq"], attn_p["bq"].reshape(1, D),
      attn_p["wk"], attn_p["bk"].reshape(1, D),
      attn_p["wv"], attn_p["bv"].reshape(1, D))


def _flash_attn_kernel(bias_ref, q_ref, k_ref, v_ref, o_ref,
                       m_sc, l_sc, acc_sc, *, heads, dk, scale):
    """Flash-style attention with online softmax; heads handled in-kernel so
    activations stay in [B, S, H*Dk] layout and the output store is lane-dense."""
    kvi = pl.program_id(2)
    n_kv = pl.num_programs(2)

    @pl.when(kvi == 0)
    def _init():
        m_sc[...] = jnp.full(m_sc.shape, -jnp.inf, jnp.float32)
        l_sc[...] = jnp.zeros(l_sc.shape, jnp.float32)
        acc_sc[...] = jnp.zeros(acc_sc.shape, jnp.float32)

    bias = bias_ref[0].astype(jnp.float32)   # (1, tkv) additive mask (0 / -1e9)
    q = q_ref[0]                             # (tq,  H*Dk)
    k = k_ref[0]                             # (tkv, H*Dk)
    v = v_ref[0]                             # (tkv, H*Dk)

    for hd in range(heads):
        lo, hi = hd * dk, (hd + 1) * dk
        qh = q[:, lo:hi]
        kh = k[:, lo:hi]
        vh = v[:, lo:hi]
        s = lax.dot_general(qh, kh, (((1,), (1,)), ((), ())),
                            preferred_element_type=jnp.float32) * scale
        s = s + bias                                        # key mask
        m_prev = m_sc[hd]                                   # (tq, 1)
        m_new = jnp.maximum(m_prev, jnp.max(s, axis=-1, keepdims=True))
        alpha = jnp.exp(m_prev - m_new)
        p = jnp.exp(s - m_new)
        l_sc[hd] = alpha * l_sc[hd] + jnp.sum(p, axis=-1, keepdims=True)
        acc_sc[hd] = alpha * acc_sc[hd] + jnp.dot(
            p.astype(vh.dtype), vh, preferred_element_type=jnp.float32)
        m_sc[hd] = m_new

    @pl.when(kvi == n_kv - 1)
    def _finalize():
        outs = [acc_sc[hd] * pl.reciprocal(l_sc[hd], approx=True)
                for hd in range(heads)]
        o_ref[0] = jnp.concatenate(outs, axis=-1).astype(o_ref.dtype)


def flash_attention(q, k, v, bias, heads):
    """q/k/v: [B, S, D] (heads packed in last dim), bias: [B, 1, S] additive."""
    B, S, D = q.shape
    dk = D // heads
    scale = 1.0 / math.sqrt(dk)
    tq = _tile_seq(S)
    tkv = _tile_kv(S)
    return pl.pallas_call(
        functools.partial(_flash_attn_kernel, heads=heads, dk=dk, scale=scale),
        out_shape=jax.ShapeDtypeStruct((B, S, D), q.dtype),
        grid=(B, S // tq, S // tkv),
        in_specs=[
            pl.BlockSpec((1, 1, tkv), lambda b, qi, kvi: (b, 0, kvi)),
            pl.BlockSpec((1, tq, D), lambda b, qi, kvi: (b, qi, 0)),
            pl.BlockSpec((1, tkv, D), lambda b, qi, kvi: (b, kvi, 0)),
            pl.BlockSpec((1, tkv, D), lambda b, qi, kvi: (b, kvi, 0)),
        ],
        out_specs=pl.BlockSpec((1, tq, D), lambda b, qi, kvi: (b, qi, 0)),
        scratch_shapes=[
            pltpu.VMEM((heads, tq, 1), jnp.float32),    # running max m
            pltpu.VMEM((heads, tq, 1), jnp.float32),    # running sum l
            pltpu.VMEM((heads, tq, dk), jnp.float32),   # output accumulator
        ],
        compiler_params=pltpu.CompilerParams(
            dimension_semantics=("parallel", "parallel", "arbitrary")),
    )(bias, q, k, v)


def _matmul_bias_res_kernel(x_ref, w_ref, b_ref, r_ref, o_ref, acc_ref):
    """K-tiled matmul with f32 accumulator; bias + residual added once at end."""
    kk = pl.program_id(2)

    @pl.when(kk == 0)
    def _zero():
        acc_ref[...] = jnp.zeros(acc_ref.shape, jnp.float32)

    acc_ref[...] += jnp.dot(x_ref[...], w_ref[...],
                            preferred_element_type=jnp.float32)

    @pl.when(kk == pl.num_programs(2) - 1)
    def _finish():
        y = acc_ref[...] + b_ref[...] + r_ref[...].astype(jnp.float32)
        o_ref[...] = y.astype(o_ref.dtype)


def matmul_bias_residual(x2d, w, b, resid):
    """x2d: [M, K], w: [K, N], b: [N], resid: [M, N] -> x2d @ w + b + resid."""
    M, K = x2d.shape
    _, N = w.shape
    tm, tn, tk = _tile_rows(M), _tile_lane(N), _tile_lane(K)
    return pl.pallas_call(
        _matmul_bias_res_kernel,
        out_shape=jax.ShapeDtypeStruct((M, N), x2d.dtype),
        grid=(M // tm, N // tn, K // tk),
        in_specs=[
            pl.BlockSpec((tm, tk), lambda i, j, kk: (i, kk)),
            pl.BlockSpec((tk, tn), lambda i, j, kk: (kk, j)),
            pl.BlockSpec((1, tn), lambda i, j, kk: (0, j)),
            pl.BlockSpec((tm, tn), lambda i, j, kk: (i, j)),
        ],
        out_specs=pl.BlockSpec((tm, tn), lambda i, j, kk: (i, j)),
        scratch_shapes=[pltpu.VMEM((tm, tn), jnp.float32)],
        compiler_params=pltpu.CompilerParams(
            dimension_semantics=("parallel", "parallel", "arbitrary")),
    )(x2d, w, b.reshape(1, N), resid)


def _ln_ffn_kernel(x_ref, a_ref, b_ref, w1_ref, b1_ref, w2_ref, b2_ref,
                   o_ref, *, eps, features):
    """Fused LayerNorm + (W1 + bias + ReLU) + (W2 + bias) + residual for a
    row tile; the [tm, d_ff] intermediate lives only in VMEM/vregs."""
    x = x_ref[...].astype(jnp.float32)
    mean = jnp.mean(x, axis=-1, keepdims=True)
    var = jnp.sum((x - mean) ** 2, axis=-1, keepdims=True) / (features - 1)
    xn = a_ref[...] * (x - mean) / (jnp.sqrt(var) + eps) + b_ref[...]
    xn = xn.astype(w1_ref.dtype)
    h1 = jnp.dot(xn, w1_ref[...], preferred_element_type=jnp.float32) + b1_ref[...]
    h1 = jnp.maximum(h1, 0.0).astype(w2_ref.dtype)
    y = jnp.dot(h1, w2_ref[...], preferred_element_type=jnp.float32) + b2_ref[...]
    o_ref[...] = (y + x).astype(o_ref.dtype)


def ln_ffn_residual(x2d, ln_a, ln_b, ff_p, eps=1e-6):
    """x2d: [M, D] -> x + W2(relu(W1(LayerNorm(x)) + b1)) + b2, fused."""
    M, D = x2d.shape
    DFF = ff_p["w1"].shape[1]
    tm = _tile_rows(M)
    return pl.pallas_call(
        functools.partial(_ln_ffn_kernel, eps=eps, features=D),
        out_shape=jax.ShapeDtypeStruct((M, D), x2d.dtype),
        grid=(M // tm,),
        in_specs=[
            pl.BlockSpec((tm, D), lambda i: (i, 0)),
            pl.BlockSpec((1, D), lambda i: (0, 0)),
            pl.BlockSpec((1, D), lambda i: (0, 0)),
            pl.BlockSpec((D, DFF), lambda i: (0, 0)),
            pl.BlockSpec((1, DFF), lambda i: (0, 0)),
            pl.BlockSpec((DFF, D), lambda i: (0, 0)),
            pl.BlockSpec((1, D), lambda i: (0, 0)),
        ],
        out_specs=pl.BlockSpec((tm, D), lambda i: (i, 0)),
        compiler_params=pltpu.CompilerParams(dimension_semantics=("parallel",)),
    )(x2d, ln_a.reshape(1, D), ln_b.reshape(1, D),
      ff_p["w1"], ff_p["b1"].reshape(1, DFF),
      ff_p["w2"], ff_p["b2"].reshape(1, D))


def _layernorm_kernel(x_ref, a_ref, b_ref, o_ref, *, eps, features):
    x = x_ref[...].astype(jnp.float32)
    mean = jnp.mean(x, axis=-1, keepdims=True)
    var = jnp.sum((x - mean) ** 2, axis=-1, keepdims=True) / (features - 1)
    y = a_ref[...] * (x - mean) / (jnp.sqrt(var) + eps) + b_ref[...]
    o_ref[...] = y.astype(o_ref.dtype)


def layer_norm(x2d, a, b, eps=1e-6):
    """x2d: [M, D], a/b: [D] -> [M, D]; matches the reference LayerNorm."""
    M, D = x2d.shape
    tm = _tile_rows(M)
    return pl.pallas_call(
        functools.partial(_layernorm_kernel, eps=eps, features=D),
        out_shape=jax.ShapeDtypeStruct((M, D), x2d.dtype),
        grid=(M // tm,),
        in_specs=[
            pl.BlockSpec((tm, D), lambda i: (i, 0)),
            pl.BlockSpec((1, D), lambda i: (0, 0)),
            pl.BlockSpec((1, D), lambda i: (0, 0)),
        ],
        out_specs=pl.BlockSpec((tm, D), lambda i: (i, 0)),
        compiler_params=pltpu.CompilerParams(dimension_semantics=("parallel",)),
    )(x2d, a.reshape(1, D), b.reshape(1, D))


# ------------------------------- model wiring --------------------------------

def encoder_layer(x, bias, p, h):
    B, S, D = x.shape
    x2 = x.reshape(B * S, D)
    # Sublayer 1: x + Wo(SelfAttn(LN1(x)))   (dropout disabled / eval mode)
    q, k, v = ln_qkv(x2, p["ln1_a"], p["ln1_b"], p["attn"])
    ao = flash_attention(q.reshape(B, S, D), k.reshape(B, S, D),
                         v.reshape(B, S, D), bias, h)
    x2 = matmul_bias_residual(ao.reshape(B * S, D),
                              p["attn"]["wo"], p["attn"]["bo"], x2)
    # Sublayer 2: x + FFN(LN2(x))
    x2 = ln_ffn_residual(x2, p["ln2_a"], p["ln2_b"], p["ff"])
    return x2.reshape(B, S, D)


def encoder(x, mask, params, h):
    """Encoder.forward: pass x through each layer, then the final LayerNorm."""
    B, S, D = x.shape
    # Additive key-mask bias computed ONCE (0 where keep, -1e9 where masked);
    # equivalent to masked_fill(mask == 0, -1e9) after the softmax.
    bias = ((mask - 1.0) * 1e9).astype(jnp.float32)        # [B, 1, S]
    for p in params["layers"]:
        x = encoder_layer(x, bias, p, h)
    return layer_norm(x.reshape(B * S, D),
                      params["norm_a"], params["norm_b"]).reshape(B, S, D)


def init_params(key, n_layers, d_model, d_ff):
    def dense(k, din, dout):
        return 0.05 * jax.random.normal(k, (din, dout), jnp.float32)

    layers = []
    for i in range(n_layers):
        k = jax.random.fold_in(key, i)
        ks = jax.random.split(k, 6)
        layers.append({
            "attn": {
                "wq": dense(ks[0], d_model, d_model), "bq": jnp.zeros(d_model),
                "wk": dense(ks[1], d_model, d_model), "bk": jnp.zeros(d_model),
                "wv": dense(ks[2], d_model, d_model), "bv": jnp.zeros(d_model),
                "wo": dense(ks[3], d_model, d_model), "bo": jnp.zeros(d_model),
            },
            "ff": {
                "w1": dense(ks[4], d_model, d_ff), "b1": jnp.zeros(d_ff),
                "w2": dense(ks[5], d_ff, d_model), "b2": jnp.zeros(d_model),
            },
            "ln1_a": jnp.ones(d_model), "ln1_b": jnp.zeros(d_model),
            "ln2_a": jnp.ones(d_model), "ln2_b": jnp.zeros(d_model),
        })
    return {"layers": layers,
            "norm_a": jnp.ones(d_model), "norm_b": jnp.zeros(d_model)}


if __name__ == "__main__":
    B, S, D, H, DFF, NL = 2, 8, 32, 4, 64, 2
    key = jax.random.PRNGKey(0)
    kx, kp = jax.random.split(key)

    x = jax.random.normal(kx, (B, S, D), jnp.float32)
    mask = jnp.ones((B, 1, S), jnp.float32)
    mask = mask.at[1, 0, S - 2:].set(0.0)   # mask out last 2 keys of batch 1

    params = init_params(kp, NL, D, DFF)

    encoder_jit = jax.jit(encoder, static_argnums=(3,))
    out = encoder_jit(x, mask, params, H)
    out = jax.block_until_ready(out)

    assert out.shape == (B, S, D)
    assert bool(jnp.all(jnp.isfinite(out)))
    print("KERNEL_OK")
</pallas_src>

<mosaic_0001>
module attributes {stable_mosaic.version = 11 : i64} {
  func.func @_matmul_bias_res_kernel(%arg0: i32, %arg1: i32, %arg2: i32, %arg3: memref<16x32xf32, #tpu.memory_space<vmem>>, %arg4: memref<32x32xf32, #tpu.memory_space<vmem>>, %arg5: memref<1x32xf32, #tpu.memory_space<vmem>>, %arg6: memref<16x32xf32, #tpu.memory_space<vmem>>, %arg7: memref<16x32xf32, #tpu.memory_space<vmem>>, %arg8: memref<16x32xf32, #tpu.memory_space<vmem>>) attributes {dimension_semantics = [#tpu.dimension_semantics<parallel>, #tpu.dimension_semantics<parallel>, #tpu.dimension_semantics<arbitrary>], iteration_bounds = array<i64: 1, 1, 1>, scalar_prefetch = 0 : i64, scratch_operands = 1 : i64, tpu.core_type = #tpu.core_type<tc>, window_params = [{transform_indices = @transform_0, window_bounds = array<i64: 16, 32>}, {transform_indices = @transform_1, window_bounds = array<i64: 32, 32>}, {transform_indices = @transform_2, window_bounds = array<i64: 1, 32>}, {transform_indices = @transform_3, window_bounds = array<i64: 16, 32>}, {transform_indices = @transform_4, window_bounds = array<i64: 16, 32>}]} {
    %c0_i32 = arith.constant 0 : i32
    %0 = arith.cmpi eq, %arg2, %c0_i32 : i32
    %1 = arith.extui %0 : i1 to i32
    %c0_i32_0 = arith.constant 0 : i32
    %2 = arith.cmpi ne, %1, %c0_i32_0 : i32
    scf.if %2 {
      %cst_10 = arith.constant 0.000000e+00 : f32
      %12 = vector.broadcast %cst_10 : f32 to vector<16x32xf32>
      %c0_11 = arith.constant 0 : index
      %c0_12 = arith.constant 0 : index
      %13 = vector.load %arg8[%c0_11, %c0_12] : memref<16x32xf32, #tpu.memory_space<vmem>>, vector<16x32xf32>
      tpu.vector_store %arg8[%c0_11, %c0_12], %12 {strides = array<i32>} : memref<16x32xf32, #tpu.memory_space<vmem>>, vector<16x32xf32>,
    } else {
    }
    %c0 = arith.constant 0 : index
    %c0_1 = arith.constant 0 : index
    %3 = vector.load %arg8[%c0, %c0_1] : memref<16x32xf32, #tpu.memory_space<vmem>>, vector<16x32xf32>
    %c0_2 = arith.constant 0 : index
    %c0_3 = arith.constant 0 : index
    %4 = vector.load %arg3[%c0_2, %c0_3] : memref<16x32xf32, #tpu.memory_space<vmem>>, vector<16x32xf32>
    %c0_4 = arith.constant 0 : index
    %c0_5 = arith.constant 0 : index
    %5 = vector.load %arg4[%c0_4, %c0_5] : memref<32x32xf32, #tpu.memory_space<vmem>>, vector<32x32xf32>
    %cst = arith.constant dense<0.000000e+00> : vector<16x32xf32>
    %6 = tpu.matmul %4, %5, %cst {dimension_numbers = #tpu.dot_dimension_numbers<[1], [0], [0], [1], [0, 0, 1, 1], [], []>} : vector<16x32xf32>, vector<32x32xf32>, vector<16x32xf32> -> vector<16x32xf32>
    %7 = arith.addf %3, %6 : vector<16x32xf32>
    %c0_6 = arith.constant 0 : index
    %c0_7 = arith.constant 0 : index
    %8 = vector.load %arg8[%c0_6, %c0_7] : memref<16x32xf32, #tpu.memory_space<vmem>>, vector<16x32xf32>
    tpu.vector_store %arg8[%c0_6, %c0_7], %7 {strides = array<i32>} : memref<16x32xf32, #tpu.memory_space<vmem>>, vector<16x32xf32>,
    %c0_i32_8 = arith.constant 0 : i32
    %9 = arith.cmpi eq, %arg2, %c0_i32_8 : i32
    %10 = arith.extui %9 : i1 to i32
    %c0_i32_9 = arith.constant 0 : i32
    %11 = arith.cmpi ne, %10, %c0_i32_9 : i32
    scf.if %11 {
      %c0_10 = arith.constant 0 : index
      %c0_11 = arith.constant 0 : index
      %12 = vector.load %arg8[%c0_10, %c0_11] : memref<16x32xf32, #tpu.memory_space<vmem>>, vector<16x32xf32>
      %c0_12 = arith.constant 0 : index
      %c0_13 = arith.constant 0 : index
      %13 = vector.load %arg5[%c0_12, %c0_13] : memref<1x32xf32, #tpu.memory_space<vmem>>, vector<1x32xf32>
      %14 = vector.broadcast %13 : vector<1x32xf32> to vector<16x32xf32>
      %15 = arith.addf %12, %14 : vector<16x32xf32>
      %c0_14 = arith.constant 0 : index
      %c0_15 = arith.constant 0 : index
      %16 = vector.load %arg6[%c0_14, %c0_15] : memref<16x32xf32, #tpu.memory_space<vmem>>, vector<16x32xf32>
      %17 = arith.addf %15, %16 : vector<16x32xf32>
      %c0_16 = arith.constant 0 : index
      %c0_17 = arith.constant 0 : index
      %18 = vector.load %arg7[%c0_16, %c0_17] : memref<16x32xf32, #tpu.memory_space<vmem>>, vector<16x32xf32>
      tpu.vector_store %arg7[%c0_16, %c0_17], %17 {strides = array<i32>} : memref<16x32xf32, #tpu.memory_space<vmem>>, vector<16x32xf32>,
    } else {
    }
    return
  }
  func.func @transform_0(%arg0: i32, %arg1: i32, %arg2: i32) -> (i32, i32) {
    %c0_i32 = arith.constant 0 : i32
    return %arg0, %arg2 : i32, i32
  }
  func.func @transform_1(%arg0: i32, %arg1: i32, %arg2: i32) -> (i32, i32) {
    %c0_i32 = arith.constant 0 : i32
    return %arg2, %arg1 : i32, i32
  }
  func.func @transform_2(%arg0: i32, %arg1: i32, %arg2: i32) -> (i32, i32) {
    %c0_i32 = arith.constant 0 : i32
    %c0_i32_0 = arith.constant 0 : i32
    return %c0_i32, %arg1 : i32, i32
  }
  func.func @transform_3(%arg0: i32, %arg1: i32, %arg2: i32) -> (i32, i32) {
    %c0_i32 = arith.constant 0 : i32
    return %arg0, %arg1 : i32, i32
  }
  func.func @transform_4(%arg0: i32, %arg1: i32, %arg2: i32) -> (i32, i32) {
    %c0_i32 = arith.constant 0 : i32
    return %arg0, %arg1 : i32, i32
  }
}

module attributes {stable_mosaic.version = 11 : i64} {
  func.func @_ln_qkv_kernel(%arg0: i32, %arg1: memref<16x32xf32, #tpu.memory_space<vmem>>, %arg2: memref<1x32xf32, #tpu.memory_space<vmem>>, %arg3: memref<1x32xf32, #tpu.memory_space<vmem>>, %arg4: memref<32x32xf32, #tpu.memory_space<vmem>>, %arg5: memref<1x32xf32, #tpu.memory_space<vmem>>, %arg6: memref<32x32xf32, #tpu.memory_space<vmem>>, %arg7: memref<1x32xf32, #tpu.memory_space<vmem>>, %arg8: memref<32x32xf32, #tpu.memory_space<vmem>>, %arg9: memref<1x32xf32, #tpu.memory_space<vmem>>, %arg10: memref<16x32xf32, #tpu.memory_space<vmem>>, %arg11: memref<16x32xf32, #tpu.memory_space<vmem>>, %arg12: memref<16x32xf32, #tpu.memory_space<vmem>>) attributes {dimension_semantics = [#tpu.dimension_semantics<parallel>], iteration_bounds = array<i64: 1>, scalar_prefetch = 0 : i64, scratch_operands = 0 : i64, tpu.core_type = #tpu.core_type<tc>, window_params = [{transform_indices = @transform_0, window_bounds = array<i64: 16, 32>}, {pipeline_mode = #tpu.pipeline_mode<synchronous>, transform_indices = @transform_1, window_bounds = array<i64: 1, 32>}, {pipeline_mode = #tpu.pipeline_mode<synchronous>, transform_indices = @transform_2, window_bounds = array<i64: 1, 32>}, {pipeline_mode = #tpu.pipeline_mode<synchronous>, transform_indices = @transform_3, window_bounds = array<i64: 32, 32>}, {pipeline_mode = #tpu.pipeline_mode<synchronous>, transform_indices = @transform_4, window_bounds = array<i64: 1, 32>}, {pipeline_mode = #tpu.pipeline_mode<synchronous>, transform_indices = @transform_5, window_bounds = array<i64: 32, 32>}, {pipeline_mode = #tpu.pipeline_mode<synchronous>, transform_indices = @transform_6, window_bounds = array<i64: 1, 32>}, {pipeline_mode = #tpu.pipeline_mode<synchronous>, transform_indices = @transform_7, window_bounds = array<i64: 32, 32>}, {pipeline_mode = #tpu.pipeline_mode<synchronous>, transform_indices = @transform_8, window_bounds = array<i64: 1, 32>}, {transform_indices = @transform_9, window_bounds = array<i64: 16, 32>}, {transform_indices = @transform_10, window_bounds = array<i64: 16, 32>}, {transform_indices = @transform_11, window_bounds = array<i64: 16, 32>}]} {
    %c0 = arith.constant 0 : index
    %c0_0 = arith.constant 0 : index
    %0 = vector.load %arg1[%c0, %c0_0] : memref<16x32xf32, #tpu.memory_space<vmem>>, vector<16x32xf32>
    %cst = arith.constant dense<0.000000e+00> : vector<16xf32>
    %1 = vector.multi_reduction <add>, %0, %cst [1] : vector<16x32xf32> to vector<16xf32>
    %2 = vector.shape_cast %1 : vector<16xf32> to vector<16x1xf32>
    %cst_1 = arith.constant 3.200000e+01 : f32
    %3 = vector.broadcast %cst_1 : f32 to vector<16x1xf32>
    %4 = arith.divf %2, %3 : vector<16x1xf32>
    %5 = vector.broadcast %4 : vector<16x1xf32> to vector<16x32xf32>
    %6 = arith.subf %0, %5 : vector<16x32xf32>
    %7 = arith.mulf %6, %6 : vector<16x32xf32>
    %cst_2 = arith.constant dense<0.000000e+00> : vector<16xf32>
    %8 = vector.multi_reduction <add>, %7, %cst_2 [1] : vector<16x32xf32> to vector<16xf32>
    %9 = vector.shape_cast %8 : vector<16xf32> to vector<16x1xf32>
    %cst_3 = arith.constant 3.100000e+01 : f32
    %10 = vector.broadcast %cst_3 : f32 to vector<16x1xf32>
    %11 = arith.divf %9, %10 : vector<16x1xf32>
    %c0_4 = arith.constant 0 : index
    %c0_5 = arith.constant 0 : index
    %12 = vector.load %arg2[%c0_4, %c0_5] : memref<1x32xf32, #tpu.memory_space<vmem>>, vector<1x32xf32>
    %13 = vector.broadcast %4 : vector<16x1xf32> to vector<16x32xf32>
    %14 = arith.subf %0, %13 : vector<16x32xf32>
    %15 = vector.broadcast %12 : vector<1x32xf32> to vector<16x32xf32>
    %16 = arith.mulf %15, %14 : vector<16x32xf32>
    %17 = math.sqrt %11 : vector<16x1xf32>
    %cst_6 = arith.constant 9.99999997E-7 : f32
    %18 = vector.broadcast %cst_6 : f32 to vector<16x1xf32>
    %19 = arith.addf %17, %18 : vector<16x1xf32>
    %20 = vector.broadcast %19 : vector<16x1xf32> to vector<16x32xf32>
    %21 = arith.divf %16, %20 : vector<16x32xf32>
    %c0_7 = arith.constant 0 : index
    %c0_8 = arith.constant 0 : index
    %22 = vector.load %arg3[%c0_7, %c0_8] : memref<1x32xf32, #tpu.memory_space<vmem>>, vector<1x32xf32>
    %23 = vector.broadcast %22 : vector<1x32xf32> to vector<16x32xf32>
    %24 = arith.addf %21, %23 : vector<16x32xf32>
    %c0_9 = arith.constant 0 : index
    %c0_10 = arith.constant 0 : index
    %25 = vector.load %arg4[%c0_9, %c0_10] : memref<32x32xf32, #tpu.memory_space<vmem>>, vector<32x32xf32>
    %cst_11 = arith.constant dense<0.000000e+00> : vector<16x32xf32>
    %26 = tpu.matmul %24, %25, %cst_11 {dimension_numbers = #tpu.dot_dimension_numbers<[1], [0], [0], [1], [0, 0, 1, 1], [], []>} : vector<16x32xf32>, vector<32x32xf32>, vector<16x32xf32> -> vector<16x32xf32>
    %c0_12 = arith.constant 0 : index
    %c0_13 = arith.constant 0 : index
    %27 = vector.load %arg5[%c0_12, %c0_13] : memref<1x32xf32, #tpu.memory_space<vmem>>, vector<1x32xf32>
    %28 = vector.broadcast %27 : vector<1x32xf32> to vector<16x32xf32>
    %29 = arith.addf %26, %28 : vector<16x32xf32>
    %c0_14 = arith.constant 0 : index
    %c0_15 = arith.constant 0 : index
    %30 = vector.load %arg10[%c0_14, %c0_15] : memref<16x32xf32, #tpu.memory_space<vmem>>, vector<16x32xf32>
    tpu.vector_store %arg10[%c0_14, %c0_15], %29 {strides = array<i32>} : memref<16x32xf32, #tpu.memory_space<vmem>>, vector<16x32xf32>,
    %c0_16 = arith.constant 0 : index
    %c0_17 = arith.constant 0 : index
    %31 = vector.load %arg6[%c0_16, %c0_17] : memref<32x32xf32, #tpu.memory_space<vmem>>, vector<32x32xf32>
    %cst_18 = arith.constant dense<0.000000e+00> : vector<16x32xf32>
    %32 = tpu.matmul %24, %31, %cst_18 {dimension_numbers = #tpu.dot_dimension_numbers<[1], [0], [0], [1], [0, 0, 1, 1], [], []>} : vector<16x32xf32>, vector<32x32xf32>, vector<16x32xf32> -> vector<16x32xf32>
    %c0_19 = arith.constant 0 : index
    %c0_20 = arith.constant 0 : index
    %33 = vector.load %arg7[%c0_19, %c0_20] : memref<1x32xf32, #tpu.memory_space<vmem>>, vector<1x32xf32>
    %34 = vector.broadcast %33 : vector<1x32xf32> to vector<16x32xf32>
    %35 = arith.addf %32, %34 : vector<16x32xf32>
    %c0_21 = arith.constant 0 : index
    %c0_22 = arith.constant 0 : index
    %36 = vector.load %arg11[%c0_21, %c0_22] : memref<16x32xf32, #tpu.memory_space<vmem>>, vector<16x32xf32>
    tpu.vector_store %arg11[%c0_21, %c0_22], %35 {strides = array<i32>} : memref<16x32xf32, #tpu.memory_space<vmem>>, vector<16x32xf32>,
    %c0_23 = arith.constant 0 : index
    %c0_24 = arith.constant 0 : index
    %37 = vector.load %arg8[%c0_23, %c0_24] : memref<32x32xf32, #tpu.memory_space<vmem>>, vector<32x32xf32>
    %cst_25 = arith.constant dense<0.000000e+00> : vector<16x32xf32>
    %38 = tpu.matmul %24, %37, %cst_25 {dimension_numbers = #tpu.dot_dimension_numbers<[1], [0], [0], [1], [0, 0, 1, 1], [], []>} : vector<16x32xf32>, vector<32x32xf32>, vector<16x32xf32> -> vector<16x32xf32>
    %c0_26 = arith.constant 0 : index
    %c0_27 = arith.constant 0 : index
    %39 = vector.load %arg9[%c0_26, %c0_27] : memref<1x32xf32, #tpu.memory_space<vmem>>, vector<1x32xf32>
    %40 = vector.broadcast %39 : vector<1x32xf32> to vector<16x32xf32>
    %41 = arith.addf %38, %40 : vector<16x32xf32>
    %c0_28 = arith.constant 0 : index
    %c0_29 = arith.constant 0 : index
    %42 = vector.load %arg12[%c0_28, %c0_29] : memref<16x32xf32, #tpu.memory_space<vmem>>, vector<16x32xf32>
    tpu.vector_store %arg12[%c0_28, %c0_29], %41 {strides = array<i32>} : memref<16x32xf32, #tpu.memory_space<vmem>>, vector<16x32xf32>,
    return
  }
  func.func @transform_0(%arg0: i32) -> (i32, i32) {
    %c0_i32 = arith.constant 0 : i32
    %c0_i32_0 = arith.constant 0 : i32
    return %arg0, %c0_i32 : i32, i32
  }
  func.func @transform_1(%arg0: i32) -> (i32, i32) {
    %c0_i32 = arith.constant 0 : i32
    %c0_i32_0 = arith.constant 0 : i32
    %c0_i32_1 = arith.constant 0 : i32
    return %c0_i32, %c0_i32_0 : i32, i32
  }
  func.func @transform_2(%arg0: i32) -> (i32, i32) {
    %c0_i32 = arith.constant 0 : i32
    %c0_i32_0 = arith.constant 0 : i32
    %c0_i32_1 = arith.constant 0 : i32
    return %c0_i32, %c0_i32_0 : i32, i32
  }
  func.func @transform_3(%arg0: i32) -> (i32, i32) {
    %c0_i32 = arith.constant 0 : i32
    %c0_i32_0 = arith.constant 0 : i32
    %c0_i32_1 = arith.constant 0 : i32
    return %c0_i32, %c0_i32_0 : i32, i32
  }
  func.func @transform_4(%arg0: i32) -> (i32, i32) {
    %c0_i32 = arith.constant 0 : i32
    %c0_i32_0 = arith.constant 0 : i32
    %c0_i32_1 = arith.constant 0 : i32
    return %c0_i32, %c0_i32_0 : i32, i32
  }
  func.func @transform_5(%arg0: i32) -> (i32, i32) {
    %c0_i32 = arith.constant 0 : i32
    %c0_i32_0 = arith.constant 0 : i32
    %c0_i32_1 = arith.constant 0 : i32
    return %c0_i32, %c0_i32_0 : i32, i32
  }
  func.func @transform_6(%arg0: i32) -> (i32, i32) {
    %c0_i32 = arith.constant 0 : i32
    %c0_i32_0 = arith.constant 0 : i32
    %c0_i32_1 = arith.constant 0 : i32
    return %c0_i32, %c0_i32_0 : i32, i32
  }
  func.func @transform_7(%arg0: i32) -> (i32, i32) {
    %c0_i32 = arith.constant 0 : i32
    %c0_i32_0 = arith.constant 0 : i32
    %c0_i32_1 = arith.constant 0 : i32
    return %c0_i32, %c0_i32_0 : i32, i32
  }
  func.func @transform_8(%arg0: i32) -> (i32, i32) {
    %c0_i32 = arith.constant 0 : i32
    %c0_i32_0 = arith.constant 0 : i32
    %c0_i32_1 = arith.constant 0 : i32
    return %c0_i32, %c0_i32_0 : i32, i32
  }
  func.func @transform_9(%arg0: i32) -> (i32, i32) {
    %c0_i32 = arith.constant 0 : i32
    %c0_i32_0 = arith.constant 0 : i32
    return %arg0, %c0_i32 : i32, i32
  }
  func.func @transform_10(%arg0: i32) -> (i32, i32) {
    %c0_i32 = arith.constant 0 : i32
    %c0_i32_0 = arith.constant 0 : i32
    return %arg0, %c0_i32 : i32, i32
  }
  func.func @transform_11(%arg0: i32) -> (i32, i32) {
    %c0_i32 = arith.constant 0 : i32
    %c0_i32_0 = arith.constant 0 : i32
    return %arg0, %c0_i32 : i32, i32
  }
}

module attributes {stable_mosaic.version = 11 : i64} {
  func.func @_flash_attn_kernel(%arg0: i32, %arg1: i32, %arg2: i32, %arg3: memref<1x1x8xf32, #tpu.memory_space<vmem>>, %arg4: memref<1x8x32xf32, #tpu.memory_space<vmem>>, %arg5: memref<1x8x32xf32, #tpu.memory_space<vmem>>, %arg6: memref<1x8x32xf32, #tpu.memory_space<vmem>>, %arg7: memref<1x8x32xf32, #tpu.memory_space<vmem>>, %arg8: memref<4x8x1xf32, #tpu.memory_space<vmem>>, %arg9: memref<4x8x1xf32, #tpu.memory_space<vmem>>, %arg10: memref<4x8x8xf32, #tpu.memory_space<vmem>>) attributes {dimension_semantics = [#tpu.dimension_semantics<parallel>, #tpu.dimension_semantics<parallel>, #tpu.dimension_semantics<arbitrary>], iteration_bounds = array<i64: 2, 1, 1>, scalar_prefetch = 0 : i64, scratch_operands = 3 : i64, tpu.core_type = #tpu.core_type<tc>, window_params = [{transform_indices = @transform_0, window_bounds = array<i64: 1, 1, 8>}, {transform_indices = @transform_1, window_bounds = array<i64: 1, 8, 32>}, {transform_indices = @transform_2, window_bounds = array<i64: 1, 8, 32>}, {transform_indices = @transform_3, window_bounds = array<i64: 1, 8, 32>}, {transform_indices = @transform_4, window_bounds = array<i64: 1, 8, 32>}]} {
    %c0_i32 = arith.constant 0 : i32
    %0 = arith.cmpi eq, %arg2, %c0_i32 : i32
    %1 = arith.extui %0 : i1 to i32
    %c0_i32_0 = arith.constant 0 : i32
    %2 = arith.cmpi ne, %1, %c0_i32_0 : i32
    scf.if %2 {
      %cst_102 = arith.constant 0xFF800000 : f32
      %170 = vector.broadcast %cst_102 : f32 to vector<4x8x1xf32>
      %c0_103 = arith.constant 0 : index
      %c0_104 = arith.constant 0 : index
      %c0_105 = arith.constant 0 : index
      %171 = vector.load %arg8[%c0_103, %c0_104, %c0_105] : memref<4x8x1xf32, #tpu.memory_space<vmem>>, vector<4x8x1xf32>
      tpu.vector_store %arg8[%c0_103, %c0_104, %c0_105], %170 {strides = array<i32>} : memref<4x8x1xf32, #tpu.memory_space<vmem>>, vector<4x8x1xf32>,
      %cst_106 = arith.constant 0.000000e+00 : f32
      %172 = vector.broadcast %cst_106 : f32 to vector<4x8x1xf32>
      %c0_107 = arith.constant 0 : index
      %c0_108 = arith.constant 0 : index
      %c0_109 = arith.constant 0 : index
      %173 = vector.load %arg9[%c0_107, %c0_108, %c0_109] : memref<4x8x1xf32, #tpu.memory_space<vmem>>, vector<4x8x1xf32>
      tpu.vector_store %arg9[%c0_107, %c0_108, %c0_109], %172 {strides = array<i32>} : memref<4x8x1xf32, #tpu.memory_space<vmem>>, vector<4x8x1xf32>,
      %cst_110 = arith.constant 0.000000e+00 : f32
      %174 = vector.broadcast %cst_110 : f32 to vector<4x8x8xf32>
      %c0_111 = arith.constant 0 : index
      %c0_112 = arith.constant 0 : index
      %c0_113 = arith.constant 0 : index
      %175 = vector.load %arg10[%c0_111, %c0_112, %c0_113] : memref<4x8x8xf32, #tpu.memory_space<vmem>>, vector<4x8x8xf32>
      tpu.vector_store %arg10[%c0_111, %c0_112, %c0_113], %174 {strides = array<i32>} : memref<4x8x8xf32, #tpu.memory_space<vmem>>, vector<4x8x8xf32>,
    } else {
    }
    %c0 = arith.constant 0 : index
    %c0_1 = arith.constant 0 : index
    %c0_2 = arith.constant 0 : index
    %3 = vector.load %arg3[%c0, %c0_1, %c0_2] : memref<1x1x8xf32, #tpu.memory_space<vmem>>, vector<1x1x8xf32>
    %4 = vector.shape_cast %3 : vector<1x1x8xf32> to vector<1x8xf32>
    %c0_3 = arith.constant 0 : index
    %c0_4 = arith.constant 0 : index
    %c0_5 = arith.constant 0 : index
    %5 = vector.load %arg4[%c0_3, %c0_4, %c0_5] : memref<1x8x32xf32, #tpu.memory_space<vmem>>, vector<1x8x32xf32>
    %6 = vector.shape_cast %5 : vector<1x8x32xf32> to vector<8x32xf32>
    %c0_6 = arith.constant 0 : index
    %c0_7 = arith.constant 0 : index
    %c0_8 = arith.constant 0 : index
    %7 = vector.load %arg5[%c0_6, %c0_7, %c0_8] : memref<1x8x32xf32, #tpu.memory_space<vmem>>, vector<1x8x32xf32>
    %8 = vector.shape_cast %7 : vector<1x8x32xf32> to vector<8x32xf32>
    %c0_9 = arith.constant 0 : index
    %c0_10 = arith.constant 0 : index
    %c0_11 = arith.constant 0 : index
    %9 = vector.load %arg6[%c0_9, %c0_10, %c0_11] : memref<1x8x32xf32, #tpu.memory_space<vmem>>, vector<1x8x32xf32>
    %10 = vector.shape_cast %9 : vector<1x8x32xf32> to vector<8x32xf32>
    %11 = vector.extract_strided_slice %6 {offsets = [0, 0], sizes = [8, 8], strides = [1, 1]} : vector<8x32xf32> to vector<8x8xf32>
    %12 = vector.extract_strided_slice %8 {offsets = [0, 0], sizes = [8, 8], strides = [1, 1]} : vector<8x32xf32> to vector<8x8xf32>
    %13 = vector.extract_strided_slice %10 {offsets = [0, 0], sizes = [8, 8], strides = [1, 1]} : vector<8x32xf32> to vector<8x8xf32>
    %cst = arith.constant dense<0.000000e+00> : vector<8x8xf32>
    %14 = tpu.matmul %11, %12, %cst {dimension_numbers = #tpu.dot_dimension_numbers<[1], [1], [0], [0], [0, 0, 1, 0], [], []>} : vector<8x8xf32>, vector<8x8xf32>, vector<8x8xf32> -> vector<8x8xf32>
    %cst_12 = arith.constant 0.353553385 : f32
    %15 = vector.broadcast %cst_12 : f32 to vector<8x8xf32>
    %16 = arith.mulf %14, %15 : vector<8x8xf32>
    %17 = vector.broadcast %4 : vector<1x8xf32> to vector<8x8xf32>
    %18 = arith.addf %16, %17 : vector<8x8xf32>
    %c0_13 = arith.constant 0 : index
    %c0_14 = arith.constant 0 : index
    %c0_15 = arith.constant 0 : index
    %19 = vector.load %arg8[%c0_13, %c0_14, %c0_15] : memref<4x8x1xf32, #tpu.memory_space<vmem>>, vector<1x8x1xf32>
    %20 = vector.shape_cast %19 : vector<1x8x1xf32> to vector<8x1xf32>
    %cst_16 = arith.constant dense<0xFF800000> : vector<8xf32>
    %21 = vector.multi_reduction <maximumf>, %18, %cst_16 [1] : vector<8x8xf32> to vector<8xf32>
    %22 = vector.shape_cast %21 : vector<8xf32> to vector<8x1xf32>
    %23 = arith.maximumf %20, %22 : vector<8x1xf32>
    %24 = arith.subf %20, %23 : vector<8x1xf32>
    %25 = math.exp %24 : vector<8x1xf32>
    %26 = vector.broadcast %23 : vector<8x1xf32> to vector<8x8xf32>
    %27 = arith.subf %18, %26 : vector<8x8xf32>
    %28 = math.exp %27 : vector<8x8xf32>
    %c0_17 = arith.constant 0 : index
    %c0_18 = arith.constant 0 : index
    %c0_19 = arith.constant 0 : index
    %29 = vector.load %arg9[%c0_17, %c0_18, %c0_19] : memref<4x8x1xf32, #tpu.memory_space<vmem>>, vector<1x8x1xf32>
    %30 = vector.shape_cast %29 : vector<1x8x1xf32> to vector<8x1xf32>
    %31 = arith.mulf %25, %30 : vector<8x1xf32>
    %cst_20 = arith.constant dense<0.000000e+00> : vector<8xf32>
    %32 = vector.multi_reduction <add>, %28, %cst_20 [1] : vector<8x8xf32> to vector<8xf32>
    %33 = vector.shape_cast %32 : vector<8xf32> to vector<8x1xf32>
    %34 = arith.addf %31, %33 : vector<8x1xf32>
    %c0_21 = arith.constant 0 : index
    %c0_22 = arith.constant 0 : index
    %c0_23 = arith.constant 0 : index
    %35 = vector.load %arg9[%c0_21, %c0_22, %c0_23] : memref<4x8x1xf32, #tpu.memory_space<vmem>>, vector<1x8x1xf32>
    %36 = vector.shape_cast %35 : vector<1x8x1xf32> to vector<8x1xf32>
    %37 = vector.shape_cast %34 : vector<8x1xf32> to vector<1x8x1xf32>
    tpu.vector_store %arg9[%c0_21, %c0_22, %c0_23], %37 {strides = array<i32>} : memref<4x8x1xf32, #tpu.memory_space<vmem>>, vector<1x8x1xf32>,
    %c0_24 = arith.constant 0 : index
    %c0_25 = arith.constant 0 : index
    %c0_26 = arith.constant 0 : index
    %38 = vector.load %arg10[%c0_24, %c0_25, %c0_26] : memref<4x8x8xf32, #tpu.memory_space<vmem>>, vector<1x8x8xf32>
    %39 = vector.shape_cast %38 : vector<1x8x8xf32> to vector<8x8xf32>
    %40 = vector.broadcast %25 : vector<8x1xf32> to vector<8x8xf32>
    %41 = arith.mulf %40, %39 : vector<8x8xf32>
    %cst_27 = arith.constant dense<0.000000e+00> : vector<8x8xf32>
    %42 = tpu.matmul %28, %13, %cst_27 {dimension_numbers = #tpu.dot_dimension_numbers<[1], [0], [0], [1], [0, 0, 1, 1], [], []>} : vector<8x8xf32>, vector<8x8xf32>, vector<8x8xf32> -> vector<8x8xf32>
    %43 = arith.addf %41, %42 : vector<8x8xf32>
    %c0_28 = arith.constant 0 : index
    %c0_29 = arith.constant 0 : index
    %c0_30 = arith.constant 0 : index
    %44 = vector.load %arg10[%c0_28, %c0_29, %c0_30] : memref<4x8x8xf32, #tpu.memory_space<vmem>>, vector<1x8x8xf32>
    %45 = vector.shape_cast %44 : vector<1x8x8xf32> to vector<8x8xf32>
    %46 = vector.shape_cast %43 : vector<8x8xf32> to vector<1x8x8xf32>
    tpu.vector_store %arg10[%c0_28, %c0_29, %c0_30], %46 {strides = array<i32>} : memref<4x8x8xf32, #tpu.memory_space<vmem>>, vector<1x8x8xf32>,
    %c0_31 = arith.constant 0 : index
    %c0_32 = arith.constant 0 : index
    %c0_33 = arith.constant 0 : index
    %47 = vector.load %arg8[%c0_31, %c0_32, %c0_33] : memref<4x8x1xf32, #tpu.memory_space<vmem>>, vector<1x8x1xf32>
    %48 = vector.shape_cast %47 : vector<1x8x1xf32> to vector<8x1xf32>
    %49 = vector.shape_cast %23 : vector<8x1xf32> to vector<1x8x1xf32>
    tpu.vector_store %arg8[%c0_31, %c0_32, %c0_33], %49 {strides = array<i32>} : memref<4x8x1xf32, #tpu.memory_space<vmem>>, vector<1x8x1xf32>,
    %50 = vector.extract_strided_slice %6 {offsets = [0, 8], sizes = [8, 8], strides = [1, 1]} : vector<8x32xf32> to vector<8x8xf32>
    %51 = vector.extract_strided_slice %8 {offsets = [0, 8], sizes = [8, 8], strides = [1, 1]} : vector<8x32xf32> to vector<8x8xf32>
    %52 = vector.extract_strided_slice %10 {offsets = [0, 8], sizes = [8, 8], strides = [1, 1]} : vector<8x32xf32> to vector<8x8xf32>
    %cst_34 = arith.constant dense<0.000000e+00> : vector<8x8xf32>
    %53 = tpu.matmul %50, %51, %cst_34 {dimension_numbers = #tpu.dot_dimension_numbers<[1], [1], [0], [0], [0, 0, 1, 0], [], []>} : vector<8x8xf32>, vector<8x8xf32>, vector<8x8xf32> -> vector<8x8xf32>
    %cst_35 = arith.constant 0.353553385 : f32
    %54 = vector.broadcast %cst_35 : f32 to vector<8x8xf32>
    %55 = arith.mulf %53, %54 : vector<8x8xf32>
    %56 = vector.broadcast %4 : vector<1x8xf32> to vector<8x8xf32>
    %57 = arith.addf %55, %56 : vector<8x8xf32>
    %c1 = arith.constant 1 : index
    %c0_36 = arith.constant 0 : index
    %c0_37 = arith.constant 0 : index
    %58 = vector.load %arg8[%c1, %c0_36, %c0_37] : memref<4x8x1xf32, #tpu.memory_space<vmem>>, vector<1x8x1xf32>
    %59 = vector.shape_cast %58 : vector<1x8x1xf32> to vector<8x1xf32>
    %cst_38 = arith.constant dense<0xFF800000> : vector<8xf32>
    %60 = vector.multi_reduction <maximumf>, %57, %cst_38 [1] : vector<8x8xf32> to vector<8xf32>
    %61 = vector.shape_cast %60 : vector<8xf32> to vector<8x1xf32>
    %62 = arith.maximumf %59, %61 : vector<8x1xf32>
    %63 = arith.subf %59, %62 : vector<8x1xf32>
    %64 = math.exp %63 : vector<8x1xf32>
    %65 = vector.broadcast %62 : vector<8x1xf32> to vector<8x8xf32>
    %66 = arith.subf %57, %65 : vector<8x8xf32>
    %67 = math.exp %66 : vector<8x8xf32>
    %c1_39 = arith.constant 1 : index
    %c0_40 = arith.constant 0 : index
    %c0_41 = arith.constant 0 : index
    %68 = vector.load %arg9[%c1_39, %c0_40, %c0_41] : memref<4x8x1xf32, #tpu.memory_space<vmem>>, vector<1x8x1xf32>
    %69 = vector.shape_cast %68 : vector<1x8x1xf32> to vector<8x1xf32>
    %70 = arith.mulf %64, %69 : vector<8x1xf32>
    %cst_42 = arith.constant dense<0.000000e+00> : vector<8xf32>
    %71 = vector.multi_reduction <add>, %67, %cst_42 [1] : vector<8x8xf32> to vector<8xf32>
    %72 = vector.shape_cast %71 : vector<8xf32> to vector<8x1xf32>
    %73 = arith.addf %70, %72 : vector<8x1xf32>
    %c1_43 = arith.constant 1 : index
    %c0_44 = arith.constant 0 : index
    %c0_45 = arith.constant 0 : index
    %74 = vector.load %arg9[%c1_43, %c0_44, %c0_45] : memref<4x8x1xf32, #tpu.memory_space<vmem>>, vector<1x8x1xf32>
    %75 = vector.shape_cast %74 : vector<1x8x1xf32> to vector<8x1xf32>
    %76 = vector.shape_cast %73 : vector<8x1xf32> to vector<1x8x1xf32>
    tpu.vector_store %arg9[%c1_43, %c0_44, %c0_45], %76 {strides = array<i32>} : memref<4x8x1xf32, #tpu.memory_space<vmem>>, vector<1x8x1xf32>,
    %c1_46 = arith.constant 1 : index
    %c0_47 = arith.constant 0 : index
    %c0_48 = arith.constant 0 : index
    %77 = vector.load %arg10[%c1_46, %c0_47, %c0_48] : memref<4x8x8xf32, #tpu.memory_space<vmem>>, vector<1x8x8xf32>
    %78 = vector.shape_cast %77 : vector<1x8x8xf32> to vector<8x8xf32>
    %79 = vector.broadcast %64 : vector<8x1xf32> to vector<8x8xf32>
    %80 = arith.mulf %79, %78 : vector<8x8xf32>
    %cst_49 = arith.constant dense<0.000000e+00> : vector<8x8xf32>
    %81 = tpu.matmul %67, %52, %cst_49 {dimension_numbers = #tpu.dot_dimension_numbers<[1], [0], [0], [1], [0, 0, 1, 1], [], []>} : vector<8x8xf32>, vector<8x8xf32>, vector<8x8xf32> -> vector<8x8xf32>
    %82 = arith.addf %80, %81 : vector<8x8xf32>
    %c1_50 = arith.constant 1 : index
    %c0_51 = arith.constant 0 : index
    %c0_52 = arith.constant 0 : index
    %83 = vector.load %arg10[%c1_50, %c0_51, %c0_52] : memref<4x8x8xf32, #tpu.memory_space<vmem>>, vector<1x8x8xf32>
    %84 = vector.shape_cast %83 : vector<1x8x8xf32> to vector<8x8xf32>
    %85 = vector.shape_cast %82 : vector<8x8xf32> to vector<1x8x8xf32>
    tpu.vector_store %arg10[%c1_50, %c0_51, %c0_52], %85 {strides = array<i32>} : memref<4x8x8xf32, #tpu.memory_space<vmem>>, vector<1x8x8xf32>,
    %c1_53 = arith.constant 1 : index
    %c0_54 = arith.constant 0 : index
    %c0_55 = arith.constant 0 : index
    %86 = vector.load %arg8[%c1_53, %c0_54, %c0_55] : memref<4x8x1xf32, #tpu.memory_space<vmem>>, vector<1x8x1xf32>
    %87 = vector.shape_cast %86 : vector<1x8x1xf32> to vector<8x1xf32>
    %88 = vector.shape_cast %62 : vector<8x1xf32> to vector<1x8x1xf32>
    tpu.vector_store %arg8[%c1_53, %c0_54, %c0_55], %88 {strides = array<i32>} : memref<4x8x1xf32, #tpu.memory_space<vmem>>, vector<1x8x1xf32>,
    %89 = vector.extract_strided_slice %6 {offsets = [0, 16], sizes = [8, 8], strides = [1, 1]} : vector<8x32xf32> to vector<8x8xf32>
    %90 = vector.extract_strided_slice %8 {offsets = [0, 16], sizes = [8, 8], strides = [1, 1]} : vector<8x32xf32> to vector<8x8xf32>
    %91 = vector.extract_strided_slice %10 {offsets = [0, 16], sizes = [8, 8], strides = [1, 1]} : vector<8x32xf32> to vector<8x8xf32>
    %cst_56 = arith.constant dense<0.000000e+00> : vector<8x8xf32>
    %92 = tpu.matmul %89, %90, %cst_56 {dimension_numbers = #tpu.dot_dimension_numbers<[1], [1], [0], [0], [0, 0, 1, 0], [], []>} : vector<8x8xf32>, vector<8x8xf32>, vector<8x8xf32> -> vector<8x8xf32>
    %cst_57 = arith.constant 0.353553385 : f32
    %93 = vector.broadcast %cst_57 : f32 to vector<8x8xf32>
    %94 = arith.mulf %92, %93 : vector<8x8xf32>
    %95 = vector.broadcast %4 : vector<1x8xf32> to vector<8x8xf32>
    %96 = arith.addf %94, %95 : vector<8x8xf32>
    %c2 = arith.constant 2 : index
    %c0_58 = arith.constant 0 : index
    %c0_59 = arith.constant 0 : index
    %97 = vector.load %arg8[%c2, %c0_58, %c0_59] : memref<4x8x1xf32, #tpu.memory_space<vmem>>, vector<1x8x1xf32>
    %98 = vector.shape_cast %97 : vector<1x8x1xf32> to vector<8x1xf32>
    %cst_60 = arith.constant dense<0xFF800000> : vector<8xf32>
    %99 = vector.multi_reduction <maximumf>, %96, %cst_60 [1] : vector<8x8xf32> to vector<8xf32>
    %100 = vector.shape_cast %99 : vector<8xf32> to vector<8x1xf32>
    %101 = arith.maximumf %98, %100 : vector<8x1xf32>
    %102 = arith.subf %98, %101 : vector<8x1xf32>
    %103 = math.exp %102 : vector<8x1xf32>
    %104 = vector.broadcast %101 : vector<8x1xf32> to vector<8x8xf32>
    %105 = arith.subf %96, %104 : vector<8x8xf32>
    %106 = math.exp %105 : vector<8x8xf32>
    %c2_61 = arith.constant 2 : index
    %c0_62 = arith.constant 0 : index
    %c0_63 = arith.constant 0 : index
    %107 = vector.load %arg9[%c2_61, %c0_62, %c0_63] : memref<4x8x1xf32, #tpu.memory_space<vmem>>, vector<1x8x1xf32>
    %108 = vector.shape_cast %107 : vector<1x8x1xf32> to vector<8x1xf32>
    %109 = arith.mulf %103, %108 : vector<8x1xf32>
    %cst_64 = arith.constant dense<0.000000e+00> : vector<8xf32>
    %110 = vector.multi_reduction <add>, %106, %cst_64 [1] : vector<8x8xf32> to vector<8xf32>
    %111 = vector.shape_cast %110 : vector<8xf32> to vector<8x1xf32>
    %112 = arith.addf %109, %111 : vector<8x1xf32>
    %c2_65 = arith.constant 2 : index
    %c0_66 = arith.constant 0 : index
    %c0_67 = arith.constant 0 : index
    %113 = vector.load %arg9[%c2_65, %c0_66, %c0_67] : memref<4x8x1xf32, #tpu.memory_space<vmem>>, vector<1x8x1xf32>
    %114 = vector.shape_cast %113 : vector<1x8x1xf32> to vector<8x1xf32>
    %115 = vector.shape_cast %112 : vector<8x1xf32> to vector<1x8x1xf32>
    tpu.vector_store %arg9[%c2_65, %c0_66, %c0_67], %115 {strides = array<i32>} : memref<4x8x1xf32, #tpu.memory_space<vmem>>, vector<1x8x1xf32>,
    %c2_68 = arith.constant 2 : index
    %c0_69 = arith.constant 0 : index
    %c0_70 = arith.constant 0 : index
    %116 = vector.load %arg10[%c2_68, %c0_69, %c0_70] : memref<4x8x8xf32, #tpu.memory_space<vmem>>, vector<1x8x8xf32>
    %117 = vector.shape_cast %116 : vector<1x8x8xf32> to vector<8x8xf32>
    %118 = vector.broadcast %103 : vector<8x1xf32> to vector<8x8xf32>
    %119 = arith.mulf %118, %117 : vector<8x8xf32>
    %cst_71 = arith.constant dense<0.000000e+00> : vector<8x8xf32>
    %120 = tpu.matmul %106, %91, %cst_71 {dimension_numbers = #tpu.dot_dimension_numbers<[1], [0], [0], [1], [0, 0, 1, 1], [], []>} : vector<8x8xf32>, vector<8x8xf32>, vector<8x8xf32> -> vector<8x8xf32>
    %121 = arith.addf %119, %120 : vector<8x8xf32>
    %c2_72 = arith.constant 2 : index
    %c0_73 = arith.constant 0 : index
    %c0_74 = arith.constant 0 : index
    %122 = vector.load %arg10[%c2_72, %c0_73, %c0_74] : memref<4x8x8xf32, #tpu.memory_space<vmem>>, vector<1x8x8xf32>
    %123 = vector.shape_cast %122 : vector<1x8x8xf32> to vector<8x8xf32>
    %124 = vector.shape_cast %121 : vector<8x8xf32> to vector<1x8x8xf32>
    tpu.vector_store %arg10[%c2_72, %c0_73, %c0_74], %124 {strides = array<i32>} : memref<4x8x8xf32, #tpu.memory_space<vmem>>, vector<1x8x8xf32>,
    %c2_75 = arith.constant 2 : index
    %c0_76 = arith.constant 0 : index
    %c0_77 = arith.constant 0 : index
    %125 = vector.load %arg8[%c2_75, %c0_76, %c0_77] : memref<4x8x1xf32, #tpu.memory_space<vmem>>, vector<1x8x1xf32>
    %126 = vector.shape_cast %125 : vector<1x8x1xf32> to vector<8x1xf32>
    %127 = vector.shape_cast %101 : vector<8x1xf32> to vector<1x8x1xf32>
    tpu.vector_store %arg8[%c2_75, %c0_76, %c0_77], %127 {strides = array<i32>} : memref<4x8x1xf32, #tpu.memory_space<vmem>>, vector<1x8x1xf32>,
    %128 = vector.extract_strided_slice %6 {offsets = [0, 24], sizes = [8, 8], strides = [1, 1]} : vector<8x32xf32> to vector<8x8xf32>
    %129 = vector.extract_strided_slice %8 {offsets = [0, 24], sizes = [8, 8], strides = [1, 1]} : vector<8x32xf32> to vector<8x8xf32>
    %130 = vector.extract_strided_slice %10 {offsets = [0, 24], sizes = [8, 8], strides = [1, 1]} : vector<8x32xf32> to vector<8x8xf32>
    %cst_78 = arith.constant dense<0.000000e+00> : vector<8x8xf32>
    %131 = tpu.matmul %128, %129, %cst_78 {dimension_numbers = #tpu.dot_dimension_numbers<[1], [1], [0], [0], [0, 0, 1, 0], [], []>} : vector<8x8xf32>, vector<8x8xf32>, vector<8x8xf32> -> vector<8x8xf32>
    %cst_79 = arith.constant 0.353553385 : f32
    %132 = vector.broadcast %cst_79 : f32 to vector<8x8xf32>
    %133 = arith.mulf %131, %132 : vector<8x8xf32>
    %134 = vector.broadcast %4 : vector<1x8xf32> to vector<8x8xf32>
    %135 = arith.addf %133, %134 : vector<8x8xf32>
    %c3 = arith.constant 3 : index
    %c0_80 = arith.constant 0 : index
    %c0_81 = arith.constant 0 : index
    %136 = vector.load %arg8[%c3, %c0_80, %c0_81] : memref<4x8x1xf32, #tpu.memory_space<vmem>>, vector<1x8x1xf32>
    %137 = vector.shape_cast %136 : vector<1x8x1xf32> to vector<8x1xf32>
    %cst_82 = arith.constant dense<0xFF800000> : vector<8xf32>
    %138 = vector.multi_reduction <maximumf>, %135, %cst_82 [1] : vector<8x8xf32> to vector<8xf32>
    %139 = vector.shape_cast %138 : vector<8xf32> to vector<8x1xf32>
    %140 = arith.maximumf %137, %139 : vector<8x1xf32>
    %141 = arith.subf %137, %140 : vector<8x1xf32>
    %142 = math.exp %141 : vector<8x1xf32>
    %143 = vector.broadcast %140 : vector<8x1xf32> to vector<8x8xf32>
    %144 = arith.subf %135, %143 : vector<8x8xf32>
    %145 = math.exp %144 : vector<8x8xf32>
    %c3_83 = arith.constant 3 : index
    %c0_84 = arith.constant 0 : index
    %c0_85 = arith.constant 0 : index
    %146 = vector.load %arg9[%c3_83, %c0_84, %c0_85] : memref<4x8x1xf32, #tpu.memory_space<vmem>>, vector<1x8x1xf32>
    %147 = vector.shape_cast %146 : vector<1x8x1xf32> to vector<8x1xf32>
    %148 = arith.mulf %142, %147 : vector<8x1xf32>
    %cst_86 = arith.constant dense<0.000000e+00> : vector<8xf32>
    %149 = vector.multi_reduction <add>, %145, %cst_86 [1] : vector<8x8xf32> to vector<8xf32>
    %150 = vector.shape_cast %149 : vector<8xf32> to vector<8x1xf32>
    %151 = arith.addf %148, %150 : vector<8x1xf32>
    %c3_87 = arith.constant 3 : index
    %c0_88 = arith.constant 0 : index
    %c0_89 = arith.constant 0 : index
    %152 = vector.load %arg9[%c3_87, %c0_88, %c0_89] : memref<4x8x1xf32, #tpu.memory_space<vmem>>, vector<1x8x1xf32>
    %153 = vector.shape_cast %152 : vector<1x8x1xf32> to vector<8x1xf32>
    %154 = vector.shape_cast %151 : vector<8x1xf32> to vector<1x8x1xf32>
    tpu.vector_store %arg9[%c3_87, %c0_88, %c0_89], %154 {strides = array<i32>} : memref<4x8x1xf32, #tpu.memory_space<vmem>>, vector<1x8x1xf32>,
    %c3_90 = arith.constant 3 : index
    %c0_91 = arith.constant 0 : index
    %c0_92 = arith.constant 0 : index
    %155 = vector.load %arg10[%c3_90, %c0_91, %c0_92] : memref<4x8x8xf32, #tpu.memory_space<vmem>>, vector<1x8x8xf32>
    %156 = vector.shape_cast %155 : vector<1x8x8xf32> to vector<8x8xf32>
    %157 = vector.broadcast %142 : vector<8x1xf32> to vector<8x8xf32>
    %158 = arith.mulf %157, %156 : vector<8x8xf32>
    %cst_93 = arith.constant dense<0.000000e+00> : vector<8x8xf32>
    %159 = tpu.matmul %145, %130, %cst_93 {dimension_numbers = #tpu.dot_dimension_numbers<[1], [0], [0], [1], [0, 0, 1, 1], [], []>} : vector<8x8xf32>, vector<8x8xf32>, vector<8x8xf32> -> vector<8x8xf32>
    %160 = arith.addf %158, %159 : vector<8x8xf32>
    %c3_94 = arith.constant 3 : index
    %c0_95 = arith.constant 0 : index
    %c0_96 = arith.constant 0 : index
    %161 = vector.load %arg10[%c3_94, %c0_95, %c0_96] : memref<4x8x8xf32, #tpu.memory_space<vmem>>, vector<1x8x8xf32>
    %162 = vector.shape_cast %161 : vector<1x8x8xf32> to vector<8x8xf32>
    %163 = vector.shape_cast %160 : vector<8x8xf32> to vector<1x8x8xf32>
    tpu.vector_store %arg10[%c3_94, %c0_95, %c0_96], %163 {strides = array<i32>} : memref<4x8x8xf32, #tpu.memory_space<vmem>>, vector<1x8x8xf32>,
    %c3_97 = arith.constant 3 : index
    %c0_98 = arith.constant 0 : index
    %c0_99 = arith.constant 0 : index
    %164 = vector.load %arg8[%c3_97, %c0_98, %c0_99] : memref<4x8x1xf32, #tpu.memory_space<vmem>>, vector<1x8x1xf32>
    %165 = vector.shape_cast %164 : vector<1x8x1xf32> to vector<8x1xf32>
    %166 = vector.shape_cast %140 : vector<8x1xf32> to vector<1x8x1xf32>
    tpu.vector_store %arg8[%c3_97, %c0_98, %c0_99], %166 {strides = array<i32>} : memref<4x8x1xf32, #tpu.memory_space<vmem>>, vector<1x8x1xf32>,
    %c0_i32_100 = arith.constant 0 : i32
    %167 = arith.cmpi eq, %arg2, %c0_i32_100 : i32
    %168 = arith.extui %167 : i1 to i32
    %c0_i32_101 = arith.constant 0 : i32
    %169 = arith.cmpi ne, %168, %c0_i32_101 : i32
    scf.if %169 {
      %c0_102 = arith.constant 0 : index
      %c0_103 = arith.constant 0 : index
      %c0_104 = arith.constant 0 : index
      %170 = vector.load %arg10[%c0_102, %c0_103, %c0_104] : memref<4x8x8xf32, #tpu.memory_space<vmem>>, vector<1x8x8xf32>
      %171 = vector.shape_cast %170 : vector<1x8x8xf32> to vector<8x8xf32>
      %c0_105 = arith.constant 0 : index
      %c0_106 = arith.constant 0 : index
      %c0_107 = arith.constant 0 : index
      %172 = vector.load %arg9[%c0_105, %c0_106, %c0_107] : memref<4x8x1xf32, #tpu.memory_space<vmem>>, vector<1x8x1xf32>
      %173 = vector.shape_cast %172 : vector<1x8x1xf32> to vector<8x1xf32>
      %174 = tpu.reciprocal %173 {approx = true} : vector<8x1xf32> -> vector<8x1xf32>
      %175 = vector.broadcast %174 : vector<8x1xf32> to vector<8x8xf32>
      %176 = arith.mulf %171, %175 : vector<8x8xf32>
      %c1_108 = arith.constant 1 : index
      %c0_109 = arith.constant 0 : index
      %c0_110 = arith.constant 0 : index
      %177 = vector.load %arg10[%c1_108, %c0_109, %c0_110] : memref<4x8x8xf32, #tpu.memory_space<vmem>>, vector<1x8x8xf32>
      %178 = vector.shape_cast %177 : vector<1x8x8xf32> to vector<8x8xf32>
      %c1_111 = arith.constant 1 : index
      %c0_112 = arith.constant 0 : index
      %c0_113 = arith.constant 0 : index
      %179 = vector.load %arg9[%c1_111, %c0_112, %c0_113] : memref<4x8x1xf32, #tpu.memory_space<vmem>>, vector<1x8x1xf32>
      %180 = vector.shape_cast %179 : vector<1x8x1xf32> to vector<8x1xf32>
      %181 = tpu.reciprocal %180 {approx = true} : vector<8x1xf32> -> vector<8x1xf32>
      %182 = vector.broadcast %181 : vector<8x1xf32> to vector<8x8xf32>
      %183 = arith.mulf %178, %182 : vector<8x8xf32>
      %c2_114 = arith.constant 2 : index
      %c0_115 = arith.constant 0 : index
      %c0_116 = arith.constant 0 : index
      %184 = vector.load %arg10[%c2_114, %c0_115, %c0_116] : memref<4x8x8xf32, #tpu.memory_space<vmem>>, vector<1x8x8xf32>
      %185 = vector.shape_cast %184 : vector<1x8x8xf32> to vector<8x8xf32>
      %c2_117 = arith.constant 2 : index
      %c0_118 = arith.constant 0 : index
      %c0_119 = arith.constant 0 : index
      %186 = vector.load %arg9[%c2_117, %c0_118, %c0_119] : memref<4x8x1xf32, #tpu.memory_space<vmem>>, vector<1x8x1xf32>
      %187 = vector.shape_cast %186 : vector<1x8x1xf32> to vector<8x1xf32>
      %188 = tpu.reciprocal %187 {approx = true} : vector<8x1xf32> -> vector<8x1xf32>
      %189 = vector.broadcast %188 : vector<8x1xf32> to vector<8x8xf32>
      %190 = arith.mulf %185, %189 : vector<8x8xf32>
      %c3_120 = arith.constant 3 : index
      %c0_121 = arith.constant 0 : index
      %c0_122 = arith.constant 0 : index
      %191 = vector.load %arg10[%c3_120, %c0_121, %c0_122] : memref<4x8x8xf32, #tpu.memory_space<vmem>>, vector<1x8x8xf32>
      %192 = vector.shape_cast %191 : vector<1x8x8xf32> to vector<8x8xf32>
      %c3_123 = arith.constant 3 : index
      %c0_124 = arith.constant 0 : index
      %c0_125 = arith.constant 0 : index
      %193 = vector.load %arg9[%c3_123, %c0_124, %c0_125] : memref<4x8x1xf32, #tpu.memory_space<vmem>>, vector<1x8x1xf32>
      %194 = vector.shape_cast %193 : vector<1x8x1xf32> to vector<8x1xf32>
      %195 = tpu.reciprocal %194 {approx = true} : vector<8x1xf32> -> vector<8x1xf32>
      %196 = vector.broadcast %195 : vector<8x1xf32> to vector<8x8xf32>
      %197 = arith.mulf %192, %196 : vector<8x8xf32>
      %198 = tpu.concatenate %176, %183, %190, %197 in 1 : vector<8x8xf32>, vector<8x8xf32>, vector<8x8xf32>, vector<8x8xf32> -> vector<8x32xf32>
      %c0_126 = arith.constant 0 : index
      %c0_127 = arith.constant 0 : index
      %c0_128 = arith.constant 0 : index
      %199 = vector.load %arg7[%c0_126, %c0_127, %c0_128] : memref<1x8x32xf32, #tpu.memory_space<vmem>>, vector<1x8x32xf32>
      %200 = vector.shape_cast %199 : vector<1x8x32xf32> to vector<8x32xf32>
      %201 = vector.shape_cast %198 : vector<8x32xf32> to vector<1x8x32xf32>
      tpu.vector_store %arg7[%c0_126, %c0_127, %c0_128], %201 {strides = array<i32>} : memref<1x8x32xf32, #tpu.memory_space<vmem>>, vector<1x8x32xf32>,
    } else {
    }
    return
  }
  func.func @transform_0(%arg0: i32, %arg1: i32, %arg2: i32) -> (i32, i32, i32) {
    %c0_i32 = arith.constant 0 : i32
    %c0_i32_0 = arith.constant 0 : i32
    return %arg0, %c0_i32, %arg2 : i32, i32, i32
  }
  func.func @transform_1(%arg0: i32, %arg1: i32, %arg2: i32) -> (i32, i32, i32) {
    %c0_i32 = arith.constant 0 : i32
    %c0_i32_0 = arith.constant 0 : i32
    return %arg0, %arg1, %c0_i32 : i32, i32, i32
  }
  func.func @transform_2(%arg0: i32, %arg1: i32, %arg2: i32) -> (i32, i32, i32) {
    %c0_i32 = arith.constant 0 : i32
    %c0_i32_0 = arith.constant 0 : i32
    return %arg0, %arg2, %c0_i32 : i32, i32, i32
  }
  func.func @transform_3(%arg0: i32, %arg1: i32, %arg2: i32) -> (i32, i32, i32) {
    %c0_i32 = arith.constant 0 : i32
    %c0_i32_0 = arith.constant 0 : i32
    return %arg0, %arg2, %c0_i32 : i32, i32, i32
  }
  func.func @transform_4(%arg0: i32, %arg1: i32, %arg2: i32) -> (i32, i32, i32) {
    %c0_i32 = arith.constant 0 : i32
    %c0_i32_0 = arith.constant 0 : i32
    return %arg0, %arg1, %c0_i32 : i32, i32, i32
  }
}

module attributes {stable_mosaic.version = 11 : i64} {
  func.func @_ln_ffn_kernel(%arg0: i32, %arg1: memref<16x32xf32, #tpu.memory_space<vmem>>, %arg2: memref<1x32xf32, #tpu.memory_space<vmem>>, %arg3: memref<1x32xf32, #tpu.memory_space<vmem>>, %arg4: memref<32x64xf32, #tpu.memory_space<vmem>>, %arg5: memref<1x64xf32, #tpu.memory_space<vmem>>, %arg6: memref<64x32xf32, #tpu.memory_space<vmem>>, %arg7: memref<1x32xf32, #tpu.memory_space<vmem>>, %arg8: memref<16x32xf32, #tpu.memory_space<vmem>>) attributes {dimension_semantics = [#tpu.dimension_semantics<parallel>], iteration_bounds = array<i64: 1>, scalar_prefetch = 0 : i64, scratch_operands = 0 : i64, tpu.core_type = #tpu.core_type<tc>, window_params = [{transform_indices = @transform_0, window_bounds = array<i64: 16, 32>}, {pipeline_mode = #tpu.pipeline_mode<synchronous>, transform_indices = @transform_1, window_bounds = array<i64: 1, 32>}, {pipeline_mode = #tpu.pipeline_mode<synchronous>, transform_indices = @transform_2, window_bounds = array<i64: 1, 32>}, {pipeline_mode = #tpu.pipeline_mode<synchronous>, transform_indices = @transform_3, window_bounds = array<i64: 32, 64>}, {pipeline_mode = #tpu.pipeline_mode<synchronous>, transform_indices = @transform_4, window_bounds = array<i64: 1, 64>}, {pipeline_mode = #tpu.pipeline_mode<synchronous>, transform_indices = @transform_5, window_bounds = array<i64: 64, 32>}, {pipeline_mode = #tpu.pipeline_mode<synchronous>, transform_indices = @transform_6, window_bounds = array<i64: 1, 32>}, {transform_indices = @transform_7, window_bounds = array<i64: 16, 32>}]} {
    %c0 = arith.constant 0 : index
    %c0_0 = arith.constant 0 : index
    %0 = vector.load %arg1[%c0, %c0_0] : memref<16x32xf32, #tpu.memory_space<vmem>>, vector<16x32xf32>
    %cst = arith.constant dense<0.000000e+00> : vector<16xf32>
    %1 = vector.multi_reduction <add>, %0, %cst [1] : vector<16x32xf32> to vector<16xf32>
    %2 = vector.shape_cast %1 : vector<16xf32> to vector<16x1xf32>
    %cst_1 = arith.constant 3.200000e+01 : f32
    %3 = vector.broadcast %cst_1 : f32 to vector<16x1xf32>
    %4 = arith.divf %2, %3 : vector<16x1xf32>
    %5 = vector.broadcast %4 : vector<16x1xf32> to vector<16x32xf32>
    %6 = arith.subf %0, %5 : vector<16x32xf32>
    %7 = arith.mulf %6, %6 : vector<16x32xf32>
    %cst_2 = arith.constant dense<0.000000e+00> : vector<16xf32>
    %8 = vector.multi_reduction <add>, %7, %cst_2 [1] : vector<16x32xf32> to vector<16xf32>
    %9 = vector.shape_cast %8 : vector<16xf32> to vector<16x1xf32>
    %cst_3 = arith.constant 3.100000e+01 : f32
    %10 = vector.broadcast %cst_3 : f32 to vector<16x1xf32>
    %11 = arith.divf %9, %10 : vector<16x1xf32>
    %c0_4 = arith.constant 0 : index
    %c0_5 = arith.constant 0 : index
    %12 = vector.load %arg2[%c0_4, %c0_5] : memref<1x32xf32, #tpu.memory_space<vmem>>, vector<1x32xf32>
    %13 = vector.broadcast %4 : vector<16x1xf32> to vector<16x32xf32>
    %14 = arith.subf %0, %13 : vector<16x32xf32>
    %15 = vector.broadcast %12 : vector<1x32xf32> to vector<16x32xf32>
    %16 = arith.mulf %15, %14 : vector<16x32xf32>
    %17 = math.sqrt %11 : vector<16x1xf32>
    %cst_6 = arith.constant 9.99999997E-7 : f32
    %18 = vector.broadcast %cst_6 : f32 to vector<16x1xf32>
    %19 = arith.addf %17, %18 : vector<16x1xf32>
    %20 = vector.broadcast %19 : vector<16x1xf32> to vector<16x32xf32>
    %21 = arith.divf %16, %20 : vector<16x32xf32>
    %c0_7 = arith.constant 0 : index
    %c0_8 = arith.constant 0 : index
    %22 = vector.load %arg3[%c0_7, %c0_8] : memref<1x32xf32, #tpu.memory_space<vmem>>, vector<1x32xf32>
    %23 = vector.broadcast %22 : vector<1x32xf32> to vector<16x32xf32>
    %24 = arith.addf %21, %23 : vector<16x32xf32>
    %c0_9 = arith.constant 0 : index
    %c0_10 = arith.constant 0 : index
    %25 = vector.load %arg4[%c0_9, %c0_10] : memref<32x64xf32, #tpu.memory_space<vmem>>, vector<32x64xf32>
    %cst_11 = arith.constant dense<0.000000e+00> : vector<16x64xf32>
    %26 = tpu.matmul %24, %25, %cst_11 {dimension_numbers = #tpu.dot_dimension_numbers<[1], [0], [0], [1], [0, 0, 1, 1], [], []>} : vector<16x32xf32>, vector<32x64xf32>, vector<16x64xf32> -> vector<16x64xf32>
    %c0_12 = arith.constant 0 : index
    %c0_13 = arith.constant 0 : index
    %27 = vector.load %arg5[%c0_12, %c0_13] : memref<1x64xf32, #tpu.memory_space<vmem>>, vector<1x64xf32>
    %28 = vector.broadcast %27 : vector<1x64xf32> to vector<16x64xf32>
    %29 = arith.addf %26, %28 : vector<16x64xf32>
    %cst_14 = arith.constant 0.000000e+00 : f32
    %30 = vector.broadcast %cst_14 : f32 to vector<16x64xf32>
    %31 = arith.maximumf %29, %30 : vector<16x64xf32>
    %c0_15 = arith.constant 0 : index
    %c0_16 = arith.constant 0 : index
    %32 = vector.load %arg6[%c0_15, %c0_16] : memref<64x32xf32, #tpu.memory_space<vmem>>, vector<64x32xf32>
    %cst_17 = arith.constant dense<0.000000e+00> : vector<16x32xf32>
    %33 = tpu.matmul %31, %32, %cst_17 {dimension_numbers = #tpu.dot_dimension_numbers<[1], [0], [0], [1], [0, 0, 1, 1], [], []>} : vector<16x64xf32>, vector<64x32xf32>, vector<16x32xf32> -> vector<16x32xf32>
    %c0_18 = arith.constant 0 : index
    %c0_19 = arith.constant 0 : index
    %34 = vector.load %arg7[%c0_18, %c0_19] : memref<1x32xf32, #tpu.memory_space<vmem>>, vector<1x32xf32>
    %35 = vector.broadcast %34 : vector<1x32xf32> to vector<16x32xf32>
    %36 = arith.addf %33, %35 : vector<16x32xf32>
    %37 = arith.addf %36, %0 : vector<16x32xf32>
    %c0_20 = arith.constant 0 : index
    %c0_21 = arith.constant 0 : index
    %38 = vector.load %arg8[%c0_20, %c0_21] : memref<16x32xf32, #tpu.memory_space<vmem>>, vector<16x32xf32>
    tpu.vector_store %arg8[%c0_20, %c0_21], %37 {strides = array<i32>} : memref<16x32xf32, #tpu.memory_space<vmem>>, vector<16x32xf32>,
    return
  }
  func.func @transform_0(%arg0: i32) -> (i32, i32) {
    %c0_i32 = arith.constant 0 : i32
    %c0_i32_0 = arith.constant 0 : i32
    return %arg0, %c0_i32 : i32, i32
  }
  func.func @transform_1(%arg0: i32) -> (i32, i32) {
    %c0_i32 = arith.constant 0 : i32
    %c0_i32_0 = arith.constant 0 : i32
    %c0_i32_1 = arith.constant 0 : i32
    return %c0_i32, %c0_i32_0 : i32, i32
  }
  func.func @transform_2(%arg0: i32) -> (i32, i32) {
    %c0_i32 = arith.constant 0 : i32
    %c0_i32_0 = arith.constant 0 : i32
    %c0_i32_1 = arith.constant 0 : i32
    return %c0_i32, %c0_i32_0 : i32, i32
  }
  func.func @transform_3(%arg0: i32) -> (i32, i32) {
    %c0_i32 = arith.constant 0 : i32
    %c0_i32_0 = arith.constant 0 : i32
    %c0_i32_1 = arith.constant 0 : i32
    return %c0_i32, %c0_i32_0 : i32, i32
  }
  func.func @transform_4(%arg0: i32) -> (i32, i32) {
    %c0_i32 = arith.constant 0 : i32
    %c0_i32_0 = arith.constant 0 : i32
    %c0_i32_1 = arith.constant 0 : i32
    return %c0_i32, %c0_i32_0 : i32, i32
  }
  func.func @transform_5(%arg0: i32) -> (i32, i32) {
    %c0_i32 = arith.constant 0 : i32
    %c0_i32_0 = arith.constant 0 : i32
    %c0_i32_1 = arith.constant 0 : i32
    return %c0_i32, %c0_i32_0 : i32, i32
  }
  func.func @transform_6(%arg0: i32) -> (i32, i32) {
    %c0_i32 = arith.constant 0 : i32
    %c0_i32_0 = arith.constant 0 : i32
    %c0_i32_1 = arith.constant 0 : i32
    return %c0_i32, %c0_i32_0 : i32, i32
  }
  func.func @transform_7(%arg0: i32) -> (i32, i32) {
    %c0_i32 = arith.constant 0 : i32
    %c0_i32_0 = arith.constant 0 : i32
    return %arg0, %c0_i32 : i32, i32
  }
}

module attributes {stable_mosaic.version = 11 : i64} {
  func.func @_ln_qkv_kernel(%arg0: i32, %arg1: memref<16x32xf32, #tpu.memory_space<vmem>>, %arg2: memref<1x32xf32, #tpu.memory_space<vmem>>, %arg3: memref<1x32xf32, #tpu.memory_space<vmem>>, %arg4: memref<32x32xf32, #tpu.memory_space<vmem>>, %arg5: memref<1x32xf32, #tpu.memory_space<vmem>>, %arg6: memref<32x32xf32, #tpu.memory_space<vmem>>, %arg7: memref<1x32xf32, #tpu.memory_space<vmem>>, %arg8: memref<32x32xf32, #tpu.memory_space<vmem>>, %arg9: memref<1x32xf32, #tpu.memory_space<vmem>>, %arg10: memref<16x32xf32, #tpu.memory_space<vmem>>, %arg11: memref<16x32xf32, #tpu.memory_space<vmem>>, %arg12: memref<16x32xf32, #tpu.memory_space<vmem>>) attributes {dimension_semantics = [#tpu.dimension_semantics<parallel>], iteration_bounds = array<i64: 1>, scalar_prefetch = 0 : i64, scratch_operands = 0 : i64, tpu.core_type = #tpu.core_type<tc>, window_params = [{transform_indices = @transform_0, window_bounds = array<i64: 16, 32>}, {pipeline_mode = #tpu.pipeline_mode<synchronous>, transform_indices = @transform_1, window_bounds = array<i64: 1, 32>}, {pipeline_mode = #tpu.pipeline_mode<synchronous>, transform_indices = @transform_2, window_bounds = array<i64: 1, 32>}, {pipeline_mode = #tpu.pipeline_mode<synchronous>, transform_indices = @transform_3, window_bounds = array<i64: 32, 32>}, {pipeline_mode = #tpu.pipeline_mode<synchronous>, transform_indices = @transform_4, window_bounds = array<i64: 1, 32>}, {pipeline_mode = #tpu.pipeline_mode<synchronous>, transform_indices = @transform_5, window_bounds = array<i64: 32, 32>}, {pipeline_mode = #tpu.pipeline_mode<synchronous>, transform_indices = @transform_6, window_bounds = array<i64: 1, 32>}, {pipeline_mode = #tpu.pipeline_mode<synchronous>, transform_indices = @transform_7, window_bounds = array<i64: 32, 32>}, {pipeline_mode = #tpu.pipeline_mode<synchronous>, transform_indices = @transform_8, window_bounds = array<i64: 1, 32>}, {transform_indices = @transform_9, window_bounds = array<i64: 16, 32>}, {transform_indices = @transform_10, window_bounds = array<i64: 16, 32>}, {transform_indices = @transform_11, window_bounds = array<i64: 16, 32>}]} {
    %c0 = arith.constant 0 : index
    %c0_0 = arith.constant 0 : index
    %0 = vector.load %arg1[%c0, %c0_0] : memref<16x32xf32, #tpu.memory_space<vmem>>, vector<16x32xf32>
    %cst = arith.constant dense<0.000000e+00> : vector<16xf32>
    %1 = vector.multi_reduction <add>, %0, %cst [1] : vector<16x32xf32> to vector<16xf32>
    %2 = vector.shape_cast %1 : vector<16xf32> to vector<16x1xf32>
    %cst_1 = arith.constant 3.200000e+01 : f32
    %3 = vector.broadcast %cst_1 : f32 to vector<16x1xf32>
    %4 = arith.divf %2, %3 : vector<16x1xf32>
    %5 = vector.broadcast %4 : vector<16x1xf32> to vector<16x32xf32>
    %6 = arith.subf %0, %5 : vector<16x32xf32>
    %7 = arith.mulf %6, %6 : vector<16x32xf32>
    %cst_2 = arith.constant dense<0.000000e+00> : vector<16xf32>
    %8 = vector.multi_reduction <add>, %7, %cst_2 [1] : vector<16x32xf32> to vector<16xf32>
    %9 = vector.shape_cast %8 : vector<16xf32> to vector<16x1xf32>
    %cst_3 = arith.constant 3.100000e+01 : f32
    %10 = vector.broadcast %cst_3 : f32 to vector<16x1xf32>
    %11 = arith.divf %9, %10 : vector<16x1xf32>
    %c0_4 = arith.constant 0 : index
    %c0_5 = arith.constant 0 : index
    %12 = vector.load %arg2[%c0_4, %c0_5] : memref<1x32xf32, #tpu.memory_space<vmem>>, vector<1x32xf32>
    %13 = vector.broadcast %4 : vector<16x1xf32> to vector<16x32xf32>
    %14 = arith.subf %0, %13 : vector<16x32xf32>
    %15 = vector.broadcast %12 : vector<1x32xf32> to vector<16x32xf32>
    %16 = arith.mulf %15, %14 : vector<16x32xf32>
    %17 = math.sqrt %11 : vector<16x1xf32>
    %cst_6 = arith.constant 9.99999997E-7 : f32
    %18 = vector.broadcast %cst_6 : f32 to vector<16x1xf32>
    %19 = arith.addf %17, %18 : vector<16x1xf32>
    %20 = vector.broadcast %19 : vector<16x1xf32> to vector<16x32xf32>
    %21 = arith.divf %16, %20 : vector<16x32xf32>
    %c0_7 = arith.constant 0 : index
    %c0_8 = arith.constant 0 : index
    %22 = vector.load %arg3[%c0_7, %c0_8] : memref<1x32xf32, #tpu.memory_space<vmem>>, vector<1x32xf32>
    %23 = vector.broadcast %22 : vector<1x32xf32> to vector<16x32xf32>
    %24 = arith.addf %21, %23 : vector<16x32xf32>
    %c0_9 = arith.constant 0 : index
    %c0_10 = arith.constant 0 : index
    %25 = vector.load %arg4[%c0_9, %c0_10] : memref<32x32xf32, #tpu.memory_space<vmem>>, vector<32x32xf32>
    %cst_11 = arith.constant dense<0.000000e+00> : vector<16x32xf32>
    %26 = tpu.matmul %24, %25, %cst_11 {dimension_numbers = #tpu.dot_dimension_numbers<[1], [0], [0], [1], [0, 0, 1, 1], [], []>} : vector<16x32xf32>, vector<32x32xf32>, vector<16x32xf32> -> vector<16x32xf32>
    %c0_12 = arith.constant 0 : index
    %c0_13 = arith.constant 0 : index
    %27 = vector.load %arg5[%c0_12, %c0_13] : memref<1x32xf32, #tpu.memory_space<vmem>>, vector<1x32xf32>
    %28 = vector.broadcast %27 : vector<1x32xf32> to vector<16x32xf32>
    %29 = arith.addf %26, %28 : vector<16x32xf32>
    %c0_14 = arith.constant 0 : index
    %c0_15 = arith.constant 0 : index
    %30 = vector.load %arg10[%c0_14, %c0_15] : memref<16x32xf32, #tpu.memory_space<vmem>>, vector<16x32xf32>
    tpu.vector_store %arg10[%c0_14, %c0_15], %29 {strides = array<i32>} : memref<16x32xf32, #tpu.memory_space<vmem>>, vector<16x32xf32>,
    %c0_16 = arith.constant 0 : index
    %c0_17 = arith.constant 0 : index
    %31 = vector.load %arg6[%c0_16, %c0_17] : memref<32x32xf32, #tpu.memory_space<vmem>>, vector<32x32xf32>
    %cst_18 = arith.constant dense<0.000000e+00> : vector<16x32xf32>
    %32 = tpu.matmul %24, %31, %cst_18 {dimension_numbers = #tpu.dot_dimension_numbers<[1], [0], [0], [1], [0, 0, 1, 1], [], []>} : vector<16x32xf32>, vector<32x32xf32>, vector<16x32xf32> -> vector<16x32xf32>
    %c0_19 = arith.constant 0 : index
    %c0_20 = arith.constant 0 : index
    %33 = vector.load %arg7[%c0_19, %c0_20] : memref<1x32xf32, #tpu.memory_space<vmem>>, vector<1x32xf32>
    %34 = vector.broadcast %33 : vector<1x32xf32> to vector<16x32xf32>
    %35 = arith.addf %32, %34 : vector<16x32xf32>
    %c0_21 = arith.constant 0 : index
    %c0_22 = arith.constant 0 : index
    %36 = vector.load %arg11[%c0_21, %c0_22] : memref<16x32xf32, #tpu.memory_space<vmem>>, vector<16x32xf32>
    tpu.vector_store %arg11[%c0_21, %c0_22], %35 {strides = array<i32>} : memref<16x32xf32, #tpu.memory_space<vmem>>, vector<16x32xf32>,
    %c0_23 = arith.constant 0 : index
    %c0_24 = arith.constant 0 : index
    %37 = vector.load %arg8[%c0_23, %c0_24] : memref<32x32xf32, #tpu.memory_space<vmem>>, vector<32x32xf32>
    %cst_25 = arith.constant dense<0.000000e+00> : vector<16x32xf32>
    %38 = tpu.matmul %24, %37, %cst_25 {dimension_numbers = #tpu.dot_dimension_numbers<[1], [0], [0], [1], [0, 0, 1, 1], [], []>} : vector<16x32xf32>, vector<32x32xf32>, vector<16x32xf32> -> vector<16x32xf32>
    %c0_26 = arith.constant 0 : index
    %c0_27 = arith.constant 0 : index
    %39 = vector.load %arg9[%c0_26, %c0_27] : memref<1x32xf32, #tpu.memory_space<vmem>>, vector<1x32xf32>
    %40 = vector.broadcast %39 : vector<1x32xf32> to vector<16x32xf32>
    %41 = arith.addf %38, %40 : vector<16x32xf32>
    %c0_28 = arith.constant 0 : index
    %c0_29 = arith.constant 0 : index
    %42 = vector.load %arg12[%c0_28, %c0_29] : memref<16x32xf32, #tpu.memory_space<vmem>>, vector<16x32xf32>
    tpu.vector_store %arg12[%c0_28, %c0_29], %41 {strides = array<i32>} : memref<16x32xf32, #tpu.memory_space<vmem>>, vector<16x32xf32>,
    return
  }
  func.func @transform_0(%arg0: i32) -> (i32, i32) {
    %c0_i32 = arith.constant 0 : i32
    %c0_i32_0 = arith.constant 0 : i32
    return %arg0, %c0_i32 : i32, i32
  }
  func.func @transform_1(%arg0: i32) -> (i32, i32) {
    %c0_i32 = arith.constant 0 : i32
    %c0_i32_0 = arith.constant 0 : i32
    %c0_i32_1 = arith.constant 0 : i32
    return %c0_i32, %c0_i32_0 : i32, i32
  }
  func.func @transform_2(%arg0: i32) -> (i32, i32) {
    %c0_i32 = arith.constant 0 : i32
    %c0_i32_0 = arith.constant 0 : i32
    %c0_i32_1 = arith.constant 0 : i32
    return %c0_i32, %c0_i32_0 : i32, i32
  }
  func.func @transform_3(%arg0: i32) -> (i32, i32) {
    %c0_i32 = arith.constant 0 : i32
    %c0_i32_0 = arith.constant 0 : i32
    %c0_i32_1 = arith.constant 0 : i32
    return %c0_i32, %c0_i32_0 : i32, i32
  }
  func.func @transform_4(%arg0: i32) -> (i32, i32) {
    %c0_i32 = arith.constant 0 : i32
    %c0_i32_0 = arith.constant 0 : i32
    %c0_i32_1 = arith.constant 0 : i32
    return %c0_i32, %c0_i32_0 : i32, i32
  }
  func.func @transform_5(%arg0: i32) -> (i32, i32) {
    %c0_i32 = arith.constant 0 : i32
    %c0_i32_0 = arith.constant 0 : i32
    %c0_i32_1 = arith.constant 0 : i32
    return %c0_i32, %c0_i32_0 : i32, i32
  }
  func.func @transform_6(%arg0: i32) -> (i32, i32) {
    %c0_i32 = arith.constant 0 : i32
    %c0_i32_0 = arith.constant 0 : i32
    %c0_i32_1 = arith.constant 0 : i32
    return %c0_i32, %c0_i32_0 : i32, i32
  }
  func.func @transform_7(%arg0: i32) -> (i32, i32) {
    %c0_i32 = arith.constant 0 : i32
    %c0_i32_0 = arith.constant 0 : i32
    %c0_i32_1 = arith.constant 0 : i32
    return %c0_i32, %c0_i32_0 : i32, i32
  }
  func.func @transform_8(%arg0: i32) -> (i32, i32) {
    %c0_i32 = arith.constant 0 : i32
    %c0_i32_0 = arith.constant 0 : i32
    %c0_i32_1 = arith.constant 0 : i32
    return %c0_i32, %c0_i32_0 : i32, i32
  }
  func.func @transform_9(%arg0: i32) -> (i32, i32) {
    %c0_i32 = arith.constant 0 : i32
    %c0_i32_0 = arith.constant 0 : i32
    return %arg0, %c0_i32 : i32, i32
  }
  func.func @transform_10(%arg0: i32) -> (i32, i32) {
    %c0_i32 = arith.constant 0 : i32
    %c0_i32_0 = arith.constant 0 : i32
    return %arg0, %c0_i32 : i32, i32
  }
  func.func @transform_11(%arg0: i32) -> (i32, i32) {
    %c0_i32 = arith.constant 0 : i32
    %c0_i32_0 = arith.constant 0 : i32
    return %arg0, %c0_i32 : i32, i32
  }
}

module attributes {stable_mosaic.version = 11 : i64} {
  func.func @_layernorm_kernel(%arg0: i32, %arg1: memref<16x32xf32, #tpu.memory_space<vmem>>, %arg2: memref<1x32xf32, #tpu.memory_space<vmem>>, %arg3: memref<1x32xf32, #tpu.memory_space<vmem>>, %arg4: memref<16x32xf32, #tpu.memory_space<vmem>>) attributes {dimension_semantics = [#tpu.dimension_semantics<parallel>], iteration_bounds = array<i64: 1>, scalar_prefetch = 0 : i64, scratch_operands = 0 : i64, tpu.core_type = #tpu.core_type<tc>, window_params = [{transform_indices = @transform_0, window_bounds = array<i64: 16, 32>}, {pipeline_mode = #tpu.pipeline_mode<synchronous>, transform_indices = @transform_1, window_bounds = array<i64: 1, 32>}, {pipeline_mode = #tpu.pipeline_mode<synchronous>, transform_indices = @transform_2, window_bounds = array<i64: 1, 32>}, {transform_indices = @transform_3, window_bounds = array<i64: 16, 32>}]} {
    %c0 = arith.constant 0 : index
    %c0_0 = arith.constant 0 : index
    %0 = vector.load %arg1[%c0, %c0_0] : memref<16x32xf32, #tpu.memory_space<vmem>>, vector<16x32xf32>
    %cst = arith.constant dense<0.000000e+00> : vector<16xf32>
    %1 = vector.multi_reduction <add>, %0, %cst [1] : vector<16x32xf32> to vector<16xf32>
    %2 = vector.shape_cast %1 : vector<16xf32> to vector<16x1xf32>
    %cst_1 = arith.constant 3.200000e+01 : f32
    %3 = vector.broadcast %cst_1 : f32 to vector<16x1xf32>
    %4 = arith.divf %2, %3 : vector<16x1xf32>
    %5 = vector.broadcast %4 : vector<16x1xf32> to vector<16x32xf32>
    %6 = arith.subf %0, %5 : vector<16x32xf32>
    %7 = arith.mulf %6, %6 : vector<16x32xf32>
    %cst_2 = arith.constant dense<0.000000e+00> : vector<16xf32>
    %8 = vector.multi_reduction <add>, %7, %cst_2 [1] : vector<16x32xf32> to vector<16xf32>
    %9 = vector.shape_cast %8 : vector<16xf32> to vector<16x1xf32>
    %cst_3 = arith.constant 3.100000e+01 : f32
    %10 = vector.broadcast %cst_3 : f32 to vector<16x1xf32>
    %11 = arith.divf %9, %10 : vector<16x1xf32>
    %c0_4 = arith.constant 0 : index
    %c0_5 = arith.constant 0 : index
    %12 = vector.load %arg2[%c0_4, %c0_5] : memref<1x32xf32, #tpu.memory_space<vmem>>, vector<1x32xf32>
    %13 = vector.broadcast %4 : vector<16x1xf32> to vector<16x32xf32>
    %14 = arith.subf %0, %13 : vector<16x32xf32>
    %15 = vector.broadcast %12 : vector<1x32xf32> to vector<16x32xf32>
    %16 = arith.mulf %15, %14 : vector<16x32xf32>
    %17 = math.sqrt %11 : vector<16x1xf32>
    %cst_6 = arith.constant 9.99999997E-7 : f32
    %18 = vector.broadcast %cst_6 : f32 to vector<16x1xf32>
    %19 = arith.addf %17, %18 : vector<16x1xf32>
    %20 = vector.broadcast %19 : vector<16x1xf32> to vector<16x32xf32>
    %21 = arith.divf %16, %20 : vector<16x32xf32>
    %c0_7 = arith.constant 0 : index
    %c0_8 = arith.constant 0 : index
    %22 = vector.load %arg3[%c0_7, %c0_8] : memref<1x32xf32, #tpu.memory_space<vmem>>, vector<1x32xf32>
    %23 = vector.broadcast %22 : vector<1x32xf32> to vector<16x32xf32>
    %24 = arith.addf %21, %23 : vector<16x32xf32>
    %c0_9 = arith.constant 0 : index
    %c0_10 = arith.constant 0 : index
    %25 = vector.load %arg4[%c0_9, %c0_10] : memref<16x32xf32, #tpu.memory_space<vmem>>, vector<16x32xf32>
    tpu.vector_store %arg4[%c0_9, %c0_10], %24 {strides = array<i32>} : memref<16x32xf32, #tpu.memory_space<vmem>>, vector<16x32xf32>,
    return
  }
  func.func @transform_0(%arg0: i32) -> (i32, i32) {
    %c0_i32 = arith.constant 0 : i32
    %c0_i32_0 = arith.constant 0 : i32
    return %arg0, %c0_i32 : i32, i32
  }
  func.func @transform_1(%arg0: i32) -> (i32, i32) {
    %c0_i32 = arith.constant 0 : i32
    %c0_i32_0 = arith.constant 0 : i32
    %c0_i32_1 = arith.constant 0 : i32
    return %c0_i32, %c0_i32_0 : i32, i32
  }
  func.func @transform_2(%arg0: i32) -> (i32, i32) {
    %c0_i32 = arith.constant 0 : i32
    %c0_i32_0 = arith.constant 0 : i32
    %c0_i32_1 = arith.constant 0 : i32
    return %c0_i32, %c0_i32_0 : i32, i32
  }
  func.func @transform_3(%arg0: i32) -> (i32, i32) {
    %c0_i32 = arith.constant 0 : i32
    %c0_i32_0 = arith.constant 0 : i32
    return %arg0, %c0_i32 : i32, i32
  }
}

</mosaic_0001>

<llo_original>
// kernel: encoder.11
$region0: #{encoder.11}
  #allocation0 [shape = 'u32[]', space=smem, size = 0x4, offset = 0x4, fixed_abs, tag = 'smem constant byte address 0x4 - core index']
  #allocation1 [shape = 'u32[144,128]{1,0:T(1,128)}', space=vmem, size = 0x12000, scoped, tag = 'internal scratch']
  #allocation2 [shape = 'f32[16,32]{1,0:T(8,128)}', space=vmem, size = 0x2000, scoped, tag = 'scratch operand']
  %s0 = inlined_call_operand.vmem [shape: f32[16,32], index: 0, kind: input, shape index: {}]
  %s1 = inlined_call_operand.vmem [shape: f32[32,32], index: 1, kind: input, shape index: {}]
  %s2 = inlined_call_operand.vmem [shape: f32[1,32], index: 2, kind: input, shape index: {}]
  %s3 = inlined_call_operand.vmem [shape: f32[16,32], index: 3, kind: input, shape index: {}]
  %s4 = inlined_call_operand.vmem [shape: f32[16,32], index: 4, kind: output, shape index: {}]
  %s5 = sld [smem:[#allocation0]]
  $region34: #{encoder.11} parent=0
    _
  %s7 = ssub.s32 1, %s5
  %s8 = scalar_select 0, %s7, %s5
  // Predicated region
  $region2: #{encoder.11} parent=0 // pred_check
    _
  $region3: #{encoder.11} parent=0 // pred_check_branch
    %10 = sbr.rel (0) target = $region5
  $region4: #{encoder.11} parent=0 // pred_region
    _
  $region5: #{encoder.11} parent=0 // pred_fallthru
    _
  // Predicated region
  $region6: #{encoder.11} parent=0 // pred_check
    _
  $region7: #{encoder.11} parent=0 // pred_check_branch
    %12 = sbr.rel (0) target = $region9
  $region8: #{encoder.11} parent=0 // pred_region
    _
  $region9: #{encoder.11} parent=0 // pred_fallthru
    _
  // Predicated region
  $region10: #{encoder.11} parent=0 // pred_check
    _
  $region11: #{encoder.11} parent=0 // pred_check_branch
    %14 = sbr.rel (0) target = $region13
  $region12: #{encoder.11} parent=0 // pred_region
    _
  $region13: #{encoder.11} parent=0 // pred_fallthru
    _
  // Predicated region
  $region14: #{encoder.11} parent=0 // pred_check
    _
  $region15: #{encoder.11} parent=0 // pred_check_branch
    %16 = sbr.rel (0) target = $region17
  $region16: #{encoder.11} parent=0 // pred_region
    _
  $region17: #{encoder.11} parent=0 // pred_fallthru
    _
  %p17 = scmp.eq.s32.totalorder 0, 0
  // Predicated region
  $region18: #{encoder.11} parent=0 // pred_check
    %p18 = pneg %p17
  $region19: #{encoder.11} parent=0 // pred_check_branch
    %20 = sbr.rel (%p18) target = $region21
  $region20: #{encoder.11} parent=0 // pred_region
    %vm21 = vcmask 261120
    %22 = vst.msk [vmem:[#allocation2] sm:$0xff] %vm21, 0.0
    %23 = vst.msk [vmem:[#allocation2 + $0x8] sm:$0xff] %vm21, 0.0
  $region21: #{encoder.11} parent=0 // pred_fallthru
    _
  %v24 = vld [vmem:[#allocation2] sm:$0xff]
  %v25 = vld [vmem:[#allocation2 + $0x8] sm:$0xff]
  %v26 = vld [vmem:[%s0] sm:$0xff]
  %v27 = vld [vmem:[%s0 + $0x8] sm:$0xff]
  %v28 = vld [vmem:[%s1] sm:$0xff]
  %v29 = vld [vmem:[%s1 + $0x8] sm:$0xff]
  %v30 = vld [vmem:[%s1 + $0x10] sm:$0xff]
  %v31 = vld [vmem:[%s1 + $0x18] sm:$0xff]
  %vm32 = vcmask 261120
  %v34 = vsel %vm32, %v26, 0
  %v37 = vsel %vm32, %v27, 0
  %39 = vmatprep.subr.mxu0 0.0
  %40 = vmatpush1.msra.mxu0 0.0
  %41 = vmatprep.subr.mxu0 0.0
  %42 = vmatpush1.msra.mxu0 0.0
  %43 = vmatprep.subr.mxu0 0.0
  %44 = vmatpush1.msra.mxu0 0.0
  %45 = vmatprep.subr.mxu0 0.0
  %46 = vmatpush1.msra.mxu0 0.0
  %47 = vmatprep.subr.mxu0 0.0
  %48 = vmatpush1.msra.mxu0 0.0
  %49 = vmatprep.subr.mxu0 0.0
  %50 = vmatpush1.msra.mxu0 0.0
  %51 = vmatprep.subr.mxu0 0.0
  %52 = vmatpush1.msra.mxu0 0.0
  %53 = vmatprep.subr.mxu0 0.0
  %54 = vmatpush1.msra.mxu0 0.0
  %55 = vmatprep.subr.mxu0 0.0
  %56 = vmatpush1.msra.mxu0 0.0
  %57 = vmatprep.subr.mxu0 0.0
  %58 = vmatpush1.msra.mxu0 0.0
  %59 = vmatprep.subr.mxu0 0.0
  %60 = vmatpush1.msra.mxu0 0.0
  %61 = vmatprep.subr.mxu0 0.0
  %62 = vmatpush1.msra.mxu0 0.0
  %63 = vmatprep.subr.mxu0 0.0
  %64 = vmatpush1.msra.mxu0 %v31
  %65 = vmatprep.subr.mxu0 0.0
  %66 = vmatpush1.msra.mxu0 %v30
  %67 = vmatprep.subr.mxu0 0.0
  %68 = vmatpush1.msra.mxu0 %v29
  %69 = vmatprep.subr.mxu0 0.0
  %70 = vmatpush1.msra.mxu0 %v28
  %71 = vmatprep.subr.mxu0 0.0
  %72 = vmatpush2.msra.mxu0 0.0
  %73 = vmatprep.subr.mxu0 0.0
  %74 = vmatpush2.msra.mxu0 0.0
  %75 = vmatprep.subr.mxu0 0.0
  %76 = vmatpush2.msra.mxu0 0.0
  %77 = vmatprep.subr.mxu0 0.0
  %78 = vmatpush2.msra.mxu0 0.0
  %79 = vmatprep.subr.mxu0 0.0
  %80 = vmatpush2.msra.mxu0 0.0
  %81 = vmatprep.subr.mxu0 0.0
  %82 = vmatpush2.msra.mxu0 0.0
  %83 = vmatprep.subr.mxu0 0.0
  %84 = vmatpush2.msra.mxu0 0.0
  %85 = vmatprep.subr.mxu0 0.0
  %86 = vmatpush2.msra.mxu0 0.0
  %87 = vmatprep.subr.mxu0 0.0
  %88 = vmatpush2.msra.mxu0 0.0
  %89 = vmatprep.subr.mxu0 0.0
  %90 = vmatpush2.msra.mxu0 0.0
  %91 = vmatprep.subr.mxu0 0.0
  %92 = vmatpush2.msra.mxu0 0.0
  %93 = vmatprep.subr.mxu0 0.0
  %94 = vmatpush2.msra.mxu0 0.0
  %95 = vmatprep.subr.mxu0 0.0
  %96 = vmatpush2.msra.mxu0 0.0
  %97 = vmatprep.subr.mxu0 0.0
  %98 = vmatpush2.msra.mxu0 0.0
  %99 = vmatprep.subr.mxu0 0.0
  %100 = vmatpush2.msra.mxu0 0.0
  %101 = vmatprep.subr.mxu0 0.0
  %102 = vmatpush2.msra.mxu0 0.0
  %103 = vmatprep.mubr.f32.mxu0 0.0
  %104 = vmatmul.mubr.f32.gmra.mxu0 %v34
  %v105 = vpop.f32.mrf.mxu0
  %v106 = vadd.f32 0.0, %v105
  %v107 = vpop.f32.mrf.mxu0
  %108 = vmatprep.mubr.f32.mxu0 0.0
  %109 = vmatmul.mubr.f32.gmra.mxu0 %v37
  %v110 = vpop.f32.mrf.mxu0
  %v111 = vadd.f32 0.0, %v110
  %v112 = vpop.f32.mrf.mxu0
  %113 = vdwg.mxu0
  %v114 = vadd.f32 %v24, %v106
  %v115 = vadd.f32 %v25, %v111
  %116 = vst.msk [vmem:[#allocation2] sm:$0xff] %vm32, %v114
  %117 = vst.msk [vmem:[#allocation2 + $0x8] sm:$0xff] %vm32, %v115
  // Predicated region
  $region22: #{encoder.11} parent=0 // pred_check
    %p118 = pneg %p17
  $region23: #{encoder.11} parent=0 // pred_check_branch
    %120 = sbr.rel (%p118) target = $region25
  $region24: #{encoder.11} parent=0 // pred_region
    %v121 = vld [vmem:[#allocation2] sm:$0xff]
    %v122 = vld [vmem:[#allocation2 + $0x8] sm:$0xff]
    %v123 = vld [vmem:[%s2] sm:$0x1]
    %v125 = vlaneseq
    %v126 = vshrl.u32 %v125, 7
    %v127 = vsub.s32 0, %v126
    %v128 = vrot.slane %v123, %v127
    %v130 = vadd.f32 %v121, %v128
    %v131 = vadd.f32 %v122, %v128
    %v132 = vld [vmem:[%s3] sm:$0xff]
    %v133 = vld [vmem:[%s3 + $0x8] sm:$0xff]
    %v134 = vadd.f32 %v130, %v132
    %v135 = vadd.f32 %v131, %v133
    %136 = vst.msk [vmem:[%s4] sm:$0xff] %vm32, %v134
    %137 = vst.msk [vmem:[%s4 + $0x8] sm:$0xff] %vm32, %v135
  $region25: #{encoder.11} parent=0 // pred_fallthru
    _
  // Predicated region
  $region26: #{encoder.11} parent=0 // pred_check
    _
  $region27: #{encoder.11} parent=0 // pred_check_branch
    %139 = sbr.rel (0) target = $region29
  $region28: #{encoder.11} parent=0 // pred_region
    _
  $region29: #{encoder.11} parent=0 // pred_fallthru
    _
  // Predicated region
  $region30: #{encoder.11} parent=0 // pred_check
    _
  $region31: #{encoder.11} parent=0 // pred_check_branch
    %141 = sbr.rel (0) target = $region33
  $region32: #{encoder.11} parent=0 // pred_region
    _
  $region33: #{encoder.11} parent=0 // pred_fallthru
    _

// kernel: encoder.9
$region0: #{encoder.9}
  #allocation0 [shape = 'u32[]', space=smem, size = 0x4, offset = 0x4, fixed_abs, tag = 'smem constant byte address 0x4 - core index']
  #allocation1 [shape = 'u32[144,128]{1,0:T(1,128)}', space=vmem, size = 0x12000, scoped, tag = 'internal scratch']
  %s0 = inlined_call_operand.vmem [shape: f32[16,32], index: 0, kind: input, shape index: {}]
  %s1 = inlined_call_operand.vmem [shape: f32[1,32], index: 1, kind: input, shape index: {}]
  %s2 = inlined_call_operand.vmem [shape: f32[1,32], index: 2, kind: input, shape index: {}]
  %s3 = inlined_call_operand.vmem [shape: f32[32,32], index: 3, kind: input, shape index: {}]
  %s4 = inlined_call_operand.vmem [shape: f32[1,32], index: 4, kind: input, shape index: {}]
  %s5 = inlined_call_operand.hbm [shape: f32[32,32], index: 5, kind: input, shape index: {}]
  %s6 = inlined_call_operand.vmem [shape: f32[1,32], index: 6, kind: input, shape index: {}]
  %s7 = inlined_call_operand.hbm [shape: f32[32,32], index: 7, kind: input, shape index: {}]
  %s8 = inlined_call_operand.vmem [shape: f32[1,32], index: 8, kind: input, shape index: {}]
  %s9 = inlined_call_operand.vmem [shape: f32[16,32], index: 9, kind: output, shape index: {0}]
  %s10 = inlined_call_operand.vmem [shape: f32[16,32], index: 10, kind: output, shape index: {1}]
  %s11 = inlined_call_operand.vmem [shape: f32[16,32], index: 11, kind: output, shape index: {2}]
  %12 = xla_tuple %s9, %s10, %s11
  %s13 = sld [smem:[#allocation0]]
  $region70: #{encoder.9} parent=0
    _
  %s15 = ssub.s32 1, %s13
  %s16 = scalar_select 0, %s15, %s13
  $region1: #{encoder.9} parent=0
    #allocation2 [shape = 'u8[16384]{0}', space=vmem, size = 0x4000, scoped, tag = 'input window, operand 5, single buffered']
    #allocation3 [shape = 's32[1]{0}', space=sflag, size = 0x4, scoped, tag = 'scoped memory for encoder.9']
    #allocation4 [shape = 'u8[16384]{0}', space=vmem, size = 0x4000, scoped, tag = 'input window, operand 7, single buffered']
    #allocation5 [shape = 's32[1]{0}', space=sflag, size = 0x4, scoped, tag = 'scoped memory for encoder.9']
    %17 = vsyncpa [#allocation3], 0
    %18 = vsyncpa [#allocation5], 0
    // Predicated region
    $region2: #{encoder.9} parent=1 // pred_check
      _
    $region3: #{encoder.9} parent=1 // pred_check_branch
      %20 = sbr.rel (0) target = $region5
    $region4: #{encoder.9} parent=1 // pred_region
      _
    $region5: #{encoder.9} parent=1 // pred_fallthru
      _
    // Predicated region
    $region6: #{encoder.9} parent=1 // pred_check
      _
    $region7: #{encoder.9} parent=1 // pred_check_branch
      %22 = sbr.rel (0) target = $region9
    $region8: #{encoder.9} parent=1 // pred_region
      _
    $region9: #{encoder.9} parent=1 // pred_fallthru
      _
    // Predicated region
    $region10: #{encoder.9} parent=1 // pred_check
      _
    $region11: #{encoder.9} parent=1 // pred_check_branch
      %24 = sbr.rel (0) target = $region13
    $region12: #{encoder.9} parent=1 // pred_region
      _
    $region13: #{encoder.9} parent=1 // pred_fallthru
      _
    // Predicated region
    $region14: #{encoder.9} parent=1 // pred_check
      _
    $region15: #{encoder.9} parent=1 // pred_check_branch
      %26 = sbr.rel (0) target = $region17
    $region16: #{encoder.9} parent=1 // pred_region
      _
    $region17: #{encoder.9} parent=1 // pred_fallthru
      _
    // Predicated region
    $region18: #{encoder.9} parent=1 // pred_check
      _
    $region19: #{encoder.9} parent=1 // pred_check_branch
      %28 = sbr.rel (0) target = $region21
    $region20: #{encoder.9} parent=1 // pred_region
      _
    $region21: #{encoder.9} parent=1 // pred_fallthru
      _
    // Predicated region
    $region22: #{encoder.9} parent=1 // pred_check
      _
    $region23: #{encoder.9} parent=1 // pred_check_branch
      %30 = sbr.rel (0) target = $region25
    $region24: #{encoder.9} parent=1 // pred_region
      %s32 = ssub.s32 512, 512
      %33 = vsyncadd [#allocation3], %s32
      %s34 = sshll.u32 [#allocation2], 4
      %s35 = int_to_ptr.vmem [resolvable:$true] %s34
      %40 = dma.hbm_to_vmem [thread:$0]  %s5, 512, %s35, [#allocation3], 128, 128, 8
    $region25: #{encoder.9} parent=1 // pred_fallthru
      _
    // Predicated region
    $region26: #{encoder.9} parent=1 // pred_check
      _
    $region27: #{encoder.9} parent=1 // pred_check_branch
      %42 = sbr.rel (0) target = $region29
    $region28: #{encoder.9} parent=1 // pred_region
      _
    $region29: #{encoder.9} parent=1 // pred_fallthru
      _
    // Predicated region
    $region30: #{encoder.9} parent=1 // pred_check
      _
    $region31: #{encoder.9} parent=1 // pred_check_branch
      %44 = sbr.rel (0) target = $region33
    $region32: #{encoder.9} parent=1 // pred_region
      %s46 = ssub.s32 512, 512
      %47 = vsyncadd [#allocation5], %s46
      %s48 = sshll.u32 [#allocation4], 4
      %s49 = int_to_ptr.vmem [resolvable:$true] %s48
      %54 = dma.hbm_to_vmem [thread:$0]  %s7, 512, %s49, [#allocation5], 128, 128, 8
    $region33: #{encoder.9} parent=1 // pred_fallthru
      _
    // Predicated region
    $region34: #{encoder.9} parent=1 // pred_check
      _
    $region35: #{encoder.9} parent=1 // pred_check_branch
      %56 = sbr.rel (0) target = $region37
    $region36: #{encoder.9} parent=1 // pred_region
      _
    $region37: #{encoder.9} parent=1 // pred_fallthru
      _
    // Predicated region
    $region38: #{encoder.9} parent=1 // pred_check
      _
    $region39: #{encoder.9} parent=1 // pred_check_branch
      %58 = sbr.rel (0) target = $region41
    $region40: #{encoder.9} parent=1 // pred_region
      %59 = dma.done [#allocation3], 512
    $region41: #{encoder.9} parent=1 // pred_fallthru
      _
    // Predicated region
    $region42: #{encoder.9} parent=1 // pred_check
      _
    $region43: #{encoder.9} parent=1 // pred_check_branch
      %61 = sbr.rel (0) target = $region45
    $region44: #{encoder.9} parent=1 // pred_region
      %62 = dma.done [#allocation5], 512
    $region45: #{encoder.9} parent=1 // pred_fallthru
      _
    %v63 = vld [vmem:[%s0] sm:$0xff]
    %v64 = vld [vmem:[%s0 + $0x8] sm:$0xff]
    %vm65 = vcmask 261120
    %v66 = vsel %vm65, %v63, 0.0
    %67 = vadd.xlane.f32.xlu0 %v66
    %v68 = vpop.xlane.xlu0 %67
    %v69 = vsel %vm65, %v64, 0.0
    %70 = vadd.xlane.f32.xlu0 %v69
    %v71 = vpop.xlane.xlu0 %70
    %v72 = vrcp.pop 32.0
    %v73 = vmul.f32 %v68, %v72
    %v74 = vmul.f32 %v71, %v72
    %v75 = vsub.f32 %v63, %v73
    %v76 = vsub.f32 %v64, %v74
    %v77 = vmul.f32 %v75, %v75
    %v78 = vmul.f32 %v76, %v76
    %v79 = vsel %vm65, %v77, 0.0
    %80 = vadd.xlane.f32.xlu0 %v79
    %v81 = vpop.xlane.xlu0 %80
    %v82 = vsel %vm65, %v78, 0.0
    %83 = vadd.xlane.f32.xlu0 %v82
    %v84 = vpop.xlane.xlu0 %83
    %v85 = vrcp.pop 31.0
    %v86 = vmul.f32 %v81, %v85
    %v87 = vmul.f32 %v84, %v85
    %v88 = vld [vmem:[%s1] sm:$0x1]
    %v90 = vlaneseq
    %v91 = vshrl.u32 %v90, 7
    %v92 = vsub.s32 0, %v91
    %v93 = vrot.slane %v88, %v92
    %v95 = vmul.f32 %v93, %v75
    %v96 = vmul.f32 %v93, %v76
    %v97 = vrsqrt.pop %v86
    %v98 = vmul.f32 %v86, %v97
    %vm99 = vcmp.eq.f32.partialorder %v86, inf
    %v100 = vsel %vm99, %v86, %v98
    %vm101 = vcmp.eq.f32.partialorder %v86, 0.0
    %v102 = vand.u32 %v86, 2147483648
    %v103 = vsel %vm101, %v102, %v100
    %v104 = vrsqrt.pop %v87
    %v105 = vmul.f32 %v87, %v104
    %vm106 = vcmp.eq.f32.partialorder %v87, inf
    %v107 = vsel %vm106, %v87, %v105
    %vm108 = vcmp.eq.f32.partialorder %v87, 0.0
    %v109 = vand.u32 %v87, 2147483648
    %v110 = vsel %vm108, %v109, %v107
    %v111 = vadd.f32 %v103, 1e-06
    %v112 = vadd.f32 %v110, 1e-06
    %v113 = vrcp.pop %v111
    %v114 = vmul.f32 %v95, %v113
    %v115 = vrcp.pop %v112
    %v116 = vmul.f32 %v96, %v115
    %v117 = vld [vmem:[%s2] sm:$0x1]
    %v119 = vlaneseq
    %v120 = vshrl.u32 %v119, 7
    %v121 = vsub.s32 0, %v120
    %v122 = vrot.slane %v117, %v121
    %v124 = vadd.f32 %v114, %v122
    %v125 = vadd.f32 %v116, %v122
    %v126 = vld [vmem:[%s3] sm:$0xff]
    %v127 = vld [vmem:[%s3 + $0x8] sm:$0xff]
    %v128 = vld [vmem:[%s3 + $0x10] sm:$0xff]
    %v129 = vld [vmem:[%s3 + $0x18] sm:$0xff]
    %v130 = vld [vmem:[%s4] sm:$0x1]
    %v132 = vlaneseq
    %v133 = vshrl.u32 %v132, 7
    %v134 = vsub.s32 0, %v133
    %v135 = vrot.slane %v130, %v134
    %v138 = vsel %vm65, %v124, 0
    %v141 = vsel %vm65, %v125, 0
    %143 = vmatprep.subr.mxu0 0.0
    %144 = vmatpush1.msra.mxu0 0.0
    %145 = vmatprep.subr.mxu0 0.0
    %146 = vmatpush1.msra.mxu0 0.0
    %147 = vmatprep.subr.mxu0 0.0
    %148 = vmatpush1.msra.mxu0 0.0
    %149 = vmatprep.subr.mxu0 0.0
    %150 = vmatpush1.msra.mxu0 0.0
    %151 = vmatprep.subr.mxu0 0.0
    %152 = vmatpush1.msra.mxu0 0.0
    %153 = vmatprep.subr.mxu0 0.0
    %154 = vmatpush1.msra.mxu0 0.0
    %155 = vmatprep.subr.mxu0 0.0
    %156 = vmatpush1.msra.mxu0 0.0
    %157 = vmatprep.subr.mxu0 0.0
    %158 = vmatpush1.msra.mxu0 0.0
    %159 = vmatprep.subr.mxu0 0.0
    %160 = vmatpush1.msra.mxu0 0.0
    %161 = vmatprep.subr.mxu0 0.0
    %162 = vmatpush1.msra.mxu0 0.0
    %163 = vmatprep.subr.mxu0 0.0
    %164 = vmatpush1.msra.mxu0 0.0
    %165 = vmatprep.subr.mxu0 0.0
    %166 = vmatpush1.msra.mxu0 0.0
    %167 = vmatprep.subr.mxu0 0.0
    %168 = vmatpush1.msra.mxu0 %v129
    %169 = vmatprep.subr.mxu0 0.0
    %170 = vmatpush1.msra.mxu0 %v128
    %171 = vmatprep.subr.mxu0 0.0
    %172 = vmatpush1.msra.mxu0 %v127
    %173 = vmatprep.subr.mxu0 0.0
    %174 = vmatpush1.msra.mxu0 %v126
    %175 = vmatprep.subr.mxu0 0.0
    %176 = vmatpush2.msra.mxu0 0.0
    %177 = vmatprep.subr.mxu0 0.0
    %178 = vmatpush2.msra.mxu0 0.0
    %179 = vmatprep.subr.mxu0 0.0
    %180 = vmatpush2.msra.mxu0 0.0
    %181 = vmatprep.subr.mxu0 0.0
    %182 = vmatpush2.msra.mxu0 0.0
    %183 = vmatprep.subr.mxu0 0.0
    %184 = vmatpush2.msra.mxu0 0.0
    %185 = vmatprep.subr.mxu0 0.0
    %186 = vmatpush2.msra.mxu0 0.0
    %187 = vmatprep.subr.mxu0 0.0
    %188 = vmatpush2.msra.mxu0 0.0
    %189 = vmatprep.subr.mxu0 0.0
    %190 = vmatpush2.msra.mxu0 0.0
    %191 = vmatprep.subr.mxu0 0.0
    %192 = vmatpush2.msra.mxu0 0.0
    %193 = vmatprep.subr.mxu0 0.0
    %194 = vmatpush2.msra.mxu0 0.0
    %195 = vmatprep.subr.mxu0 0.0
    %196 = vmatpush2.msra.mxu0 0.0
    %197 = vmatprep.subr.mxu0 0.0
    %198 = vmatpush2.msra.mxu0 0.0
    %199 = vmatprep.subr.mxu0 0.0
    %200 = vmatpush2.msra.mxu0 0.0
    %201 = vmatprep.subr.mxu0 0.0
    %202 = vmatpush2.msra.mxu0 0.0
    %203 = vmatprep.subr.mxu0 0.0
    %204 = vmatpush2.msra.mxu0 0.0
    %205 = vmatprep.subr.mxu0 0.0
    %206 = vmatpush2.msra.mxu0 0.0
    %207 = vmatprep.mubr.f32.mxu0 0.0
    %208 = vmatmul.mubr.f32.gmra.mxu0 %v138
    %v209 = vpop.f32.mrf.mxu0
    %v210 = vadd.f32 %v135, %v209
    %v211 = vpop.f32.mrf.mxu0
    %212 = vmatprep.mubr.f32.mxu0 0.0
    %213 = vmatmul.mubr.f32.gmra.mxu0 %v141
    %v214 = vpop.f32.mrf.mxu0
    %v215 = vadd.f32 %v135, %v214
    %v216 = vpop.f32.mrf.mxu0
    %217 = vdwg.mxu0
    %218 = vst.msk [vmem:[%s9] sm:$0xff] %vm65, %v210
    %219 = vst.msk [vmem:[%s9 + $0x8] sm:$0xff] %vm65, %v215
    %v220 = vld [vmem:[#allocation2] sm:$0xff]
    %v221 = vld [vmem:[#allocation2 + $0x8] sm:$0xff]
    %v222 = vld [vmem:[#allocation2 + $0x10] sm:$0xff]
    %v223 = vld [vmem:[#allocation2 + $0x18] sm:$0xff]
    %v224 = vld [vmem:[%s6] sm:$0x1]
    %v226 = vlaneseq
    %v227 = vshrl.u32 %v226, 7
    %v228 = vsub.s32 0, %v227
    %v229 = vrot.slane %v224, %v228
    %231 = vmatprep.subr.mxu0 0.0
    %232 = vmatpush1.msra.mxu0 0.0
    %233 = vmatprep.subr.mxu0 0.0
    %234 = vmatpush1.msra.mxu0 0.0
    %235 = vmatprep.subr.mxu0 0.0
    %236 = vmatpush1.msra.mxu0 0.0
    %237 = vmatprep.subr.mxu0 0.0
    %238 = vmatpush1.msra.mxu0 0.0
    %239 = vmatprep.subr.mxu0 0.0
    %240 = vmatpush1.msra.mxu0 0.0
    %241 = vmatprep.subr.mxu0 0.0
    %242 = vmatpush1.msra.mxu0 0.0
    %243 = vmatprep.subr.mxu0 0.0
    %244 = vmatpush1.msra.mxu0 0.0
    %245 = vmatprep.subr.mxu0 0.0
    %246 = vmatpush1.msra.mxu0 0.0
    %247 = vmatprep.subr.mxu0 0.0
    %248 = vmatpush1.msra.mxu0 0.0
    %249 = vmatprep.subr.mxu0 0.0
    %250 = vmatpush1.msra.mxu0 0.0
    %251 = vmatprep.subr.mxu0 0.0
    %252 = vmatpush1.msra.mxu0 0.0
    %253 = vmatprep.subr.mxu0 0.0
    %254 = vmatpush1.msra.mxu0 0.0
    %255 = vmatprep.subr.mxu0 0.0
    %256 = vmatpush1.msra.mxu0 %v223
    %257 = vmatprep.subr.mxu0 0.0
    %258 = vmatpush1.msra.mxu0 %v222
    %259 = vmatprep.subr.mxu0 0.0
    %260 = vmatpush1.msra.mxu0 %v221
    %261 = vmatprep.subr.mxu0 0.0
    %262 = vmatpush1.msra.mxu0 %v220
    %263 = vmatprep.subr.mxu0 0.0
    %264 = vmatpush2.msra.mxu0 0.0
    %265 = vmatprep.subr.mxu0 0.0
    %266 = vmatpush2.msra.mxu0 0.0
    %267 = vmatprep.subr.mxu0 0.0
    %268 = vmatpush2.msra.mxu0 0.0
    %269 = vmatprep.subr.mxu0 0.0
    %270 = vmatpush2.msra.mxu0 0.0
    %271 = vmatprep.subr.mxu0 0.0
    %272 = vmatpush2.msra.mxu0 0.0
    %273 = vmatprep.subr.mxu0 0.0
    %274 = vmatpush2.msra.mxu0 0.0
    %275 = vmatprep.subr.mxu0 0.0
    %276 = vmatpush2.msra.mxu0 0.0
    %277 = vmatprep.subr.mxu0 0.0
    %278 = vmatpush2.msra.mxu0 0.0
    %279 = vmatprep.subr.mxu0 0.0
    %280 = vmatpush2.msra.mxu0 0.0
    %281 = vmatprep.subr.mxu0 0.0
    %282 = vmatpush2.msra.mxu0 0.0
    %283 = vmatprep.subr.mxu0 0.0
    %284 = vmatpush2.msra.mxu0 0.0
    %285 = vmatprep.subr.mxu0 0.0
    %286 = vmatpush2.msra.mxu0 0.0
    %287 = vmatprep.subr.mxu0 0.0
    %288 = vmatpush2.msra.mxu0 0.0
    %289 = vmatprep.subr.mxu0 0.0
    %290 = vmatpush2.msra.mxu0 0.0
    %291 = vmatprep.subr.mxu0 0.0
    %292 = vmatpush2.msra.mxu0 0.0
    %293 = vmatprep.subr.mxu0 0.0
    %294 = vmatpush2.msra.mxu0 0.0
    %295 = vmatprep.mubr.f32.mxu0 0.0
    %296 = vmatmul.mubr.f32.gmra.mxu0 %v138
    %v297 = vpop.f32.mrf.mxu0
    %v298 = vadd.f32 %v229, %v297
    %v299 = vpop.f32.mrf.mxu0
    %300 = vmatprep.mubr.f32.mxu0 0.0
    %301 = vmatmul.mubr.f32.gmra.mxu0 %v141
    %v302 = vpop.f32.mrf.mxu0
    %v303 = vadd.f32 %v229, %v302
    %v304 = vpop.f32.mrf.mxu0
    %305 = vdwg.mxu0
    %306 = vst.msk [vmem:[%s10] sm:$0xff] %vm65, %v298
    %307 = vst.msk [vmem:[%s10 + $0x8] sm:$0xff] %vm65, %v303
    %v308 = vld [vmem:[#allocation4] sm:$0xff]
    %v309 = vld [vmem:[#allocation4 + $0x8] sm:$0xff]
    %v310 = vld [vmem:[#allocation4 + $0x10] sm:$0xff]
    %v311 = vld [vmem:[#allocation4 + $0x18] sm:$0xff]
    %v312 = vld [vmem:[%s8] sm:$0x1]
    %v314 = vlaneseq
    %v315 = vshrl.u32 %v314, 7
    %v316 = vsub.s32 0, %v315
    %v317 = vrot.slane %v312, %v316
    %319 = vmatprep.subr.mxu0 0.0
    %320 = vmatpush1.msra.mxu0 0.0
    %321 = vmatprep.subr.mxu0 0.0
    %322 = vmatpush1.msra.mxu0 0.0
    %323 = vmatprep.subr.mxu0 0.0
    %324 = vmatpush1.msra.mxu0 0.0
    %325 = vmatprep.subr.mxu0 0.0
    %326 = vmatpush1.msra.mxu0 0.0
    %327 = vmatprep.subr.mxu0 0.0
    %328 = vmatpush1.msra.mxu0 0.0
    %329 = vmatprep.subr.mxu0 0.0
    %330 = vmatpush1.msra.mxu0 0.0
    %331 = vmatprep.subr.mxu0 0.0
    %332 = vmatpush1.msra.mxu0 0.0
    %333 = vmatprep.subr.mxu0 0.0
    %334 = vmatpush1.msra.mxu0 0.0
    %335 = vmatprep.subr.mxu0 0.0
    %336 = vmatpush1.msra.mxu0 0.0
    %337 = vmatprep.subr.mxu0 0.0
    %338 = vmatpush1.msra.mxu0 0.0
    %339 = vmatprep.subr.mxu0 0.0
    %340 = vmatpush1.msra.mxu0 0.0
    %341 = vmatprep.subr.mxu0 0.0
    %342 = vmatpush1.msra.mxu0 0.0
    %343 = vmatprep.subr.mxu0 0.0
    %344 = vmatpush1.msra.mxu0 %v311
    %345 = vmatprep.subr.mxu0 0.0
    %346 = vmatpush1.msra.mxu0 %v310
    %347 = vmatprep.subr.mxu0 0.0
    %348 = vmatpush1.msra.mxu0 %v309
    %349 = vmatprep.subr.mxu0 0.0
    %350 = vmatpush1.msra.mxu0 %v308
    %351 = vmatprep.subr.mxu0 0.0
    %352 = vmatpush2.msra.mxu0 0.0
    %353 = vmatprep.subr.mxu0 0.0
    %354 = vmatpush2.msra.mxu0 0.0
    %355 = vmatprep.subr.mxu0 0.0
    %356 = vmatpush2.msra.mxu0 0.0
    %357 = vmatprep.subr.mxu0 0.0
    %358 = vmatpush2.msra.mxu0 0.0
    %359 = vmatprep.subr.mxu0 0.0
    %360 = vmatpush2.msra.mxu0 0.0
    %361 = vmatprep.subr.mxu0 0.0
    %362 = vmatpush2.msra.mxu0 0.0
    %363 = vmatprep.subr.mxu0 0.0
    %364 = vmatpush2.msra.mxu0 0.0
    %365 = vmatprep.subr.mxu0 0.0
    %366 = vmatpush2.msra.mxu0 0.0
    %367 = vmatprep.subr.mxu0 0.0
    %368 = vmatpush2.msra.mxu0 0.0
    %369 = vmatprep.subr.mxu0 0.0
    %370 = vmatpush2.msra.mxu0 0.0
    %371 = vmatprep.subr.mxu0 0.0
    %372 = vmatpush2.msra.mxu0 0.0
    %373 = vmatprep.subr.mxu0 0.0
    %374 = vmatpush2.msra.mxu0 0.0
    %375 = vmatprep.subr.mxu0 0.0
    %376 = vmatpush2.msra.mxu0 0.0
    %377 = vmatprep.subr.mxu0 0.0
    %378 = vmatpush2.msra.mxu0 0.0
    %379 = vmatprep.subr.mxu0 0.0
    %380 = vmatpush2.msra.mxu0 0.0
    %381 = vmatprep.subr.mxu0 0.0
    %382 = vmatpush2.msra.mxu0 0.0
    %383 = vmatprep.mubr.f32.mxu0 0.0
    %384 = vmatmul.mubr.f32.gmra.mxu0 %v138
    %v385 = vpop.f32.mrf.mxu0
    %v386 = vadd.f32 %v317, %v385
    %v387 = vpop.f32.mrf.mxu0
    %388 = vmatprep.mubr.f32.mxu0 0.0
    %389 = vmatmul.mubr.f32.gmra.mxu0 %v141
    %v390 = vpop.f32.mrf.mxu0
    %v391 = vadd.f32 %v317, %v390
    %v392 = vpop.f32.mrf.mxu0
    %393 = vdwg.mxu0
    %394 = vst.msk [vmem:[%s11] sm:$0xff] %vm65, %v386
    %395 = vst.msk [vmem:[%s11 + $0x8] sm:$0xff] %vm65, %v391
    // Predicated region
    $region46: #{encoder.9} parent=1 // pred_check
      _
    $region47: #{encoder.9} parent=1 // pred_check_branch
      %397 = sbr.rel (0) target = $region49
    $region48: #{encoder.9} parent=1 // pred_region
      _
    $region49: #{encoder.9} parent=1 // pred_fallthru
      _
    // Predicated region
    $region50: #{encoder.9} parent=1 // pred_check
      _
    $region51: #{encoder.9} parent=1 // pred_check_branch
      %399 = sbr.rel (0) target = $region53
    $region52: #{encoder.9} parent=1 // pred_region
      _
    $region53: #{encoder.9} parent=1 // pred_fallthru
      _
    // Predicated region
    $region54: #{encoder.9} parent=1 // pred_check
      _
    $region55: #{encoder.9} parent=1 // pred_check_branch
      %401 = sbr.rel (0) target = $region57
    $region56: #{encoder.9} parent=1 // pred_region
      _
    $region57: #{encoder.9} parent=1 // pred_fallthru
      _
    // Predicated region
    $region58: #{encoder.9} parent=1 // pred_check
      _
    $region59: #{encoder.9} parent=1 // pred_check_branch
      %403 = sbr.rel (0) target = $region61
    $region60: #{encoder.9} parent=1 // pred_region
      _
    $region61: #{encoder.9} parent=1 // pred_fallthru
      _
    // Predicated region
    $region62: #{encoder.9} parent=1 // pred_check
      _
    $region63: #{encoder.9} parent=1 // pred_check_branch
      %405 = sbr.rel (0) target = $region65
    $region64: #{encoder.9} parent=1 // pred_region
      _
    $region65: #{encoder.9} parent=1 // pred_fallthru
      _
    // Predicated region
    $region66: #{encoder.9} parent=1 // pred_check
      _
    $region67: #{encoder.9} parent=1 // pred_check_branch
      %407 = sbr.rel (0) target = $region69
    $region68: #{encoder.9} parent=1 // pred_region
      _
    $region69: #{encoder.9} parent=1 // pred_fallthru
      _
    %408 = vsyncpa [#allocation3], 1
    %409 = vsyncpa [#allocation5], 1

// kernel: encoder.10
$region0: #{encoder.10}
  #allocation0 [shape = 'u32[]', space=smem, size = 0x4, offset = 0x4, fixed_abs, tag = 'smem constant byte address 0x4 - core index']
  #allocation1 [shape = 'u32[144,128]{1,0:T(1,128)}', space=vmem, size = 0x12000, scoped, tag = 'internal scratch']
  #allocation2 [shape = 'f32[4,8,1]{2,1,0:T(8,128)}', space=vmem, size = 0x4000, scoped, tag = 'scratch operand']
  #allocation3 [shape = 'f32[4,8,1]{2,1,0:T(8,128)}', space=vmem, size = 0x4000, scoped, tag = 'scratch operand']
  #allocation4 [shape = 'f32[4,8,8]{2,1,0:T(8,128)}', space=vmem, size = 0x4000, scoped, tag = 'scratch operand']
  %s0 = inlined_call_operand.vmem [shape: f32[2,1,8], index: 0, kind: input, shape index: {}]
  %s1 = inlined_call_operand.vmem [shape: f32[2,8,32], index: 1, kind: input, shape index: {}]
  %s2 = inlined_call_operand.vmem [shape: f32[2,8,32], index: 2, kind: input, shape index: {}]
  %s3 = inlined_call_operand.vmem [shape: f32[2,8,32], index: 3, kind: input, shape index: {}]
  %s4 = inlined_call_operand.vmem [shape: f32[2,8,32], index: 4, kind: output, shape index: {}]
  %s5 = sld [smem:[#allocation0]]
  $region57: #{encoder.10} parent=0
    _
  %s7 = ssub.s32 1, %s5
  %s8 = scalar_select 0, %s7, %s5
  loop: start=0, step=1, limit=4
  $region2: #{encoder.10} parent=0 // loop_pre_header
    _
  $region3: #{encoder.10} parent=0 // loop_header
    %s10 = sphi 0, %s14
    %p11 = scmp.ge.s32.totalorder %s10, 4
    %s17 = sphi 0, %s36
    %s18 = sphi 0, %s32
    %s19 = sphi 0, %s28
    %s20 = sphi 0, %s17
    %s21 = sphi 0, %s18
    %s22 = sphi 0, %s19
    %s23 = sphi 0, %s20
    %s24 = sphi 0, %s21
    %s25 = sphi 0, %s22
    %s41 = sphi 0, %s43
    %s44 = sphi 0, %s41
    %s45 = sphi 0, %s44
    %s61 = sphi 0, %s45
    %s69 = sphi 0, %s71
    %s72 = sphi 0, %s69
    %s73 = sphi 0, %s72
    %s89 = sphi 0, %s73
    %s97 = sphi 0, %s99
    %s100 = sphi 0, %s97
    %s101 = sphi 0, %s100
    %s117 = sphi 0, %s101
    %s125 = sphi 0, %s127
    %s128 = sphi 0, %s125
    %s129 = sphi 0, %s128
    %s145 = sphi 0, %s129
    %s153 = sphi 0, %s155
    %s156 = sphi 0, %s153
    %s157 = sphi 0, %s156
    %s173 = sphi 0, %s157
  $region4: #{encoder.10} parent=0 // loop_header_branch
    %13 = sbr.rel (%p11) target = $region8
  $region5: #{encoder.10} parent=0 // loop_body
    %s15 = ssub.s32 %s10, 1
    %s16 = ssub.s32 %s10, 2
    %s26 = sadd.s32 1, %s19
    %p27 = scmp.ge.s32.totalorder %s26, 1
    %s28 = scalar_select %p27, 0, %s26
    %s29 = sadd.s32 1, %s18
    %s30 = scalar_select %p27, %s29, %s18
    %p31 = scmp.ge.s32.totalorder %s30, 1
    %s32 = scalar_select %p31, 0, %s30
    %s33 = sadd.s32 1, %s17
    %s34 = scalar_select %p31, %s33, %s17
    %p35 = scmp.ge.s32.totalorder %s34, 2
    %s36 = scalar_select %p35, 0, %s34
    %s37 = ssub.s32 %s17, %s36
    %s38 = ssub.s32 %s19, %s28
    %s39 = sor.u32 %s37, %s38
    %p40 = scmp.eq.s32.totalorder %s39, 0
    %s42 = sadd.s32 %s41, 1
    %s43 = scalar_select %p40, %s41, %s42
    %p46 = pneg %p40
    %p47 = scmp.eq.s32.totalorder %s10, 1
    %p48 = por %p46, %p47
    %p49 = scmp.ne.s32.totalorder %s41, %s44
    %p50 = scmp.eq.s32.totalorder %s10, 0
    %p51 = por %p49, %p50
    %p52 = scmp.ne.s32.totalorder %s41, %s44
    %p53 = scmp.eq.s32.totalorder %s15, 1
    %p54 = por %p52, %p53
    %p55 = scmp.ne.s32.totalorder %s44, %s45
    %p56 = scmp.eq.s32.totalorder %s15, 0
    %p57 = por %p55, %p56
    %p58 = scmp.ne.s32.totalorder %s44, %s45
    %p59 = scmp.eq.s32.totalorder %s16, 1
    %p60 = por %p58, %p59
    %p62 = scmp.ne.s32.totalorder %s45, %s61
    %p63 = scmp.eq.s32.totalorder %s16, 0
    %p64 = por %p62, %p63
    %s65 = ssub.s32 %s17, %s36
    %s66 = ssub.s32 %s18, %s32
    %s67 = sor.u32 %s65, %s66
    %p68 = scmp.eq.s32.totalorder %s67, 0
    %s70 = sadd.s32 %s69, 1
    %s71 = scalar_select %p68, %s69, %s70
    %p74 = pneg %p68
    %p75 = scmp.eq.s32.totalorder %s10, 1
    %p76 = por %p74, %p75
    %p77 = scmp.ne.s32.totalorder %s69, %s72
    %p78 = scmp.eq.s32.totalorder %s10, 0
    %p79 = por %p77, %p78
    %p80 = scmp.ne.s32.totalorder %s69, %s72
    %p81 = scmp.eq.s32.totalorder %s15, 1
    %p82 = por %p80, %p81
    %p83 = scmp.ne.s32.totalorder %s72, %s73
    %p84 = scmp.eq.s32.totalorder %s15, 0
    %p85 = por %p83, %p84
    %p86 = scmp.ne.s32.totalorder %s72, %s73
    %p87 = scmp.eq.s32.totalorder %s16, 1
    %p88 = por %p86, %p87
    %p90 = scmp.ne.s32.totalorder %s73, %s89
    %p91 = scmp.eq.s32.totalorder %s16, 0
    %p92 = por %p90, %p91
    %s93 = ssub.s32 %s17, %s36
    %s94 = ssub.s32 %s19, %s28
    %s95 = sor.u32 %s93, %s94
    %p96 = scmp.eq.s32.totalorder %s95, 0
    %s98 = sadd.s32 %s97, 1
    %s99 = scalar_select %p96, %s97, %s98
    %p102 = pneg %p96
    %p103 = scmp.eq.s32.totalorder %s10, 1
    %p104 = por %p102, %p103
    %p105 = scmp.ne.s32.totalorder %s97, %s100
    %p106 = scmp.eq.s32.totalorder %s10, 0
    %p107 = por %p105, %p106
    %p108 = scmp.ne.s32.totalorder %s97, %s100
    %p109 = scmp.eq.s32.totalorder %s15, 1
    %p110 = por %p108, %p109
    %p111 = scmp.ne.s32.totalorder %s100, %s101
    %p112 = scmp.eq.s32.totalorder %s15, 0
    %p113 = por %p111, %p112
    %p114 = scmp.ne.s32.totalorder %s100, %s101
    %p115 = scmp.eq.s32.totalorder %s16, 1
    %p116 = por %p114, %p115
    %p118 = scmp.ne.s32.totalorder %s101, %s117
    %p119 = scmp.eq.s32.totalorder %s16, 0
    %p120 = por %p118, %p119
    %s121 = ssub.s32 %s17, %s36
    %s122 = ssub.s32 %s19, %s28
    %s123 = sor.u32 %s121, %s122
    %p124 = scmp.eq.s32.totalorder %s123, 0
    %s126 = sadd.s32 %s125, 1
    %s127 = scalar_select %p124, %s125, %s126
    %p130 = pneg %p124
    %p131 = scmp.eq.s32.totalorder %s10, 1
    %p132 = por %p130, %p131
    %p133 = scmp.ne.s32.totalorder %s125, %s128
    %p134 = scmp.eq.s32.totalorder %s10, 0
    %p135 = por %p133, %p134
    %p136 = scmp.ne.s32.totalorder %s125, %s128
    %p137 = scmp.eq.s32.totalorder %s15, 1
    %p138 = por %p136, %p137
    %p139 = scmp.ne.s32.totalorder %s128, %s129
    %p140 = scmp.eq.s32.totalorder %s15, 0
    %p141 = por %p139, %p140
    %p142 = scmp.ne.s32.totalorder %s128, %s129
    %p143 = scmp.eq.s32.totalorder %s16, 1
    %p144 = por %p142, %p143
    %p146 = scmp.ne.s32.totalorder %s129, %s145
    %p147 = scmp.eq.s32.totalorder %s16, 0
    %p148 = por %p146, %p147
    %s149 = ssub.s32 %s17, %s36
    %s150 = ssub.s32 %s18, %s32
    %s151 = sor.u32 %s149, %s150
    %p152 = scmp.eq.s32.totalorder %s151, 0
    %s154 = sadd.s32 %s153, 1
    %s155 = scalar_select %p152, %s153, %s154
    %p158 = pneg %p152
    %p159 = scmp.eq.s32.totalorder %s10, 1
    %p160 = por %p158, %p159
    %p161 = scmp.ne.s32.totalorder %s153, %s156
    %p162 = scmp.eq.s32.totalorder %s10, 0
    %p163 = por %p161, %p162
    %p164 = scmp.ne.s32.totalorder %s153, %s156
    %p165 = scmp.eq.s32.totalorder %s15, 1
    %p166 = por %p164, %p165
    %p167 = scmp.ne.s32.totalorder %s156, %s157
    %p168 = scmp.eq.s32.totalorder %s15, 0
    %p169 = por %p167, %p168
    %p170 = scmp.ne.s32.totalorder %s156, %s157
    %p171 = scmp.eq.s32.totalorder %s16, 1
    %p172 = por %p170, %p171
    %p174 = scmp.ne.s32.totalorder %s157, %s173
    %p175 = scmp.eq.s32.totalorder %s16, 0
    %p176 = por %p174, %p175
    %p177 = scmp.le.s32.totalorder 1, %s10
    %p178 = scmp.lt.s32.totalorder %s10, 3
    %p179 = pnand %p177, %p178
    %p180 = pneg %p179
    // Predicated region
    $region9: #{encoder.10} parent=5 // pred_check
      _
    $region10: #{encoder.10} parent=5 // pred_check_branch
      %182 = sbr.rel (%p179) target = $region12
    $region11: #{encoder.10} parent=5 // pred_region
      %s183 = ssub.s32 %s10, 1
    $region12: #{encoder.10} parent=5 // pred_fallthru
      _
    %p184 = scmp.lt.s32.totalorder %s10, 2
    // Predicated region
    $region13: #{encoder.10} parent=5 // pred_check
      %p185 = pneg %p184
    $region14: #{encoder.10} parent=5 // pred_check_branch
      %187 = sbr.rel (%p185) target = $region16
    $region15: #{encoder.10} parent=5 // pred_region
      // Predicated region
      $region17: #{encoder.10} parent=15 // pred_check
        %p188 = pneg %p51
      $region18: #{encoder.10} parent=15 // pred_check_branch
        %190 = sbr.rel (%p188) target = $region20
      $region19: #{encoder.10} parent=15 // pred_region
        %p191 = scmp.lt.s32.totalorder %s17, 1
        %s192 = scalar_select %p191, %s17, 1
        %p193 = scmp.lt.s32.totalorder %s19, 0
        %s194 = scalar_select %p193, %s19, 0
        %s195 = sadd.s32 %s194, %s192
        %s196 = scalar_lea.vmem %s0, %s195
      $region20: #{encoder.10} parent=15 // pred_fallthru
        _
      // Predicated region
      $region21: #{encoder.10} parent=15 // pred_check
        %p197 = pneg %p79
      $region22: #{encoder.10} parent=15 // pred_check_branch
        %199 = sbr.rel (%p197) target = $region24
      $region23: #{encoder.10} parent=15 // pred_region
        %p200 = scmp.lt.s32.totalorder %s17, 1
        %s201 = scalar_select %p200, %s17, 1
        %p202 = scmp.lt.s32.totalorder %s18, 0
        %s203 = scalar_select %p202, %s18, 0
        %s204 = sadd.s32 %s203, %s201
        %s205 = smul.addr %s204, 8
        %s206 = scalar_lea.vmem %s1, %s205
      $region24: #{encoder.10} parent=15 // pred_fallthru
        _
      // Predicated region
      $region25: #{encoder.10} parent=15 // pred_check
        %p207 = pneg %p107
      $region26: #{encoder.10} parent=15 // pred_check_branch
        %209 = sbr.rel (%p207) target = $region28
      $region27: #{encoder.10} parent=15 // pred_region
        %p210 = scmp.lt.s32.totalorder %s17, 1
        %s211 = scalar_select %p210, %s17, 1
        %p212 = scmp.lt.s32.totalorder %s19, 0
        %s213 = scalar_select %p212, %s19, 0
        %s214 = sadd.s32 %s213, %s211
        %s215 = smul.addr %s214, 8
        %s216 = scalar_lea.vmem %s2, %s215
      $region28: #{encoder.10} parent=15 // pred_fallthru
        _
      // Predicated region
      $region29: #{encoder.10} parent=15 // pred_check
        %p217 = pneg %p135
      $region30: #{encoder.10} parent=15 // pred_check_branch
        %219 = sbr.rel (%p217) target = $region32
      $region31: #{encoder.10} parent=15 // pred_region
        %p220 = scmp.lt.s32.totalorder %s17, 1
        %s221 = scalar_select %p220, %s17, 1
        %p222 = scmp.lt.s32.totalorder %s19, 0
        %s223 = scalar_select %p222, %s19, 0
        %s224 = sadd.s32 %s223, %s221
        %s225 = smul.addr %s224, 8
        %s226 = scalar_lea.vmem %s3, %s225
      $region32: #{encoder.10} parent=15 // pred_fallthru
        _
    $region16: #{encoder.10} parent=5 // pred_fallthru
      _
    %p227 = scmp.le.s32.totalorder 1, %s10
    %p228 = scmp.lt.s32.totalorder %s10, 3
    %p229 = pnand %p227, %p228
    %p230 = pneg %p229
    // Predicated region
    $region33: #{encoder.10} parent=5 // pred_check
      _
    $region34: #{encoder.10} parent=5 // pred_check_branch
      %232 = sbr.rel (%p229) target = $region36
    $region35: #{encoder.10} parent=5 // pred_region
      %s233 = ssub.s32 %s10, 1
      %p234 = scmp.lt.s32.totalorder %s20, 1
      %s235 = scalar_select %p234, %s20, 1
      %p236 = scmp.lt.s32.totalorder %s22, 0
      %s237 = scalar_select %p236, %s22, 0
      %s238 = sadd.s32 %s237, %s235
      %s239 = scalar_lea.vmem %s0, %s238
      %p240 = pneg %p57
      %p241 = pneg %p54
      %p242 = scmp.lt.s32.totalorder %s20, 1
      %s243 = scalar_select %p242, %s20, 1
      %p244 = scmp.lt.s32.totalorder %s21, 0
      %s245 = scalar_select %p244, %s21, 0
      %s246 = sadd.s32 %s245, %s243
      %s247 = smul.addr %s246, 8
      %s248 = scalar_lea.vmem %s1, %s247
      %p249 = pneg %p85
      %p250 = pneg %p82
      %p251 = scmp.lt.s32.totalorder %s20, 1
      %s252 = scalar_select %p251, %s20, 1
      %p253 = scmp.lt.s32.totalorder %s22, 0
      %s254 = scalar_select %p253, %s22, 0
      %s255 = sadd.s32 %s254, %s252
      %s256 = smul.addr %s255, 8
      %s257 = scalar_lea.vmem %s2, %s256
      %p258 = pneg %p113
      %p259 = pneg %p110
      %p260 = scmp.lt.s32.totalorder %s20, 1
      %s261 = scalar_select %p260, %s20, 1
      %p262 = scmp.lt.s32.totalorder %s22, 0
      %s263 = scalar_select %p262, %s22, 0
      %s264 = sadd.s32 %s263, %s261
      %s265 = smul.addr %s264, 8
      %s266 = scalar_lea.vmem %s3, %s265
      %p267 = pneg %p141
      %p268 = pneg %p138
      %p269 = pneg %p169
      %p270 = pneg %p166
      %p271 = scmp.lt.s32.totalorder %s20, 1
      %s272 = scalar_select %p271, %s20, 1
      %p273 = scmp.lt.s32.totalorder %s21, 0
      %s274 = scalar_select %p273, %s21, 0
      %s275 = sadd.s32 %s274, %s272
      %s276 = smul.addr %s275, 8
      %s277 = scalar_lea.vmem %s4, %s276
      %p278 = scmp.lt.s32.totalorder %s20, 1
      %s279 = scalar_select %p278, %s20, 1
      %p280 = scmp.lt.s32.totalorder %s22, 0
      %s281 = scalar_select %p280, %s22, 0
      %s282 = sadd.s32 %s281, %s279
      %s283 = scalar_lea.vmem %s0, %s282
      %p284 = scmp.lt.s32.totalorder %s20, 1
      %s285 = scalar_select %p284, %s20, 1
      %p286 = scmp.lt.s32.totalorder %s21, 0
      %s287 = scalar_select %p286, %s21, 0
      %s288 = sadd.s32 %s287, %s285
      %s289 = smul.addr %s288, 8
      %s290 = scalar_lea.vmem %s1, %s289
      %p291 = scmp.lt.s32.totalorder %s20, 1
      %s292 = scalar_select %p291, %s20, 1
      %p293 = scmp.lt.s32.totalorder %s22, 0
      %s294 = scalar_select %p293, %s22, 0
      %s295 = sadd.s32 %s294, %s292
      %s296 = smul.addr %s295, 8
      %s297 = scalar_lea.vmem %s2, %s296
      %p298 = scmp.lt.s32.totalorder %s20, 1
      %s299 = scalar_select %p298, %s20, 1
      %p300 = scmp.lt.s32.totalorder %s22, 0
      %s301 = scalar_select %p300, %s22, 0
      %s302 = sadd.s32 %s301, %s299
      %s303 = smul.addr %s302, 8
      %s304 = scalar_lea.vmem %s3, %s303
      %p305 = scmp.lt.s32.totalorder %s20, 1
      %s306 = scalar_select %p305, %s20, 1
      %p307 = scmp.lt.s32.totalorder %s21, 0
      %s308 = scalar_select %p307, %s21, 0
      %s309 = sadd.s32 %s308, %s306
      %s310 = smul.addr %s309, 8
      %s311 = scalar_lea.vmem %s4, %s310
      %p312 = scmp.eq.s32.totalorder %s22, 0
      // Predicated region
      $region37: #{encoder.10} parent=35 // pred_check
        %p313 = pneg %p312
      $region38: #{encoder.10} parent=35 // pred_check_branch
        %315 = sbr.rel (%p313) target = $region40
      $region39: #{encoder.10} parent=35 // pred_region
        %vm316 = vcmask 7168
        %317 = vst.msk [vmem:[#allocation2] sm:$0xff] %vm316, -inf
        %318 = vst.msk [vmem:[#allocation2 + $0x8] sm:$0xff] %vm316, -inf
        %319 = vst.msk [vmem:[#allocation2 + $0x10] sm:$0xff] %vm316, -inf
        %320 = vst.msk [vmem:[#allocation2 + $0x18] sm:$0xff] %vm316, -inf
        %321 = vst.msk [vmem:[#allocation3] sm:$0xff] %vm316, 0.0
        %322 = vst.msk [vmem:[#allocation3 + $0x8] sm:$0xff] %vm316, 0.0
        %323 = vst.msk [vmem:[#allocation3 + $0x10] sm:$0xff] %vm316, 0.0
        %324 = vst.msk [vmem:[#allocation3 + $0x18] sm:$0xff] %vm316, 0.0
        %vm325 = vcmask 64512
        %326 = vst.msk [vmem:[#allocation4] sm:$0xff] %vm325, 0.0
        %327 = vst.msk [vmem:[#allocation4 + $0x8] sm:$0xff] %vm325, 0.0
        %328 = vst.msk [vmem:[#allocation4 + $0x10] sm:$0xff] %vm325, 0.0
        %329 = vst.msk [vmem:[#allocation4 + $0x18] sm:$0xff] %vm325, 0.0
      $region40: #{encoder.10} parent=35 // pred_fallthru
        _
      %v330 = vld [vmem:[%s283] sm:$0x1]
      %v331 = vld [vmem:[%s290] sm:$0xff]
      %v332 = vld [vmem:[%s297] sm:$0xff]
      %v333 = vld [vmem:[%s304] sm:$0xff]
      %vm334 = vcmask 64512
      %v336 = vsel %vm334, %v331, 0
      %v339 = vsel %vm334, %v332, 0
      %341 = vmatprep.subr.mxu0 0.0
      %342 = vmatpush1.xpose.msra.mxu0 0.0
      %343 = vmatprep.subr.mxu0 0.0
      %344 = vmatpush1.xpose.msra.mxu0 0.0
      %345 = vmatprep.subr.mxu0 0.0
      %346 = vmatpush1.xpose.msra.mxu0 0.0
      %347 = vmatprep.subr.mxu0 0.0
      %348 = vmatpush1.xpose.msra.mxu0 0.0
      %349 = vmatprep.subr.mxu0 0.0
      %350 = vmatpush1.xpose.msra.mxu0 0.0
      %351 = vmatprep.subr.mxu0 0.0
      %352 = vmatpush1.xpose.msra.mxu0 0.0
      %353 = vmatprep.subr.mxu0 0.0
      %354 = vmatpush1.xpose.msra.mxu0 0.0
      %355 = vmatprep.subr.mxu0 0.0
      %356 = vmatpush1.xpose.msra.mxu0 0.0
      %357 = vmatprep.subr.mxu0 0.0
      %358 = vmatpush1.xpose.msra.mxu0 0.0
      %359 = vmatprep.subr.mxu0 0.0
      %360 = vmatpush1.xpose.msra.mxu0 0.0
      %361 = vmatprep.subr.mxu0 0.0
      %362 = vmatpush1.xpose.msra.mxu0 0.0
      %363 = vmatprep.subr.mxu0 0.0
      %364 = vmatpush1.xpose.msra.mxu0 0.0
      %365 = vmatprep.subr.mxu0 0.0
      %366 = vmatpush1.xpose.msra.mxu0 0.0
      %367 = vmatprep.subr.mxu0 0.0
      %368 = vmatpush1.xpose.msra.mxu0 0.0
      %369 = vmatprep.subr.mxu0 0.0
      %370 = vmatpush1.xpose.msra.mxu0 0.0
      %371 = vmatprep.subr.mxu0 0.0
      %372 = vmatpush1.xpose.msra.mxu0 %v339
      %373 = vmatprep.subr.mxu0 0.0
      %374 = vmatpush2.xpose.msra.mxu0 0.0
      %375 = vmatprep.subr.mxu0 0.0
      %376 = vmatpush2.xpose.msra.mxu0 0.0
      %377 = vmatprep.subr.mxu0 0.0
      %378 = vmatpush2.xpose.msra.mxu0 0.0
      %379 = vmatprep.subr.mxu0 0.0
      %380 = vmatpush2.xpose.msra.mxu0 0.0
      %381 = vmatprep.subr.mxu0 0.0
      %382 = vmatpush2.xpose.msra.mxu0 0.0
      %383 = vmatprep.subr.mxu0 0.0
      %384 = vmatpush2.xpose.msra.mxu0 0.0
      %385 = vmatprep.subr.mxu0 0.0
      %386 = vmatpush2.xpose.msra.mxu0 0.0
      %387 = vmatprep.subr.mxu0 0.0
      %388 = vmatpush2.xpose.msra.mxu0 0.0
      %389 = vmatprep.subr.mxu0 0.0
      %390 = vmatpush2.xpose.msra.mxu0 0.0
      %391 = vmatprep.subr.mxu0 0.0
      %392 = vmatpush2.xpose.msra.mxu0 0.0
      %393 = vmatprep.subr.mxu0 0.0
      %394 = vmatpush2.xpose.msra.mxu0 0.0
      %395 = vmatprep.subr.mxu0 0.0
      %396 = vmatpush2.xpose.msra.mxu0 0.0
      %397 = vmatprep.subr.mxu0 0.0
      %398 = vmatpush2.xpose.msra.mxu0 0.0
      %399 = vmatprep.subr.mxu0 0.0
      %400 = vmatpush2.xpose.msra.mxu0 0.0
      %401 = vmatprep.subr.mxu0 0.0
      %402 = vmatpush2.xpose.msra.mxu0 0.0
      %403 = vmatprep.subr.mxu0 0.0
      %404 = vmatpush2.xpose.msra.mxu0 0.0
      %405 = vmatprep.mubr.f32.mxu0 0.0
      %406 = vmatmul.mubr.f32.gmra.mxu0 %v336
      %v407 = vpop.f32.mrf.mxu0
      %v408 = vadd.f32 0.0, %v407
      %v409 = vpop.f32.mrf.mxu0
      %410 = vdwg.mxu0
      %v411 = vmul.f32 %v408, 0.35355338
      %v413 = vlaneseq
      %v414 = vshrl.u32 %v413, 7
      %v415 = vsub.s32 0, %v414
      %v416 = vrot.slane %v330, %v415
      %v418 = vadd.f32 %v411, %v416
      %v419 = vld [vmem:[#allocation2] sm:$0xff]
      %v420 = vsel %vm334, %v418, -inf
      %421 = vmax.xlane.f32.xlu0 %v420
      %v422 = vpop.xlane.xlu0 %421
      %v423 = vmax.f32 %v419, %v422
      %v424 = vsub.f32 %v419, %v423
      %v425 = vmul.f32 %v424, 1.442695
      %v426 = vpow.pop %v425
      %428 = vset.pattern.permute.xlu0 0
      %429 = vperm.xlu0 %428, %v423
      %v430 = vpop.permute.xlu0 %429
      %v432 = vsub.f32 %v418, %v430
      %v433 = vmul.f32 %v432, 1.442695
      %v434 = vpow.pop %v433
      %v435 = vld [vmem:[#allocation3] sm:$0xff]
      %v436 = vmul.f32 %v426, %v435
      %v437 = vsel %vm334, %v434, 0.0
      %438 = vadd.xlane.f32.xlu0 %v437
      %v439 = vpop.xlane.xlu0 %438
      %v440 = vadd.f32 %v436, %v439
      %vm441 = vcmask 7168
      %442 = vst.msk [vmem:[#allocation3] sm:$0xff] %vm441, %v440
      %v443 = vld [vmem:[#allocation4] sm:$0xff]
      %445 = vset.pattern.permute.xlu0 0
      %446 = vperm.xlu0 %445, %v426
      %v447 = vpop.permute.xlu0 %446
      %v449 = vmul.f32 %v447, %v443
      %v451 = vsel %vm334, %v434, 0
      %453 = vmatprep.subr.mxu0 0.0
      %454 = vmatpush1.msra.mxu0 0.0
      %455 = vmatprep.subr.mxu0 0.0
      %456 = vmatpush1.msra.mxu0 0.0
      %457 = vmatprep.subr.mxu0 0.0
      %458 = vmatpush1.msra.mxu0 0.0
      %459 = vmatprep.subr.mxu0 0.0
      %460 = vmatpush1.msra.mxu0 0.0
      %461 = vmatprep.subr.mxu0 0.0
      %462 = vmatpush1.msra.mxu0 0.0
      %463 = vmatprep.subr.mxu0 0.0
      %464 = vmatpush1.msra.mxu0 0.0
      %465 = vmatprep.subr.mxu0 0.0
      %466 = vmatpush1.msra.mxu0 0.0
      %467 = vmatprep.subr.mxu0 0.0
      %468 = vmatpush1.msra.mxu0 0.0
      %469 = vmatprep.subr.mxu0 0.0
      %470 = vmatpush1.msra.mxu0 0.0
      %471 = vmatprep.subr.mxu0 0.0
      %472 = vmatpush1.msra.mxu0 0.0
      %473 = vmatprep.subr.mxu0 0.0
      %474 = vmatpush1.msra.mxu0 0.0
      %475 = vmatprep.subr.mxu0 0.0
      %476 = vmatpush1.msra.mxu0 0.0
      %477 = vmatprep.subr.mxu0 0.0
      %478 = vmatpush1.msra.mxu0 0.0
      %479 = vmatprep.subr.mxu0 0.0
      %480 = vmatpush1.msra.mxu0 0.0
      %481 = vmatprep.subr.mxu0 0.0
      %482 = vmatpush1.msra.mxu0 0.0
      %483 = vmatprep.subr.mxu0 0.0
      %484 = vmatpush1.msra.mxu0 %v333
      %485 = vmatprep.subr.mxu0 0.0
      %486 = vmatpush2.msra.mxu0 0.0
      %487 = vmatprep.subr.mxu0 0.0
      %488 = vmatpush2.msra.mxu0 0.0
      %489 = vmatprep.subr.mxu0 0.0
      %490 = vmatpush2.msra.mxu0 0.0
      %491 = vmatprep.subr.mxu0 0.0
      %492 = vmatpush2.msra.mxu0 0.0
      %493 = vmatprep.subr.mxu0 0.0
      %494 = vmatpush2.msra.mxu0 0.0
      %495 = vmatprep.subr.mxu0 0.0
      %496 = vmatpush2.msra.mxu0 0.0
      %497 = vmatprep.subr.mxu0 0.0
      %498 = vmatpush2.msra.mxu0 0.0
      %499 = vmatprep.subr.mxu0 0.0
      %500 = vmatpush2.msra.mxu0 0.0
      %501 = vmatprep.subr.mxu0 0.0
      %502 = vmatpush2.msra.mxu0 0.0
      %503 = vmatprep.subr.mxu0 0.0
      %504 = vmatpush2.msra.mxu0 0.0
      %505 = vmatprep.subr.mxu0 0.0
      %506 = vmatpush2.msra.mxu0 0.0
      %507 = vmatprep.subr.mxu0 0.0
      %508 = vmatpush2.msra.mxu0 0.0
      %509 = vmatprep.subr.mxu0 0.0
      %510 = vmatpush2.msra.mxu0 0.0
      %511 = vmatprep.subr.mxu0 0.0
      %512 = vmatpush2.msra.mxu0 0.0
      %513 = vmatprep.subr.mxu0 0.0
      %514 = vmatpush2.msra.mxu0 0.0
      %515 = vmatprep.subr.mxu0 0.0
      %516 = vmatpush2.msra.mxu0 0.0
      %517 = vmatprep.mubr.f32.mxu0 0.0
      %518 = vmatmul.mubr.f32.gmra.mxu0 %v451
      %v519 = vpop.f32.mrf.mxu0
      %v520 = vadd.f32 0.0, %v519
      %v521 = vpop.f32.mrf.mxu0
      %522 = vdwg.mxu0
      %v523 = vadd.f32 %v449, %v520
      %524 = vst.msk [vmem:[#allocation4] sm:$0xff] %vm334, %v523
      %525 = vst.msk [vmem:[#allocation2] sm:$0xff] %vm441, %v423
      %526 = vrot.lane.b32.xlu0 %v331, 120
      %v527 = vpop.permute.xlu0 %526
      %528 = vrot.lane.b32.xlu0 %v332, 120
      %v529 = vpop.permute.xlu0 %528
      %v530 = vsel %vm334, %v527, 0
      %v532 = vsel %vm334, %v529, 0
      %534 = vmatprep.subr.mxu0 0.0
      %535 = vmatpush1.xpose.msra.mxu0 0.0
      %536 = vmatprep.subr.mxu0 0.0
      %537 = vmatpush1.xpose.msra.mxu0 0.0
      %538 = vmatprep.subr.mxu0 0.0
      %539 = vmatpush1.xpose.msra.mxu0 0.0
      %540 = vmatprep.subr.mxu0 0.0
      %541 = vmatpush1.xpose.msra.mxu0 0.0
      %542 = vmatprep.subr.mxu0 0.0
      %543 = vmatpush1.xpose.msra.mxu0 0.0
      %544 = vmatprep.subr.mxu0 0.0
      %545 = vmatpush1.xpose.msra.mxu0 0.0
      %546 = vmatprep.subr.mxu0 0.0
      %547 = vmatpush1.xpose.msra.mxu0 0.0
      %548 = vmatprep.subr.mxu0 0.0
      %549 = vmatpush1.xpose.msra.mxu0 0.0
      %550 = vmatprep.subr.mxu0 0.0
      %551 = vmatpush1.xpose.msra.mxu0 0.0
      %552 = vmatprep.subr.mxu0 0.0
      %553 = vmatpush1.xpose.msra.mxu0 0.0
      %554 = vmatprep.subr.mxu0 0.0
      %555 = vmatpush1.xpose.msra.mxu0 0.0
      %556 = vmatprep.subr.mxu0 0.0
      %557 = vmatpush1.xpose.msra.mxu0 0.0
      %558 = vmatprep.subr.mxu0 0.0
      %559 = vmatpush1.xpose.msra.mxu0 0.0
      %560 = vmatprep.subr.mxu0 0.0
      %561 = vmatpush1.xpose.msra.mxu0 0.0
      %562 = vmatprep.subr.mxu0 0.0
      %563 = vmatpush1.xpose.msra.mxu0 0.0
      %564 = vmatprep.subr.mxu0 0.0
      %565 = vmatpush1.xpose.msra.mxu0 %v532
      %566 = vmatprep.subr.mxu0 0.0
      %567 = vmatpush2.xpose.msra.mxu0 0.0
      %568 = vmatprep.subr.mxu0 0.0
      %569 = vmatpush2.xpose.msra.mxu0 0.0
      %570 = vmatprep.subr.mxu0 0.0
      %571 = vmatpush2.xpose.msra.mxu0 0.0
      %572 = vmatprep.subr.mxu0 0.0
      %573 = vmatpush2.xpose.msra.mxu0 0.0
      %574 = vmatprep.subr.mxu0 0.0
      %575 = vmatpush2.xpose.msra.mxu0 0.0
      %576 = vmatprep.subr.mxu0 0.0
      %577 = vmatpush2.xpose.msra.mxu0 0.0
      %578 = vmatprep.subr.mxu0 0.0
      %579 = vmatpush2.xpose.msra.mxu0 0.0
      %580 = vmatprep.subr.mxu0 0.0
      %581 = vmatpush2.xpose.msra.mxu0 0.0
      %582 = vmatprep.subr.mxu0 0.0
      %583 = vmatpush2.xpose.msra.mxu0 0.0
      %584 = vmatprep.subr.mxu0 0.0
      %585 = vmatpush2.xpose.msra.mxu0 0.0
      %586 = vmatprep.subr.mxu0 0.0
      %587 = vmatpush2.xpose.msra.mxu0 0.0
      %588 = vmatprep.subr.mxu0 0.0
      %589 = vmatpush2.xpose.msra.mxu0 0.0
      %590 = vmatprep.subr.mxu0 0.0
      %591 = vmatpush2.xpose.msra.mxu0 0.0
      %592 = vmatprep.subr.mxu0 0.0
      %593 = vmatpush2.xpose.msra.mxu0 0.0
      %594 = vmatprep.subr.mxu0 0.0
      %595 = vmatpush2.xpose.msra.mxu0 0.0
      %596 = vmatprep.subr.mxu0 0.0
      %597 = vmatpush2.xpose.msra.mxu0 0.0
      %598 = vmatprep.mubr.f32.mxu0 0.0
      %599 = vmatmul.mubr.f32.gmra.mxu0 %v530
      %v600 = vpop.f32.mrf.mxu0
      %v601 = vadd.f32 0.0, %v600
      %v602 = vpop.f32.mrf.mxu0
      %603 = vdwg.mxu0
      %v604 = vmul.f32 %v601, 0.35355338
      %v605 = vadd.f32 %v604, %v416
      %s606 = scalar_lea.vmem [#allocation2], 8
      %v607 = vld [vmem:[%s606] sm:$0xff]
      %v608 = vsel %vm334, %v605, -inf
      %609 = vmax.xlane.f32.xlu0 %v608
      %v610 = vpop.xlane.xlu0 %609
      %v611 = vmax.f32 %v607, %v610
      %v612 = vsub.f32 %v607, %v611
      %v613 = vmul.f32 %v612, 1.442695
      %v614 = vpow.pop %v613
      %616 = vset.pattern.permute.xlu0 0
      %617 = vperm.xlu0 %616, %v611
      %v618 = vpop.permute.xlu0 %617
      %v620 = vsub.f32 %v605, %v618
      %v621 = vmul.f32 %v620, 1.442695
      %v622 = vpow.pop %v621
      %s623 = scalar_lea.vmem [#allocation3], 8
      %v624 = vld [vmem:[%s623] sm:$0xff]
      %v625 = vmul.f32 %v614, %v624
      %v626 = vsel %vm334, %v622, 0.0
      %627 = vadd.xlane.f32.xlu0 %v626
      %v628 = vpop.xlane.xlu0 %627
      %v629 = vadd.f32 %v625, %v628
      %630 = vst.msk [vmem:[%s623] sm:$0xff] %vm441, %v629
      %s631 = scalar_lea.vmem [#allocation4], 8
      %v632 = vld [vmem:[%s631] sm:$0xff]
      %634 = vset.pattern.permute.xlu0 0
      %635 = vperm.xlu0 %634, %v614
      %v636 = vpop.permute.xlu0 %635
      %v638 = vmul.f32 %v636, %v632
      %640 = vrot.lane.b32.xlu0 %v333, 120
      %v641 = vpop.permute.xlu0 %640
      %v644 = vsel %vm334, %v622, 0
      %646 = vmatprep.subr.mxu0 0.0
      %647 = vmatpush1.msra.mxu0 0.0
      %648 = vmatprep.subr.mxu0 0.0
      %649 = vmatpush1.msra.mxu0 0.0
      %650 = vmatprep.subr.mxu0 0.0
      %651 = vmatpush1.msra.mxu0 0.0
      %652 = vmatprep.subr.mxu0 0.0
      %653 = vmatpush1.msra.mxu0 0.0
      %654 = vmatprep.subr.mxu0 0.0
      %655 = vmatpush1.msra.mxu0 0.0
      %656 = vmatprep.subr.mxu0 0.0
      %657 = vmatpush1.msra.mxu0 0.0
      %658 = vmatprep.subr.mxu0 0.0
      %659 = vmatpush1.msra.mxu0 0.0
      %660 = vmatprep.subr.mxu0 0.0
      %661 = vmatpush1.msra.mxu0 0.0
      %662 = vmatprep.subr.mxu0 0.0
      %663 = vmatpush1.msra.mxu0 0.0
      %664 = vmatprep.subr.mxu0 0.0
      %665 = vmatpush1.msra.mxu0 0.0
      %666 = vmatprep.subr.mxu0 0.0
      %667 = vmatpush1.msra.mxu0 0.0
      %668 = vmatprep.subr.mxu0 0.0
      %669 = vmatpush1.msra.mxu0 0.0
      %670 = vmatprep.subr.mxu0 0.0
      %671 = vmatpush1.msra.mxu0 0.0
      %672 = vmatprep.subr.mxu0 0.0
      %673 = vmatpush1.msra.mxu0 0.0
      %674 = vmatprep.subr.mxu0 0.0
      %675 = vmatpush1.msra.mxu0 0.0
      %676 = vmatprep.subr.mxu0 0.0
      %677 = vmatpush1.msra.mxu0 %v641
      %678 = vmatprep.subr.mxu0 0.0
      %679 = vmatpush2.msra.mxu0 0.0
      %680 = vmatprep.subr.mxu0 0.0
      %681 = vmatpush2.msra.mxu0 0.0
      %682 = vmatprep.subr.mxu0 0.0
      %683 = vmatpush2.msra.mxu0 0.0
      %684 = vmatprep.subr.mxu0 0.0
      %685 = vmatpush2.msra.mxu0 0.0
      %686 = vmatprep.subr.mxu0 0.0
      %687 = vmatpush2.msra.mxu0 0.0
      %688 = vmatprep.subr.mxu0 0.0
      %689 = vmatpush2.msra.mxu0 0.0
      %690 = vmatprep.subr.mxu0 0.0
      %691 = vmatpush2.msra.mxu0 0.0
      %692 = vmatprep.subr.mxu0 0.0
      %693 = vmatpush2.msra.mxu0 0.0
      %694 = vmatprep.subr.mxu0 0.0
      %695 = vmatpush2.msra.mxu0 0.0
      %696 = vmatprep.subr.mxu0 0.0
      %697 = vmatpush2.msra.mxu0 0.0
      %698 = vmatprep.subr.mxu0 0.0
      %699 = vmatpush2.msra.mxu0 0.0
      %700 = vmatprep.subr.mxu0 0.0
      %701 = vmatpush2.msra.mxu0 0.0
      %702 = vmatprep.subr.mxu0 0.0
      %703 = vmatpush2.msra.mxu0 0.0
      %704 = vmatprep.subr.mxu0 0.0
      %705 = vmatpush2.msra.mxu0 0.0
      %706 = vmatprep.subr.mxu0 0.0
      %707 = vmatpush2.msra.mxu0 0.0
      %708 = vmatprep.subr.mxu0 0.0
      %709 = vmatpush2.msra.mxu0 0.0
      %710 = vmatprep.mubr.f32.mxu0 0.0
      %711 = vmatmul.mubr.f32.gmra.mxu0 %v644
      %v712 = vpop.f32.mrf.mxu0
      %v713 = vadd.f32 0.0, %v712
      %v714 = vpop.f32.mrf.mxu0
      %715 = vdwg.mxu0
      %v716 = vadd.f32 %v638, %v713
      %717 = vst.msk [vmem:[%s631] sm:$0xff] %vm334, %v716
      %718 = vst.msk [vmem:[%s606] sm:$0xff] %vm441, %v611
      %719 = vrot.lane.b32.xlu0 %v331, 112
      %v720 = vpop.permute.xlu0 %719
      %721 = vrot.lane.b32.xlu0 %v332, 112
      %v722 = vpop.permute.xlu0 %721
      %v723 = vsel %vm334, %v720, 0
      %v725 = vsel %vm334, %v722, 0
      %727 = vmatprep.subr.mxu0 0.0
      %728 = vmatpush1.xpose.msra.mxu0 0.0
      %729 = vmatprep.subr.mxu0 0.0
      %730 = vmatpush1.xpose.msra.mxu0 0.0
      %731 = vmatprep.subr.mxu0 0.0
      %732 = vmatpush1.xpose.msra.mxu0 0.0
      %733 = vmatprep.subr.mxu0 0.0
      %734 = vmatpush1.xpose.msra.mxu0 0.0
      %735 = vmatprep.subr.mxu0 0.0
      %736 = vmatpush1.xpose.msra.mxu0 0.0
      %737 = vmatprep.subr.mxu0 0.0
      %738 = vmatpush1.xpose.msra.mxu0 0.0
      %739 = vmatprep.subr.mxu0 0.0
      %740 = vmatpush1.xpose.msra.mxu0 0.0
      %741 = vmatprep.subr.mxu0 0.0
      %742 = vmatpush1.xpose.msra.mxu0 0.0
      %743 = vmatprep.subr.mxu0 0.0
      %744 = vmatpush1.xpose.msra.mxu0 0.0
      %745 = vmatprep.subr.mxu0 0.0
      %746 = vmatpush1.xpose.msra.mxu0 0.0
      %747 = vmatprep.subr.mxu0 0.0
      %748 = vmatpush1.xpose.msra.mxu0 0.0
      %749 = vmatprep.subr.mxu0 0.0
      %750 = vmatpush1.xpose.msra.mxu0 0.0
      %751 = vmatprep.subr.mxu0 0.0
      %752 = vmatpush1.xpose.msra.mxu0 0.0
      %753 = vmatprep.subr.mxu0 0.0
      %754 = vmatpush1.xpose.msra.mxu0 0.0
      %755 = vmatprep.subr.mxu0 0.0
      %756 = vmatpush1.xpose.msra.mxu0 0.0
      %757 = vmatprep.subr.mxu0 0.0
      %758 = vmatpush1.xpose.msra.mxu0 %v725
      %759 = vmatprep.subr.mxu0 0.0
      %760 = vmatpush2.xpose.msra.mxu0 0.0
      %761 = vmatprep.subr.mxu0 0.0
      %762 = vmatpush2.xpose.msra.mxu0 0.0
      %763 = vmatprep.subr.mxu0 0.0
      %764 = vmatpush2.xpose.msra.mxu0 0.0
      %765 = vmatprep.subr.mxu0 0.0
      %766 = vmatpush2.xpose.msra.mxu0 0.0
      %767 = vmatprep.subr.mxu0 0.0
      %768 = vmatpush2.xpose.msra.mxu0 0.0
      %769 = vmatprep.subr.mxu0 0.0
      %770 = vmatpush2.xpose.msra.mxu0 0.0
      %771 = vmatprep.subr.mxu0 0.0
      %772 = vmatpush2.xpose.msra.mxu0 0.0
      %773 = vmatprep.subr.mxu0 0.0
      %774 = vmatpush2.xpose.msra.mxu0 0.0
      %775 = vmatprep.subr.mxu0 0.0
      %776 = vmatpush2.xpose.msra.mxu0 0.0
      %777 = vmatprep.subr.mxu0 0.0
      %778 = vmatpush2.xpose.msra.mxu0 0.0
      %779 = vmatprep.subr.mxu0 0.0
      %780 = vmatpush2.xpose.msra.mxu0 0.0
      %781 = vmatprep.subr.mxu0 0.0
      %782 = vmatpush2.xpose.msra.mxu0 0.0
      %783 = vmatprep.subr.mxu0 0.0
      %784 = vmatpush2.xpose.msra.mxu0 0.0
      %785 = vmatprep.subr.mxu0 0.0
      %786 = vmatpush2.xpose.msra.mxu0 0.0
      %787 = vmatprep.subr.mxu0 0.0
      %788 = vmatpush2.xpose.msra.mxu0 0.0
      %789 = vmatprep.subr.mxu0 0.0
      %790 = vmatpush2.xpose.msra.mxu0 0.0
      %791 = vmatprep.mubr.f32.mxu0 0.0
      %792 = vmatmul.mubr.f32.gmra.mxu0 %v723
      %v793 = vpop.f32.mrf.mxu0
      %v794 = vadd.f32 0.0, %v793
      %v795 = vpop.f32.mrf.mxu0
      %796 = vdwg.mxu0
      %v797 = vmul.f32 %v794, 0.35355338
      %v798 = vadd.f32 %v797, %v416
      %s799 = scalar_lea.vmem [#allocation2], 16
      %v800 = vld [vmem:[%s799] sm:$0xff]
      %v801 = vsel %vm334, %v798, -inf
      %802 = vmax.xlane.f32.xlu0 %v801
      %v803 = vpop.xlane.xlu0 %802
      %v804 = vmax.f32 %v800, %v803
      %v805 = vsub.f32 %v800, %v804
      %v806 = vmul.f32 %v805, 1.442695
      %v807 = vpow.pop %v806
      %809 = vset.pattern.permute.xlu0 0
      %810 = vperm.xlu0 %809, %v804
      %v811 = vpop.permute.xlu0 %810
      %v813 = vsub.f32 %v798, %v811
      %v814 = vmul.f32 %v813, 1.442695
      %v815 = vpow.pop %v814
      %s816 = scalar_lea.vmem [#allocation3], 16
      %v817 = vld [vmem:[%s816] sm:$0xff]
      %v818 = vmul.f32 %v807, %v817
      %v819 = vsel %vm334, %v815, 0.0
      %820 = vadd.xlane.f32.xlu0 %v819
      %v821 = vpop.xlane.xlu0 %820
      %v822 = vadd.f32 %v818, %v821
      %823 = vst.msk [vmem:[%s816] sm:$0xff] %vm441, %v822
      %s824 = scalar_lea.vmem [#allocation4], 16
      %v825 = vld [vmem:[%s824] sm:$0xff]
      %827 = vset.pattern.permute.xlu0 0
      %828 = vperm.xlu0 %827, %v807
      %v829 = vpop.permute.xlu0 %828
      %v831 = vmul.f32 %v829, %v825
      %832 = vrot.lane.b32.xlu0 %v333, 112
      %v833 = vpop.permute.xlu0 %832
      %v836 = vsel %vm334, %v815, 0
      %838 = vmatprep.subr.mxu0 0.0
      %839 = vmatpush1.msra.mxu0 0.0
      %840 = vmatprep.subr.mxu0 0.0
      %841 = vmatpush1.msra.mxu0 0.0
      %842 = vmatprep.subr.mxu0 0.0
      %843 = vmatpush1.msra.mxu0 0.0
      %844 = vmatprep.subr.mxu0 0.0
      %845 = vmatpush1.msra.mxu0 0.0
      %846 = vmatprep.subr.mxu0 0.0
      %847 = vmatpush1.msra.mxu0 0.0
      %848 = vmatprep.subr.mxu0 0.0
      %849 = vmatpush1.msra.mxu0 0.0
      %850 = vmatprep.subr.mxu0 0.0
      %851 = vmatpush1.msra.mxu0 0.0
      %852 = vmatprep.subr.mxu0 0.0
      %853 = vmatpush1.msra.mxu0 0.0
      %854 = vmatprep.subr.mxu0 0.0
      %855 = vmatpush1.msra.mxu0 0.0
      %856 = vmatprep.subr.mxu0 0.0
      %857 = vmatpush1.msra.mxu0 0.0
      %858 = vmatprep.subr.mxu0 0.0
      %859 = vmatpush1.msra.mxu0 0.0
      %860 = vmatprep.subr.mxu0 0.0
      %861 = vmatpush1.msra.mxu0 0.0
      %862 = vmatprep.subr.mxu0 0.0
      %863 = vmatpush1.msra.mxu0 0.0
      %864 = vmatprep.subr.mxu0 0.0
      %865 = vmatpush1.msra.mxu0 0.0
      %866 = vmatprep.subr.mxu0 0.0
      %867 = vmatpush1.msra.mxu0 0.0
      %868 = vmatprep.subr.mxu0 0.0
      %869 = vmatpush1.msra.mxu0 %v833
      %870 = vmatprep.subr.mxu0 0.0
      %871 = vmatpush2.msra.mxu0 0.0
      %872 = vmatprep.subr.mxu0 0.0
      %873 = vmatpush2.msra.mxu0 0.0
      %874 = vmatprep.subr.mxu0 0.0
      %875 = vmatpush2.msra.mxu0 0.0
      %876 = vmatprep.subr.mxu0 0.0
      %877 = vmatpush2.msra.mxu0 0.0
      %878 = vmatprep.subr.mxu0 0.0
      %879 = vmatpush2.msra.mxu0 0.0
      %880 = vmatprep.subr.mxu0 0.0
      %881 = vmatpush2.msra.mxu0 0.0
      %882 = vmatprep.subr.mxu0 0.0
      %883 = vmatpush2.msra.mxu0 0.0
      %884 = vmatprep.subr.mxu0 0.0
      %885 = vmatpush2.msra.mxu0 0.0
      %886 = vmatprep.subr.mxu0 0.0
      %887 = vmatpush2.msra.mxu0 0.0
      %888 = vmatprep.subr.mxu0 0.0
      %889 = vmatpush2.msra.mxu0 0.0
      %890 = vmatprep.subr.mxu0 0.0
      %891 = vmatpush2.msra.mxu0 0.0
      %892 = vmatprep.subr.mxu0 0.0
      %893 = vmatpush2.msra.mxu0 0.0
      %894 = vmatprep.subr.mxu0 0.0
      %895 = vmatpush2.msra.mxu0 0.0
      %896 = vmatprep.subr.mxu0 0.0
      %897 = vmatpush2.msra.mxu0 0.0
      %898 = vmatprep.subr.mxu0 0.0
      %899 = vmatpush2.msra.mxu0 0.0
      %900 = vmatprep.subr.mxu0 0.0
      %901 = vmatpush2.msra.mxu0 0.0
      %902 = vmatprep.mubr.f32.mxu0 0.0
      %903 = vmatmul.mubr.f32.gmra.mxu0 %v836
      %v904 = vpop.f32.mrf.mxu0
      %v905 = vadd.f32 0.0, %v904
      %v906 = vpop.f32.mrf.mxu0
      %907 = vdwg.mxu0
      %v908 = vadd.f32 %v831, %v905
      %909 = vst.msk [vmem:[%s824] sm:$0xff] %vm334, %v908
      %910 = vst.msk [vmem:[%s799] sm:$0xff] %vm441, %v804
      %911 = vrot.lane.b32.xlu0 %v331, 104
      %v912 = vpop.permute.xlu0 %911
      %913 = vrot.lane.b32.xlu0 %v332, 104
      %v914 = vpop.permute.xlu0 %913
      %v915 = vsel %vm334, %v912, 0
      %v917 = vsel %vm334, %v914, 0
      %919 = vmatprep.subr.mxu0 0.0
      %920 = vmatpush1.xpose.msra.mxu0 0.0
      %921 = vmatprep.subr.mxu0 0.0
      %922 = vmatpush1.xpose.msra.mxu0 0.0
      %923 = vmatprep.subr.mxu0 0.0
      %924 = vmatpush1.xpose.msra.mxu0 0.0
      %925 = vmatprep.subr.mxu0 0.0
      %926 = vmatpush1.xpose.msra.mxu0 0.0
      %927 = vmatprep.subr.mxu0 0.0
      %928 = vmatpush1.xpose.msra.mxu0 0.0
      %929 = vmatprep.subr.mxu0 0.0
      %930 = vmatpush1.xpose.msra.mxu0 0.0
      %931 = vmatprep.subr.mxu0 0.0
      %932 = vmatpush1.xpose.msra.mxu0 0.0
      %933 = vmatprep.subr.mxu0 0.0
      %934 = vmatpush1.xpose.msra.mxu0 0.0
      %935 = vmatprep.subr.mxu0 0.0
      %936 = vmatpush1.xpose.msra.mxu0 0.0
      %937 = vmatprep.subr.mxu0 0.0
      %938 = vmatpush1.xpose.msra.mxu0 0.0
      %939 = vmatprep.subr.mxu0 0.0
      %940 = vmatpush1.xpose.msra.mxu0 0.0
      %941 = vmatprep.subr.mxu0 0.0
      %942 = vmatpush1.xpose.msra.mxu0 0.0
      %943 = vmatprep.subr.mxu0 0.0
      %944 = vmatpush1.xpose.msra.mxu0 0.0
      %945 = vmatprep.subr.mxu0 0.0
      %946 = vmatpush1.xpose.msra.mxu0 0.0
      %947 = vmatprep.subr.mxu0 0.0
      %948 = vmatpush1.xpose.msra.mxu0 0.0
      %949 = vmatprep.subr.mxu0 0.0
      %950 = vmatpush1.xpose.msra.mxu0 %v917
      %951 = vmatprep.subr.mxu0 0.0
      %952 = vmatpush2.xpose.msra.mxu0 0.0
      %953 = vmatprep.subr.mxu0 0.0
      %954 = vmatpush2.xpose.msra.mxu0 0.0
      %955 = vmatprep.subr.mxu0 0.0
      %956 = vmatpush2.xpose.msra.mxu0 0.0
      %957 = vmatprep.subr.mxu0 0.0
      %958 = vmatpush2.xpose.msra.mxu0 0.0
      %959 = vmatprep.subr.mxu0 0.0
      %960 = vmatpush2.xpose.msra.mxu0 0.0
      %961 = vmatprep.subr.mxu0 0.0
      %962 = vmatpush2.xpose.msra.mxu0 0.0
      %963 = vmatprep.subr.mxu0 0.0
      %964 = vmatpush2.xpose.msra.mxu0 0.0
      %965 = vmatprep.subr.mxu0 0.0
      %966 = vmatpush2.xpose.msra.mxu0 0.0
      %967 = vmatprep.subr.mxu0 0.0
      %968 = vmatpush2.xpose.msra.mxu0 0.0
      %969 = vmatprep.subr.mxu0 0.0
      %970 = vmatpush2.xpose.msra.mxu0 0.0
      %971 = vmatprep.subr.mxu0 0.0
      %972 = vmatpush2.xpose.msra.mxu0 0.0
      %973 = vmatprep.subr.mxu0 0.0
      %974 = vmatpush2.xpose.msra.mxu0 0.0
      %975 = vmatprep.subr.mxu0 0.0
      %976 = vmatpush2.xpose.msra.mxu0 0.0
      %977 = vmatprep.subr.mxu0 0.0
      %978 = vmatpush2.xpose.msra.mxu0 0.0
      %979 = vmatprep.subr.mxu0 0.0
      %980 = vmatpush2.xpose.msra.mxu0 0.0
      %981 = vmatprep.subr.mxu0 0.0
      %982 = vmatpush2.xpose.msra.mxu0 0.0
      %983 = vmatprep.mubr.f32.mxu0 0.0
      %984 = vmatmul.mubr.f32.gmra.mxu0 %v915
      %v985 = vpop.f32.mrf.mxu0
      %v986 = vadd.f32 0.0, %v985
      %v987 = vpop.f32.mrf.mxu0
      %988 = vdwg.mxu0
      %v989 = vmul.f32 %v986, 0.35355338
      %v990 = vadd.f32 %v989, %v416
      %s991 = scalar_lea.vmem [#allocation2], 24
      %v992 = vld [vmem:[%s991] sm:$0xff]
      %v993 = vsel %vm334, %v990, -inf
      %994 = vmax.xlane.f32.xlu0 %v993
      %v995 = vpop.xlane.xlu0 %994
      %v996 = vmax.f32 %v992, %v995
      %v997 = vsub.f32 %v992, %v996
      %v998 = vmul.f32 %v997, 1.442695
      %v999 = vpow.pop %v998
      %1001 = vset.pattern.permute.xlu0 0
      %1002 = vperm.xlu0 %1001, %v996
      %v1003 = vpop.permute.xlu0 %1002
      %v1005 = vsub.f32 %v990, %v1003
      %v1006 = vmul.f32 %v1005, 1.442695
      %v1007 = vpow.pop %v1006
      %s1008 = scalar_lea.vmem [#allocation3], 24
      %v1009 = vld [vmem:[%s1008] sm:$0xff]
      %v1010 = vmul.f32 %v999, %v1009
      %v1011 = vsel %vm334, %v1007, 0.0
      %1012 = vadd.xlane.f32.xlu0 %v1011
      %v1013 = vpop.xlane.xlu0 %1012
      %v1014 = vadd.f32 %v1010, %v1013
      %1015 = vst.msk [vmem:[%s1008] sm:$0xff] %vm441, %v1014
      %s1016 = scalar_lea.vmem [#allocation4], 24
      %v1017 = vld [vmem:[%s1016] sm:$0xff]
      %1019 = vset.pattern.permute.xlu0 0
      %1020 = vperm.xlu0 %1019, %v999
      %v1021 = vpop.permute.xlu0 %1020
      %v1023 = vmul.f32 %v1021, %v1017
      %1024 = vrot.lane.b32.xlu0 %v333, 104
      %v1025 = vpop.permute.xlu0 %1024
      %v1028 = vsel %vm334, %v1007, 0
      %1030 = vmatprep.subr.mxu0 0.0
      %1031 = vmatpush1.msra.mxu0 0.0
      %1032 = vmatprep.subr.mxu0 0.0
      %1033 = vmatpush1.msra.mxu0 0.0
      %1034 = vmatprep.subr.mxu0 0.0
      %1035 = vmatpush1.msra.mxu0 0.0
      %1036 = vmatprep.subr.mxu0 0.0
      %1037 = vmatpush1.msra.mxu0 0.0
      %1038 = vmatprep.subr.mxu0 0.0
      %1039 = vmatpush1.msra.mxu0 0.0
      %1040 = vmatprep.subr.mxu0 0.0
      %1041 = vmatpush1.msra.mxu0 0.0
      %1042 = vmatprep.subr.mxu0 0.0
      %1043 = vmatpush1.msra.mxu0 0.0
      %1044 = vmatprep.subr.mxu0 0.0
      %1045 = vmatpush1.msra.mxu0 0.0
      %1046 = vmatprep.subr.mxu0 0.0
      %1047 = vmatpush1.msra.mxu0 0.0
      %1048 = vmatprep.subr.mxu0 0.0
      %1049 = vmatpush1.msra.mxu0 0.0
      %1050 = vmatprep.subr.mxu0 0.0
      %1051 = vmatpush1.msra.mxu0 0.0
      %1052 = vmatprep.subr.mxu0 0.0
      %1053 = vmatpush1.msra.mxu0 0.0
      %1054 = vmatprep.subr.mxu0 0.0
      %1055 = vmatpush1.msra.mxu0 0.0
      %1056 = vmatprep.subr.mxu0 0.0
      %1057 = vmatpush1.msra.mxu0 0.0
      %1058 = vmatprep.subr.mxu0 0.0
      %1059 = vmatpush1.msra.mxu0 0.0
      %1060 = vmatprep.subr.mxu0 0.0
      %1061 = vmatpush1.msra.mxu0 %v1025
      %1062 = vmatprep.subr.mxu0 0.0
      %1063 = vmatpush2.msra.mxu0 0.0
      %1064 = vmatprep.subr.mxu0 0.0
      %1065 = vmatpush2.msra.mxu0 0.0
      %1066 = vmatprep.subr.mxu0 0.0
      %1067 = vmatpush2.msra.mxu0 0.0
      %1068 = vmatprep.subr.mxu0 0.0
      %1069 = vmatpush2.msra.mxu0 0.0
      %1070 = vmatprep.subr.mxu0 0.0
      %1071 = vmatpush2.msra.mxu0 0.0
      %1072 = vmatprep.subr.mxu0 0.0
      %1073 = vmatpush2.msra.mxu0 0.0
      %1074 = vmatprep.subr.mxu0 0.0
      %1075 = vmatpush2.msra.mxu0 0.0
      %1076 = vmatprep.subr.mxu0 0.0
      %1077 = vmatpush2.msra.mxu0 0.0
      %1078 = vmatprep.subr.mxu0 0.0
      %1079 = vmatpush2.msra.mxu0 0.0
      %1080 = vmatprep.subr.mxu0 0.0
      %1081 = vmatpush2.msra.mxu0 0.0
      %1082 = vmatprep.subr.mxu0 0.0
      %1083 = vmatpush2.msra.mxu0 0.0
      %1084 = vmatprep.subr.mxu0 0.0
      %1085 = vmatpush2.msra.mxu0 0.0
      %1086 = vmatprep.subr.mxu0 0.0
      %1087 = vmatpush2.msra.mxu0 0.0
      %1088 = vmatprep.subr.mxu0 0.0
      %1089 = vmatpush2.msra.mxu0 0.0
      %1090 = vmatprep.subr.mxu0 0.0
      %1091 = vmatpush2.msra.mxu0 0.0
      %1092 = vmatprep.subr.mxu0 0.0
      %1093 = vmatpush2.msra.mxu0 0.0
      %1094 = vmatprep.mubr.f32.mxu0 0.0
      %1095 = vmatmul.mubr.f32.gmra.mxu0 %v1028
      %v1096 = vpop.f32.mrf.mxu0
      %v1097 = vadd.f32 0.0, %v1096
      %v1098 = vpop.f32.mrf.mxu0
      %1099 = vdwg.mxu0
      %v1100 = vadd.f32 %v1023, %v1097
      %1101 = vst.msk [vmem:[%s1016] sm:$0xff] %vm334, %v1100
      %1102 = vst.msk [vmem:[%s991] sm:$0xff] %vm441, %v996
      // Predicated region
      $region41: #{encoder.10} parent=35 // pred_check
        %p1103 = pneg %p312
      $region42: #{encoder.10} parent=35 // pred_check_branch
        %1105 = sbr.rel (%p1103) target = $region44
      $region43: #{encoder.10} parent=35 // pred_region
        %v1106 = vld [vmem:[#allocation4] sm:$0xff]
        %v1107 = vld [vmem:[#allocation3] sm:$0xff]
        %v1108 = vrcp.pop %v1107
        %1110 = vset.pattern.permute.xlu0 0
        %1111 = vperm.xlu0 %1110, %v1108
        %v1112 = vpop.permute.xlu0 %1111
        %v1114 = vmul.f32 %v1106, %v1112
        %v1115 = vld [vmem:[%s631] sm:$0xff]
        %v1116 = vld [vmem:[%s623] sm:$0xff]
        %v1117 = vrcp.pop %v1116
        %1119 = vset.pattern.permute.xlu0 0
        %1120 = vperm.xlu0 %1119, %v1117
        %v1121 = vpop.permute.xlu0 %1120
        %v1123 = vmul.f32 %v1115, %v1121
        %v1124 = vld [vmem:[%s824] sm:$0xff]
        %v1125 = vld [vmem:[%s816] sm:$0xff]
        %v1126 = vrcp.pop %v1125
        %1128 = vset.pattern.permute.xlu0 0
        %1129 = vperm.xlu0 %1128, %v1126
        %v1130 = vpop.permute.xlu0 %1129
        %v1132 = vmul.f32 %v1124, %v1130
        %v1133 = vld [vmem:[%s1016] sm:$0xff]
        %v1134 = vld [vmem:[%s1008] sm:$0xff]
        %v1135 = vrcp.pop %v1134
        %1137 = vset.pattern.permute.xlu0 0
        %1138 = vperm.xlu0 %1137, %v1135
        %v1139 = vpop.permute.xlu0 %1138
        %v1141 = vmul.f32 %v1133, %v1139
        %1143 = vrot.lane.b32.xlu0 %v1123, 8
        %v1144 = vpop.permute.xlu0 %1143
        %1147 = vrot.lane.b32.xlu0 %v1132, 16
        %v1148 = vpop.permute.xlu0 %1147
        %1151 = vrot.lane.b32.xlu0 %v1141, 24
        %v1152 = vpop.permute.xlu0 %1151
        %v1154 = vsel %vm334, %v1114, %v1144
        %vm1155 = vcmask 130048
        %v1156 = vsel %vm1155, %v1154, %v1148
        %vm1157 = vcmask 195584
        %v1158 = vsel %vm1157, %v1156, %v1152
        %vm1159 = vcmask 261120
        %1160 = vst.msk [vmem:[%s311] sm:$0xff] %vm1159, %v1158
      $region44: #{encoder.10} parent=35 // pred_fallthru
        _
      %p1161 = scmp.lt.s32.totalorder %s20, 1
      %s1162 = scalar_select %p1161, %s20, 1
      %p1163 = scmp.lt.s32.totalorder %s21, 0
      %s1164 = scalar_select %p1163, %s21, 0
      %s1165 = sadd.s32 %s1164, %s1162
      %s1166 = smul.addr %s1165, 8
      %s1167 = scalar_lea.vmem %s4, %s1166
      // Predicated region
      $region45: #{encoder.10} parent=35 // pred_check
        %p1168 = pneg %p166
      $region46: #{encoder.10} parent=35 // pred_check_branch
        %1170 = sbr.rel (%p1168) target = $region48
      $region47: #{encoder.10} parent=35 // pred_region
        _
      $region48: #{encoder.10} parent=35 // pred_fallthru
        _
    $region36: #{encoder.10} parent=5 // pred_fallthru
      _
    %p1171 = scmp.le.s32.totalorder 2, %s10
    // Predicated region
    $region49: #{encoder.10} parent=5 // pred_check
      %p1172 = pneg %p1171
    $region50: #{encoder.10} parent=5 // pred_check_branch
      %1174 = sbr.rel (%p1172) target = $region52
    $region51: #{encoder.10} parent=5 // pred_region
      %s1175 = ssub.s32 %s10, 2
      // Predicated region
      $region53: #{encoder.10} parent=51 // pred_check
        %p1176 = pneg %p172
      $region54: #{encoder.10} parent=51 // pred_check_branch
        %1178 = sbr.rel (%p1176) target = $region56
      $region55: #{encoder.10} parent=51 // pred_region
        %p1179 = scmp.lt.s32.totalorder %s23, 1
        %s1180 = scalar_select %p1179, %s23, 1
        %p1181 = scmp.lt.s32.totalorder %s24, 0
        %s1182 = scalar_select %p1181, %s24, 0
        %s1183 = sadd.s32 %s1182, %s1180
        %s1184 = smul.addr %s1183, 8
        %s1185 = scalar_lea.vmem %s4, %s1184
      $region56: #{encoder.10} parent=51 // pred_fallthru
        _
    $region52: #{encoder.10} parent=5 // pred_fallthru
      _
  $region6: #{encoder.10} parent=0 // loop_footer
    %s14 = sadd.s32 1, %s10
  $region7: #{encoder.10} parent=0 // loop_footer_branch
    %9 = sbr.rel target = $region3
  $region8: #{encoder.10} parent=0 // loop_exit
    _

// kernel: encoder.12
$region0: #{encoder.12}
  #allocation0 [shape = 'u32[]', space=smem, size = 0x4, offset = 0x4, fixed_abs, tag = 'smem constant byte address 0x4 - core index']
  #allocation1 [shape = 'u32[144,128]{1,0:T(1,128)}', space=vmem, size = 0x12000, scoped, tag = 'internal scratch']
  %s0 = inlined_call_operand.vmem [shape: f32[16,32], index: 0, kind: input, shape index: {}]
  %s1 = inlined_call_operand.vmem [shape: f32[1,32], index: 1, kind: input, shape index: {}]
  %s2 = inlined_call_operand.vmem [shape: f32[1,32], index: 2, kind: input, shape index: {}]
  %s3 = inlined_call_operand.vmem [shape: f32[32,64], index: 3, kind: input, shape index: {}]
  %s4 = inlined_call_operand.vmem [shape: f32[1,64], index: 4, kind: input, shape index: {}]
  %s5 = inlined_call_operand.vmem [shape: f32[64,32], index: 5, kind: input, shape index: {}]
  %s6 = inlined_call_operand.vmem [shape: f32[1,32], index: 6, kind: input, shape index: {}]
  %s7 = inlined_call_operand.vmem [shape: f32[16,32], index: 7, kind: output, shape index: {}]
  %s8 = sld [smem:[#allocation0]]
  $region38: #{encoder.12} parent=0
    _
  %s10 = ssub.s32 1, %s8
  %s11 = scalar_select 0, %s10, %s8
  // Predicated region
  $region2: #{encoder.12} parent=0 // pred_check
    _
  $region3: #{encoder.12} parent=0 // pred_check_branch
    %13 = sbr.rel (0) target = $region5
  $region4: #{encoder.12} parent=0 // pred_region
    _
  $region5: #{encoder.12} parent=0 // pred_fallthru
    _
  // Predicated region
  $region6: #{encoder.12} parent=0 // pred_check
    _
  $region7: #{encoder.12} parent=0 // pred_check_branch
    %15 = sbr.rel (0) target = $region9
  $region8: #{encoder.12} parent=0 // pred_region
    _
  $region9: #{encoder.12} parent=0 // pred_fallthru
    _
  // Predicated region
  $region10: #{encoder.12} parent=0 // pred_check
    _
  $region11: #{encoder.12} parent=0 // pred_check_branch
    %17 = sbr.rel (0) target = $region13
  $region12: #{encoder.12} parent=0 // pred_region
    _
  $region13: #{encoder.12} parent=0 // pred_fallthru
    _
  // Predicated region
  $region14: #{encoder.12} parent=0 // pred_check
    _
  $region15: #{encoder.12} parent=0 // pred_check_branch
    %19 = sbr.rel (0) target = $region17
  $region16: #{encoder.12} parent=0 // pred_region
    _
  $region17: #{encoder.12} parent=0 // pred_fallthru
    _
  // Predicated region
  $region18: #{encoder.12} parent=0 // pred_check
    _
  $region19: #{encoder.12} parent=0 // pred_check_branch
    %21 = sbr.rel (0) target = $region21
  $region20: #{encoder.12} parent=0 // pred_region
    _
  $region21: #{encoder.12} parent=0 // pred_fallthru
    _
  // Predicated region
  $region22: #{encoder.12} parent=0 // pred_check
    _
  $region23: #{encoder.12} parent=0 // pred_check_branch
    %23 = sbr.rel (0) target = $region25
  $region24: #{encoder.12} parent=0 // pred_region
    _
  $region25: #{encoder.12} parent=0 // pred_fallthru
    _
  // Predicated region
  $region26: #{encoder.12} parent=0 // pred_check
    _
  $region27: #{encoder.12} parent=0 // pred_check_branch
    %25 = sbr.rel (0) target = $region29
  $region28: #{encoder.12} parent=0 // pred_region
    _
  $region29: #{encoder.12} parent=0 // pred_fallthru
    _
  %v26 = vld [vmem:[%s0] sm:$0xff]
  %v27 = vld [vmem:[%s0 + $0x8] sm:$0xff]
  %vm28 = vcmask 261120
  %v29 = vsel %vm28, %v26, 0.0
  %30 = vadd.xlane.f32.xlu0 %v29
  %v31 = vpop.xlane.xlu0 %30
  %v32 = vsel %vm28, %v27, 0.0
  %33 = vadd.xlane.f32.xlu0 %v32
  %v34 = vpop.xlane.xlu0 %33
  %v35 = vrcp.pop 32.0
  %v36 = vmul.f32 %v31, %v35
  %v37 = vmul.f32 %v34, %v35
  %v38 = vsub.f32 %v26, %v36
  %v39 = vsub.f32 %v27, %v37
  %v40 = vmul.f32 %v38, %v38
  %v41 = vmul.f32 %v39, %v39
  %v42 = vsel %vm28, %v40, 0.0
  %43 = vadd.xlane.f32.xlu0 %v42
  %v44 = vpop.xlane.xlu0 %43
  %v45 = vsel %vm28, %v41, 0.0
  %46 = vadd.xlane.f32.xlu0 %v45
  %v47 = vpop.xlane.xlu0 %46
  %v48 = vrcp.pop 31.0
  %v49 = vmul.f32 %v44, %v48
  %v50 = vmul.f32 %v47, %v48
  %v51 = vld [vmem:[%s1] sm:$0x1]
  %v53 = vlaneseq
  %v54 = vshrl.u32 %v53, 7
  %v55 = vsub.s32 0, %v54
  %v56 = vrot.slane %v51, %v55
  %v58 = vmul.f32 %v56, %v38
  %v59 = vmul.f32 %v56, %v39
  %v60 = vrsqrt.pop %v49
  %v61 = vmul.f32 %v49, %v60
  %vm62 = vcmp.eq.f32.partialorder %v49, inf
  %v63 = vsel %vm62, %v49, %v61
  %vm64 = vcmp.eq.f32.partialorder %v49, 0.0
  %v65 = vand.u32 %v49, 2147483648
  %v66 = vsel %vm64, %v65, %v63
  %v67 = vrsqrt.pop %v50
  %v68 = vmul.f32 %v50, %v67
  %vm69 = vcmp.eq.f32.partialorder %v50, inf
  %v70 = vsel %vm69, %v50, %v68
  %vm71 = vcmp.eq.f32.partialorder %v50, 0.0
  %v72 = vand.u32 %v50, 2147483648
  %v73 = vsel %vm71, %v72, %v70
  %v74 = vadd.f32 %v66, 1e-06
  %v75 = vadd.f32 %v73, 1e-06
  %v76 = vrcp.pop %v74
  %v77 = vmul.f32 %v58, %v76
  %v78 = vrcp.pop %v75
  %v79 = vmul.f32 %v59, %v78
  %v80 = vld [vmem:[%s2] sm:$0x1]
  %v82 = vlaneseq
  %v83 = vshrl.u32 %v82, 7
  %v84 = vsub.s32 0, %v83
  %v85 = vrot.slane %v80, %v84
  %v87 = vadd.f32 %v77, %v85
  %v88 = vadd.f32 %v79, %v85
  %v89 = vld [vmem:[%s3] sm:$0xff]
  %v90 = vld [vmem:[%s3 + $0x8] sm:$0xff]
  %v91 = vld [vmem:[%s3 + $0x10] sm:$0xff]
  %v92 = vld [vmem:[%s3 + $0x18] sm:$0xff]
  %v93 = vld [vmem:[%s4] sm:$0x1]
  %v95 = vlaneseq
  %v96 = vshrl.u32 %v95, 7
  %v97 = vsub.s32 0, %v96
  %v98 = vrot.slane %v93, %v97
  %v101 = vsel %vm28, %v87, 0
  %v104 = vsel %vm28, %v88, 0
  %106 = vmatprep.subr.mxu0 0.0
  %107 = vmatpush1.msra.mxu0 0.0
  %108 = vmatprep.subr.mxu0 0.0
  %109 = vmatpush1.msra.mxu0 0.0
  %110 = vmatprep.subr.mxu0 0.0
  %111 = vmatpush1.msra.mxu0 0.0
  %112 = vmatprep.subr.mxu0 0.0
  %113 = vmatpush1.msra.mxu0 0.0
  %114 = vmatprep.subr.mxu0 0.0
  %115 = vmatpush1.msra.mxu0 0.0
  %116 = vmatprep.subr.mxu0 0.0
  %117 = vmatpush1.msra.mxu0 0.0
  %118 = vmatprep.subr.mxu0 0.0
  %119 = vmatpush1.msra.mxu0 0.0
  %120 = vmatprep.subr.mxu0 0.0
  %121 = vmatpush1.msra.mxu0 0.0
  %122 = vmatprep.subr.mxu0 0.0
  %123 = vmatpush1.msra.mxu0 0.0
  %124 = vmatprep.subr.mxu0 0.0
  %125 = vmatpush1.msra.mxu0 0.0
  %126 = vmatprep.subr.mxu0 0.0
  %127 = vmatpush1.msra.mxu0 0.0
  %128 = vmatprep.subr.mxu0 0.0
  %129 = vmatpush1.msra.mxu0 0.0
  %130 = vmatprep.subr.mxu0 0.0
  %131 = vmatpush1.msra.mxu0 %v92
  %132 = vmatprep.subr.mxu0 0.0
  %133 = vmatpush1.msra.mxu0 %v91
  %134 = vmatprep.subr.mxu0 0.0
  %135 = vmatpush1.msra.mxu0 %v90
  %136 = vmatprep.subr.mxu0 0.0
  %137 = vmatpush1.msra.mxu0 %v89
  %138 = vmatprep.subr.mxu0 0.0
  %139 = vmatpush2.msra.mxu0 0.0
  %140 = vmatprep.subr.mxu0 0.0
  %141 = vmatpush2.msra.mxu0 0.0
  %142 = vmatprep.subr.mxu0 0.0
  %143 = vmatpush2.msra.mxu0 0.0
  %144 = vmatprep.subr.mxu0 0.0
  %145 = vmatpush2.msra.mxu0 0.0
  %146 = vmatprep.subr.mxu0 0.0
  %147 = vmatpush2.msra.mxu0 0.0
  %148 = vmatprep.subr.mxu0 0.0
  %149 = vmatpush2.msra.mxu0 0.0
  %150 = vmatprep.subr.mxu0 0.0
  %151 = vmatpush2.msra.mxu0 0.0
  %152 = vmatprep.subr.mxu0 0.0
  %153 = vmatpush2.msra.mxu0 0.0
  %154 = vmatprep.subr.mxu0 0.0
  %155 = vmatpush2.msra.mxu0 0.0
  %156 = vmatprep.subr.mxu0 0.0
  %157 = vmatpush2.msra.mxu0 0.0
  %158 = vmatprep.subr.mxu0 0.0
  %159 = vmatpush2.msra.mxu0 0.0
  %160 = vmatprep.subr.mxu0 0.0
  %161 = vmatpush2.msra.mxu0 0.0
  %162 = vmatprep.subr.mxu0 0.0
  %163 = vmatpush2.msra.mxu0 0.0
  %164 = vmatprep.subr.mxu0 0.0
  %165 = vmatpush2.msra.mxu0 0.0
  %166 = vmatprep.subr.mxu0 0.0
  %167 = vmatpush2.msra.mxu0 0.0
  %168 = vmatprep.subr.mxu0 0.0
  %169 = vmatpush2.msra.mxu0 0.0
  %170 = vmatprep.mubr.f32.mxu0 0.0
  %171 = vmatmul.mubr.f32.gmra.mxu0 %v101
  %v172 = vpop.f32.mrf.mxu0
  %v173 = vadd.f32 %v98, %v172
  %v174 = vpop.f32.mrf.mxu0
  %175 = vmatprep.mubr.f32.mxu0 0.0
  %176 = vmatmul.mubr.f32.gmra.mxu0 %v104
  %v177 = vpop.f32.mrf.mxu0
  %v178 = vadd.f32 %v98, %v177
  %v179 = vpop.f32.mrf.mxu0
  %180 = vdwg.mxu0
  %v181 = vmax.f32 %v173, 0.0
  %v182 = vmax.f32 %v178, 0.0
  %v183 = vld [vmem:[%s5] sm:$0xff]
  %v184 = vld [vmem:[%s5 + $0x8] sm:$0xff]
  %v185 = vld [vmem:[%s5 + $0x10] sm:$0xff]
  %v186 = vld [vmem:[%s5 + $0x18] sm:$0xff]
  %v187 = vld [vmem:[%s5 + $0x20] sm:$0xff]
  %v188 = vld [vmem:[%s5 + $0x28] sm:$0xff]
  %v189 = vld [vmem:[%s5 + $0x30] sm:$0xff]
  %v190 = vld [vmem:[%s5 + $0x38] sm:$0xff]
  %v191 = vld [vmem:[%s6] sm:$0x1]
  %v193 = vlaneseq
  %v194 = vshrl.u32 %v193, 7
  %v195 = vsub.s32 0, %v194
  %v196 = vrot.slane %v191, %v195
  %vm198 = vcmask 523264
  %v200 = vsel %vm198, %v181, 0
  %v203 = vsel %vm198, %v182, 0
  %205 = vmatprep.subr.mxu0 0.0
  %206 = vmatpush1.msra.mxu0 0.0
  %207 = vmatprep.subr.mxu0 0.0
  %208 = vmatpush1.msra.mxu0 0.0
  %209 = vmatprep.subr.mxu0 0.0
  %210 = vmatpush1.msra.mxu0 0.0
  %211 = vmatprep.subr.mxu0 0.0
  %212 = vmatpush1.msra.mxu0 0.0
  %213 = vmatprep.subr.mxu0 0.0
  %214 = vmatpush1.msra.mxu0 0.0
  %215 = vmatprep.subr.mxu0 0.0
  %216 = vmatpush1.msra.mxu0 0.0
  %217 = vmatprep.subr.mxu0 0.0
  %218 = vmatpush1.msra.mxu0 0.0
  %219 = vmatprep.subr.mxu0 0.0
  %220 = vmatpush1.msra.mxu0 0.0
  %221 = vmatprep.subr.mxu0 0.0
  %222 = vmatpush1.msra.mxu0 %v190
  %223 = vmatprep.subr.mxu0 0.0
  %224 = vmatpush1.msra.mxu0 %v189
  %225 = vmatprep.subr.mxu0 0.0
  %226 = vmatpush1.msra.mxu0 %v188
  %227 = vmatprep.subr.mxu0 0.0
  %228 = vmatpush1.msra.mxu0 %v187
  %229 = vmatprep.subr.mxu0 0.0
  %230 = vmatpush1.msra.mxu0 %v186
  %231 = vmatprep.subr.mxu0 0.0
  %232 = vmatpush1.msra.mxu0 %v185
  %233 = vmatprep.subr.mxu0 0.0
  %234 = vmatpush1.msra.mxu0 %v184
  %235 = vmatprep.subr.mxu0 0.0
  %236 = vmatpush1.msra.mxu0 %v183
  %237 = vmatprep.subr.mxu0 0.0
  %238 = vmatpush2.msra.mxu0 0.0
  %239 = vmatprep.subr.mxu0 0.0
  %240 = vmatpush2.msra.mxu0 0.0
  %241 = vmatprep.subr.mxu0 0.0
  %242 = vmatpush2.msra.mxu0 0.0
  %243 = vmatprep.subr.mxu0 0.0
  %244 = vmatpush2.msra.mxu0 0.0
  %245 = vmatprep.subr.mxu0 0.0
  %246 = vmatpush2.msra.mxu0 0.0
  %247 = vmatprep.subr.mxu0 0.0
  %248 = vmatpush2.msra.mxu0 0.0
  %249 = vmatprep.subr.mxu0 0.0
  %250 = vmatpush2.msra.mxu0 0.0
  %251 = vmatprep.subr.mxu0 0.0
  %252 = vmatpush2.msra.mxu0 0.0
  %253 = vmatprep.subr.mxu0 0.0
  %254 = vmatpush2.msra.mxu0 0.0
  %255 = vmatprep.subr.mxu0 0.0
  %256 = vmatpush2.msra.mxu0 0.0
  %257 = vmatprep.subr.mxu0 0.0
  %258 = vmatpush2.msra.mxu0 0.0
  %259 = vmatprep.subr.mxu0 0.0
  %260 = vmatpush2.msra.mxu0 0.0
  %261 = vmatprep.subr.mxu0 0.0
  %262 = vmatpush2.msra.mxu0 0.0
  %263 = vmatprep.subr.mxu0 0.0
  %264 = vmatpush2.msra.mxu0 0.0
  %265 = vmatprep.subr.mxu0 0.0
  %266 = vmatpush2.msra.mxu0 0.0
  %267 = vmatprep.subr.mxu0 0.0
  %268 = vmatpush2.msra.mxu0 0.0
  %269 = vmatprep.mubr.f32.mxu0 0.0
  %270 = vmatmul.mubr.f32.gmra.mxu0 %v200
  %v271 = vpop.f32.mrf.mxu0
  %v272 = vadd.f32 %v196, %v271
  %v273 = vpop.f32.mrf.mxu0
  %274 = vmatprep.mubr.f32.mxu0 0.0
  %275 = vmatmul.mubr.f32.gmra.mxu0 %v203
  %v276 = vpop.f32.mrf.mxu0
  %v277 = vadd.f32 %v196, %v276
  %v278 = vpop.f32.mrf.mxu0
  %279 = vdwg.mxu0
  %v280 = vadd.f32 %v272, %v26
  %v281 = vadd.f32 %v277, %v27
  %282 = vst.msk [vmem:[%s7] sm:$0xff] %vm28, %v280
  %283 = vst.msk [vmem:[%s7 + $0x8] sm:$0xff] %vm28, %v281
  // Predicated region
  $region30: #{encoder.12} parent=0 // pred_check
    _
  $region31: #{encoder.12} parent=0 // pred_check_branch
    %285 = sbr.rel (0) target = $region33
  $region32: #{encoder.12} parent=0 // pred_region
    _
  $region33: #{encoder.12} parent=0 // pred_fallthru
    _
  // Predicated region
  $region34: #{encoder.12} parent=0 // pred_check
    _
  $region35: #{encoder.12} parent=0 // pred_check_branch
    %287 = sbr.rel (0) target = $region37
  $region36: #{encoder.12} parent=0 // pred_region
    _
  $region37: #{encoder.12} parent=0 // pred_fallthru
    _

// kernel: encoder.17
$region0: #{encoder.17}
  #allocation0 [shape = 'u32[]', space=smem, size = 0x4, offset = 0x4, fixed_abs, tag = 'smem constant byte address 0x4 - core index']
  #allocation1 [shape = 'u32[144,128]{1,0:T(1,128)}', space=vmem, size = 0x12000, scoped, tag = 'internal scratch']
  %s0 = inlined_call_operand.vmem [shape: f32[16,32], index: 0, kind: input, shape index: {}]
  %s1 = inlined_call_operand.vmem [shape: f32[1,32], index: 1, kind: input, shape index: {}]
  %s2 = inlined_call_operand.vmem [shape: f32[1,32], index: 2, kind: input, shape index: {}]
  %s3 = inlined_call_operand.hbm [shape: f32[16,32], index: 3, kind: output, shape index: {}]
  %s4 = sld [smem:[#allocation0]]
  $region22: #{encoder.17} parent=0
    _
  %s6 = ssub.s32 1, %s4
  %s7 = scalar_select 0, %s6, %s4
  $region1: #{encoder.17} parent=0
    #allocation2 [shape = 'u8[8192]{0}', space=vmem, size = 0x2000, scoped, tag = 'output window, operand 0, single buffered']
    #allocation3 [shape = 's32[1]{0}', space=sflag, size = 0x4, scoped, tag = 'scoped memory for encoder.17']
    %8 = vsyncpa [#allocation3], 0
    // Predicated region
    $region2: #{encoder.17} parent=1 // pred_check
      _
    $region3: #{encoder.17} parent=1 // pred_check_branch
      %10 = sbr.rel (0) target = $region5
    $region4: #{encoder.17} parent=1 // pred_region
      _
    $region5: #{encoder.17} parent=1 // pred_fallthru
      _
    // Predicated region
    $region6: #{encoder.17} parent=1 // pred_check
      _
    $region7: #{encoder.17} parent=1 // pred_check_branch
      %12 = sbr.rel (0) target = $region9
    $region8: #{encoder.17} parent=1 // pred_region
      _
    $region9: #{encoder.17} parent=1 // pred_fallthru
      _
    // Predicated region
    $region10: #{encoder.17} parent=1 // pred_check
      _
    $region11: #{encoder.17} parent=1 // pred_check_branch
      %14 = sbr.rel (0) target = $region13
    $region12: #{encoder.17} parent=1 // pred_region
      _
    $region13: #{encoder.17} parent=1 // pred_fallthru
      _
    %v15 = vld [vmem:[%s0] sm:$0xff]
    %v16 = vld [vmem:[%s0 + $0x8] sm:$0xff]
    %vm17 = vcmask 261120
    %v18 = vsel %vm17, %v15, 0.0
    %19 = vadd.xlane.f32.xlu0 %v18
    %v20 = vpop.xlane.xlu0 %19
    %v21 = vsel %vm17, %v16, 0.0
    %22 = vadd.xlane.f32.xlu0 %v21
    %v23 = vpop.xlane.xlu0 %22
    %v24 = vrcp.pop 32.0
    %v25 = vmul.f32 %v20, %v24
    %v26 = vmul.f32 %v23, %v24
    %v27 = vsub.f32 %v15, %v25
    %v28 = vsub.f32 %v16, %v26
    %v29 = vmul.f32 %v27, %v27
    %v30 = vmul.f32 %v28, %v28
    %v31 = vsel %vm17, %v29, 0.0
    %32 = vadd.xlane.f32.xlu0 %v31
    %v33 = vpop.xlane.xlu0 %32
    %v34 = vsel %vm17, %v30, 0.0
    %35 = vadd.xlane.f32.xlu0 %v34
    %v36 = vpop.xlane.xlu0 %35
    %v37 = vrcp.pop 31.0
    %v38 = vmul.f32 %v33, %v37
    %v39 = vmul.f32 %v36, %v37
    %v40 = vld [vmem:[%s1] sm:$0x1]
    %v42 = vlaneseq
    %v43 = vshrl.u32 %v42, 7
    %v44 = vsub.s32 0, %v43
    %v45 = vrot.slane %v40, %v44
    %v47 = vmul.f32 %v45, %v27
    %v48 = vmul.f32 %v45, %v28
    %v49 = vrsqrt.pop %v38
    %v50 = vmul.f32 %v38, %v49
    %vm51 = vcmp.eq.f32.partialorder %v38, inf
    %v52 = vsel %vm51, %v38, %v50
    %vm53 = vcmp.eq.f32.partialorder %v38, 0.0
    %v54 = vand.u32 %v38, 2147483648
    %v55 = vsel %vm53, %v54, %v52
    %v56 = vrsqrt.pop %v39
    %v57 = vmul.f32 %v39, %v56
    %vm58 = vcmp.eq.f32.partialorder %v39, inf
    %v59 = vsel %vm58, %v39, %v57
    %vm60 = vcmp.eq.f32.partialorder %v39, 0.0
    %v61 = vand.u32 %v39, 2147483648
    %v62 = vsel %vm60, %v61, %v59
    %v63 = vadd.f32 %v55, 1e-06
    %v64 = vadd.f32 %v62, 1e-06
    %v65 = vrcp.pop %v63
    %v66 = vmul.f32 %v47, %v65
    %v67 = vrcp.pop %v64
    %v68 = vmul.f32 %v48, %v67
    %v69 = vld [vmem:[%s2] sm:$0x1]
    %v71 = vlaneseq
    %v72 = vshrl.u32 %v71, 7
    %v73 = vsub.s32 0, %v72
    %v74 = vrot.slane %v69, %v73
    %v76 = vadd.f32 %v66, %v74
    %v77 = vadd.f32 %v68, %v74
    %78 = vst.msk [vmem:[#allocation2] sm:$0xff] %vm17, %v76
    %79 = vst.msk [vmem:[#allocation2 + $0x8] sm:$0xff] %vm17, %v77
    // Predicated region
    $region14: #{encoder.17} parent=1 // pred_check
      _
    $region15: #{encoder.17} parent=1 // pred_check_branch
      %81 = sbr.rel (0) target = $region17
    $region16: #{encoder.17} parent=1 // pred_region
      %s83 = ssub.s32 256, 256
      %84 = vsyncadd [#allocation3], %s83
      %s85 = sshll.u32 [#allocation2], 4
      %s86 = int_to_ptr.vmem [resolvable:$true] %s85
      %91 = dma.vmem_to_hbm [thread:$0]  %s86, 256, %s3, [#allocation3], 128, 128, 8
    $region17: #{encoder.17} parent=1 // pred_fallthru
      _
    // Predicated region
    $region18: #{encoder.17} parent=1 // pred_check
      _
    $region19: #{encoder.17} parent=1 // pred_check_branch
      %93 = sbr.rel (0) target = $region21
    $region20: #{encoder.17} parent=1 // pred_region
      %94 = dma.done [#allocation3], 256
    $region21: #{encoder.17} parent=1 // pred_fallthru
      _
    %95 = vsyncpa [#allocation3], 1

// kernel: encoder.13
$region0: #{encoder.13}
  #allocation0 [shape = 'u32[]', space=smem, size = 0x4, offset = 0x4, fixed_abs, tag = 'smem constant byte address 0x4 - core index']
  #allocation1 [shape = 'u32[144,128]{1,0:T(1,128)}', space=vmem, size = 0x12000, scoped, tag = 'internal scratch']
  %s0 = inlined_call_operand.vmem [shape: f32[16,32], index: 0, kind: input, shape index: {}]
  %s1 = inlined_call_operand.vmem [shape: f32[1,32], index: 1, kind: input, shape index: {}]
  %s2 = inlined_call_operand.vmem [shape: f32[1,32], index: 2, kind: input, shape index: {}]
  %s3 = inlined_call_operand.vmem [shape: f32[32,32], index: 3, kind: input, shape index: {}]
  %s4 = inlined_call_operand.vmem [shape: f32[1,32], index: 4, kind: input, shape index: {}]
  %s5 = inlined_call_operand.vmem [shape: f32[32,32], index: 5, kind: input, shape index: {}]
  %s6 = inlined_call_operand.vmem [shape: f32[1,32], index: 6, kind: input, shape index: {}]
  %s7 = inlined_call_operand.vmem [shape: f32[32,32], index: 7, kind: input, shape index: {}]
  %s8 = inlined_call_operand.vmem [shape: f32[1,32], index: 8, kind: input, shape index: {}]
  %s9 = inlined_call_operand.vmem [shape: f32[16,32], index: 9, kind: output, shape index: {0}]
  %s10 = inlined_call_operand.vmem [shape: f32[16,32], index: 10, kind: output, shape index: {1}]
  %s11 = inlined_call_operand.vmem [shape: f32[16,32], index: 11, kind: output, shape index: {2}]
  %12 = xla_tuple %s9, %s10, %s11
  %s13 = sld [smem:[#allocation0]]
  $region62: #{encoder.13} parent=0
    _
  %s15 = ssub.s32 1, %s13
  %s16 = scalar_select 0, %s15, %s13
  // Predicated region
  $region2: #{encoder.13} parent=0 // pred_check
    _
  $region3: #{encoder.13} parent=0 // pred_check_branch
    %18 = sbr.rel (0) target = $region5
  $region4: #{encoder.13} parent=0 // pred_region
    _
  $region5: #{encoder.13} parent=0 // pred_fallthru
    _
  // Predicated region
  $region6: #{encoder.13} parent=0 // pred_check
    _
  $region7: #{encoder.13} parent=0 // pred_check_branch
    %20 = sbr.rel (0) target = $region9
  $region8: #{encoder.13} parent=0 // pred_region
    _
  $region9: #{encoder.13} parent=0 // pred_fallthru
    _
  // Predicated region
  $region10: #{encoder.13} parent=0 // pred_check
    _
  $region11: #{encoder.13} parent=0 // pred_check_branch
    %22 = sbr.rel (0) target = $region13
  $region12: #{encoder.13} parent=0 // pred_region
    _
  $region13: #{encoder.13} parent=0 // pred_fallthru
    _
  // Predicated region
  $region14: #{encoder.13} parent=0 // pred_check
    _
  $region15: #{encoder.13} parent=0 // pred_check_branch
    %24 = sbr.rel (0) target = $region17
  $region16: #{encoder.13} parent=0 // pred_region
    _
  $region17: #{encoder.13} parent=0 // pred_fallthru
    _
  // Predicated region
  $region18: #{encoder.13} parent=0 // pred_check
    _
  $region19: #{encoder.13} parent=0 // pred_check_branch
    %26 = sbr.rel (0) target = $region21
  $region20: #{encoder.13} parent=0 // pred_region
    _
  $region21: #{encoder.13} parent=0 // pred_fallthru
    _
  // Predicated region
  $region22: #{encoder.13} parent=0 // pred_check
    _
  $region23: #{encoder.13} parent=0 // pred_check_branch
    %28 = sbr.rel (0) target = $region25
  $region24: #{encoder.13} parent=0 // pred_region
    _
  $region25: #{encoder.13} parent=0 // pred_fallthru
    _
  // Predicated region
  $region26: #{encoder.13} parent=0 // pred_check
    _
  $region27: #{encoder.13} parent=0 // pred_check_branch
    %30 = sbr.rel (0) target = $region29
  $region28: #{encoder.13} parent=0 // pred_region
    _
  $region29: #{encoder.13} parent=0 // pred_fallthru
    _
  // Predicated region
  $region30: #{encoder.13} parent=0 // pred_check
    _
  $region31: #{encoder.13} parent=0 // pred_check_branch
    %32 = sbr.rel (0) target = $region33
  $region32: #{encoder.13} parent=0 // pred_region
    _
  $region33: #{encoder.13} parent=0 // pred_fallthru
    _
  // Predicated region
  $region34: #{encoder.13} parent=0 // pred_check
    _
  $region35: #{encoder.13} parent=0 // pred_check_branch
    %34 = sbr.rel (0) target = $region37
  $region36: #{encoder.13} parent=0 // pred_region
    _
  $region37: #{encoder.13} parent=0 // pred_fallthru
    _
  %v35 = vld [vmem:[%s0] sm:$0xff]
  %v36 = vld [vmem:[%s0 + $0x8] sm:$0xff]
  %vm37 = vcmask 261120
  %v38 = vsel %vm37, %v35, 0.0
  %39 = vadd.xlane.f32.xlu0 %v38
  %v40 = vpop.xlane.xlu0 %39
  %v41 = vsel %vm37, %v36, 0.0
  %42 = vadd.xlane.f32.xlu0 %v41
  %v43 = vpop.xlane.xlu0 %42
  %v44 = vrcp.pop 32.0
  %v45 = vmul.f32 %v40, %v44
  %v46 = vmul.f32 %v43, %v44
  %v47 = vsub.f32 %v35, %v45
  %v48 = vsub.f32 %v36, %v46
  %v49 = vmul.f32 %v47, %v47
  %v50 = vmul.f32 %v48, %v48
  %v51 = vsel %vm37, %v49, 0.0
  %52 = vadd.xlane.f32.xlu0 %v51
  %v53 = vpop.xlane.xlu0 %52
  %v54 = vsel %vm37, %v50, 0.0
  %55 = vadd.xlane.f32.xlu0 %v54
  %v56 = vpop.xlane.xlu0 %55
  %v57 = vrcp.pop 31.0
  %v58 = vmul.f32 %v53, %v57
  %v59 = vmul.f32 %v56, %v57
  %v60 = vld [vmem:[%s1] sm:$0x1]
  %v62 = vlaneseq
  %v63 = vshrl.u32 %v62, 7
  %v64 = vsub.s32 0, %v63
  %v65 = vrot.slane %v60, %v64
  %v67 = vmul.f32 %v65, %v47
  %v68 = vmul.f32 %v65, %v48
  %v69 = vrsqrt.pop %v58
  %v70 = vmul.f32 %v58, %v69
  %vm71 = vcmp.eq.f32.partialorder %v58, inf
  %v72 = vsel %vm71, %v58, %v70
  %vm73 = vcmp.eq.f32.partialorder %v58, 0.0
  %v74 = vand.u32 %v58, 2147483648
  %v75 = vsel %vm73, %v74, %v72
  %v76 = vrsqrt.pop %v59
  %v77 = vmul.f32 %v59, %v76
  %vm78 = vcmp.eq.f32.partialorder %v59, inf
  %v79 = vsel %vm78, %v59, %v77
  %vm80 = vcmp.eq.f32.partialorder %v59, 0.0
  %v81 = vand.u32 %v59, 2147483648
  %v82 = vsel %vm80, %v81, %v79
  %v83 = vadd.f32 %v75, 1e-06
  %v84 = vadd.f32 %v82, 1e-06
  %v85 = vrcp.pop %v83
  %v86 = vmul.f32 %v67, %v85
  %v87 = vrcp.pop %v84
  %v88 = vmul.f32 %v68, %v87
  %v89 = vld [vmem:[%s2] sm:$0x1]
  %v91 = vlaneseq
  %v92 = vshrl.u32 %v91, 7
  %v93 = vsub.s32 0, %v92
  %v94 = vrot.slane %v89, %v93
  %v96 = vadd.f32 %v86, %v94
  %v97 = vadd.f32 %v88, %v94
  %v98 = vld [vmem:[%s3] sm:$0xff]
  %v99 = vld [vmem:[%s3 + $0x8] sm:$0xff]
  %v100 = vld [vmem:[%s3 + $0x10] sm:$0xff]
  %v101 = vld [vmem:[%s3 + $0x18] sm:$0xff]
  %v102 = vld [vmem:[%s4] sm:$0x1]
  %v104 = vlaneseq
  %v105 = vshrl.u32 %v104, 7
  %v106 = vsub.s32 0, %v105
  %v107 = vrot.slane %v102, %v106
  %v110 = vsel %vm37, %v96, 0
  %v113 = vsel %vm37, %v97, 0
  %115 = vmatprep.subr.mxu0 0.0
  %116 = vmatpush1.msra.mxu0 0.0
  %117 = vmatprep.subr.mxu0 0.0
  %118 = vmatpush1.msra.mxu0 0.0
  %119 = vmatprep.subr.mxu0 0.0
  %120 = vmatpush1.msra.mxu0 0.0
  %121 = vmatprep.subr.mxu0 0.0
  %122 = vmatpush1.msra.mxu0 0.0
  %123 = vmatprep.subr.mxu0 0.0
  %124 = vmatpush1.msra.mxu0 0.0
  %125 = vmatprep.subr.mxu0 0.0
  %126 = vmatpush1.msra.mxu0 0.0
  %127 = vmatprep.subr.mxu0 0.0
  %128 = vmatpush1.msra.mxu0 0.0
  %129 = vmatprep.subr.mxu0 0.0
  %130 = vmatpush1.msra.mxu0 0.0
  %131 = vmatprep.subr.mxu0 0.0
  %132 = vmatpush1.msra.mxu0 0.0
  %133 = vmatprep.subr.mxu0 0.0
  %134 = vmatpush1.msra.mxu0 0.0
  %135 = vmatprep.subr.mxu0 0.0
  %136 = vmatpush1.msra.mxu0 0.0
  %137 = vmatprep.subr.mxu0 0.0
  %138 = vmatpush1.msra.mxu0 0.0
  %139 = vmatprep.subr.mxu0 0.0
  %140 = vmatpush1.msra.mxu0 %v101
  %141 = vmatprep.subr.mxu0 0.0
  %142 = vmatpush1.msra.mxu0 %v100
  %143 = vmatprep.subr.mxu0 0.0
  %144 = vmatpush1.msra.mxu0 %v99
  %145 = vmatprep.subr.mxu0 0.0
  %146 = vmatpush1.msra.mxu0 %v98
  %147 = vmatprep.subr.mxu0 0.0
  %148 = vmatpush2.msra.mxu0 0.0
  %149 = vmatprep.subr.mxu0 0.0
  %150 = vmatpush2.msra.mxu0 0.0
  %151 = vmatprep.subr.mxu0 0.0
  %152 = vmatpush2.msra.mxu0 0.0
  %153 = vmatprep.subr.mxu0 0.0
  %154 = vmatpush2.msra.mxu0 0.0
  %155 = vmatprep.subr.mxu0 0.0
  %156 = vmatpush2.msra.mxu0 0.0
  %157 = vmatprep.subr.mxu0 0.0
  %158 = vmatpush2.msra.mxu0 0.0
  %159 = vmatprep.subr.mxu0 0.0
  %160 = vmatpush2.msra.mxu0 0.0
  %161 = vmatprep.subr.mxu0 0.0
  %162 = vmatpush2.msra.mxu0 0.0
  %163 = vmatprep.subr.mxu0 0.0
  %164 = vmatpush2.msra.mxu0 0.0
  %165 = vmatprep.subr.mxu0 0.0
  %166 = vmatpush2.msra.mxu0 0.0
  %167 = vmatprep.subr.mxu0 0.0
  %168 = vmatpush2.msra.mxu0 0.0
  %169 = vmatprep.subr.mxu0 0.0
  %170 = vmatpush2.msra.mxu0 0.0
  %171 = vmatprep.subr.mxu0 0.0
  %172 = vmatpush2.msra.mxu0 0.0
  %173 = vmatprep.subr.mxu0 0.0
  %174 = vmatpush2.msra.mxu0 0.0
  %175 = vmatprep.subr.mxu0 0.0
  %176 = vmatpush2.msra.mxu0 0.0
  %177 = vmatprep.subr.mxu0 0.0
  %178 = vmatpush2.msra.mxu0 0.0
  %179 = vmatprep.mubr.f32.mxu0 0.0
  %180 = vmatmul.mubr.f32.gmra.mxu0 %v110
  %v181 = vpop.f32.mrf.mxu0
  %v182 = vadd.f32 %v107, %v181
  %v183 = vpop.f32.mrf.mxu0
  %184 = vmatprep.mubr.f32.mxu0 0.0
  %185 = vmatmul.mubr.f32.gmra.mxu0 %v113
  %v186 = vpop.f32.mrf.mxu0
  %v187 = vadd.f32 %v107, %v186
  %v188 = vpop.f32.mrf.mxu0
  %189 = vdwg.mxu0
  %190 = vst.msk [vmem:[%s9] sm:$0xff] %vm37, %v182
  %191 = vst.msk [vmem:[%s9 + $0x8] sm:$0xff] %vm37, %v187
  %v192 = vld [vmem:[%s5] sm:$0xff]
  %v193 = vld [vmem:[%s5 + $0x8] sm:$0xff]
  %v194 = vld [vmem:[%s5 + $0x10] sm:$0xff]
  %v195 = vld [vmem:[%s5 + $0x18] sm:$0xff]
  %v196 = vld [vmem:[%s6] sm:$0x1]
  %v198 = vlaneseq
  %v199 = vshrl.u32 %v198, 7
  %v200 = vsub.s32 0, %v199
  %v201 = vrot.slane %v196, %v200
  %203 = vmatprep.subr.mxu0 0.0
  %204 = vmatpush1.msra.mxu0 0.0
  %205 = vmatprep.subr.mxu0 0.0
  %206 = vmatpush1.msra.mxu0 0.0
  %207 = vmatprep.subr.mxu0 0.0
  %208 = vmatpush1.msra.mxu0 0.0
  %209 = vmatprep.subr.mxu0 0.0
  %210 = vmatpush1.msra.mxu0 0.0
  %211 = vmatprep.subr.mxu0 0.0
  %212 = vmatpush1.msra.mxu0 0.0
  %213 = vmatprep.subr.mxu0 0.0
  %214 = vmatpush1.msra.mxu0 0.0
  %215 = vmatprep.subr.mxu0 0.0
  %216 = vmatpush1.msra.mxu0 0.0
  %217 = vmatprep.subr.mxu0 0.0
  %218 = vmatpush1.msra.mxu0 0.0
  %219 = vmatprep.subr.mxu0 0.0
  %220 = vmatpush1.msra.mxu0 0.0
  %221 = vmatprep.subr.mxu0 0.0
  %222 = vmatpush1.msra.mxu0 0.0
  %223 = vmatprep.subr.mxu0 0.0
  %224 = vmatpush1.msra.mxu0 0.0
  %225 = vmatprep.subr.mxu0 0.0
  %226 = vmatpush1.msra.mxu0 0.0
  %227 = vmatprep.subr.mxu0 0.0
  %228 = vmatpush1.msra.mxu0 %v195
  %229 = vmatprep.subr.mxu0 0.0
  %230 = vmatpush1.msra.mxu0 %v194
  %231 = vmatprep.subr.mxu0 0.0
  %232 = vmatpush1.msra.mxu0 %v193
  %233 = vmatprep.subr.mxu0 0.0
  %234 = vmatpush1.msra.mxu0 %v192
  %235 = vmatprep.subr.mxu0 0.0
  %236 = vmatpush2.msra.mxu0 0.0
  %237 = vmatprep.subr.mxu0 0.0
  %238 = vmatpush2.msra.mxu0 0.0
  %239 = vmatprep.subr.mxu0 0.0
  %240 = vmatpush2.msra.mxu0 0.0
  %241 = vmatprep.subr.mxu0 0.0
  %242 = vmatpush2.msra.mxu0 0.0
  %243 = vmatprep.subr.mxu0 0.0
  %244 = vmatpush2.msra.mxu0 0.0
  %245 = vmatprep.subr.mxu0 0.0
  %246 = vmatpush2.msra.mxu0 0.0
  %247 = vmatprep.subr.mxu0 0.0
  %248 = vmatpush2.msra.mxu0 0.0
  %249 = vmatprep.subr.mxu0 0.0
  %250 = vmatpush2.msra.mxu0 0.0
  %251 = vmatprep.subr.mxu0 0.0
  %252 = vmatpush2.msra.mxu0 0.0
  %253 = vmatprep.subr.mxu0 0.0
  %254 = vmatpush2.msra.mxu0 0.0
  %255 = vmatprep.subr.mxu0 0.0
  %256 = vmatpush2.msra.mxu0 0.0
  %257 = vmatprep.subr.mxu0 0.0
  %258 = vmatpush2.msra.mxu0 0.0
  %259 = vmatprep.subr.mxu0 0.0
  %260 = vmatpush2.msra.mxu0 0.0
  %261 = vmatprep.subr.mxu0 0.0
  %262 = vmatpush2.msra.mxu0 0.0
  %263 = vmatprep.subr.mxu0 0.0
  %264 = vmatpush2.msra.mxu0 0.0
  %265 = vmatprep.subr.mxu0 0.0
  %266 = vmatpush2.msra.mxu0 0.0
  %267 = vmatprep.mubr.f32.mxu0 0.0
  %268 = vmatmul.mubr.f32.gmra.mxu0 %v110
  %v269 = vpop.f32.mrf.mxu0
  %v270 = vadd.f32 %v201, %v269
  %v271 = vpop.f32.mrf.mxu0
  %272 = vmatprep.mubr.f32.mxu0 0.0
  %273 = vmatmul.mubr.f32.gmra.mxu0 %v113
  %v274 = vpop.f32.mrf.mxu0
  %v275 = vadd.f32 %v201, %v274
  %v276 = vpop.f32.mrf.mxu0
  %277 = vdwg.mxu0
  %278 = vst.msk [vmem:[%s10] sm:$0xff] %vm37, %v270
  %279 = vst.msk [vmem:[%s10 + $0x8] sm:$0xff] %vm37, %v275
  %v280 = vld [vmem:[%s7] sm:$0xff]
  %v281 = vld [vmem:[%s7 + $0x8] sm:$0xff]
  %v282 = vld [vmem:[%s7 + $0x10] sm:$0xff]
  %v283 = vld [vmem:[%s7 + $0x18] sm:$0xff]
  %v284 = vld [vmem:[%s8] sm:$0x1]
  %v286 = vlaneseq
  %v287 = vshrl.u32 %v286, 7
  %v288 = vsub.s32 0, %v287
  %v289 = vrot.slane %v284, %v288
  %291 = vmatprep.subr.mxu0 0.0
  %292 = vmatpush1.msra.mxu0 0.0
  %293 = vmatprep.subr.mxu0 0.0
  %294 = vmatpush1.msra.mxu0 0.0
  %295 = vmatprep.subr.mxu0 0.0
  %296 = vmatpush1.msra.mxu0 0.0
  %297 = vmatprep.subr.mxu0 0.0
  %298 = vmatpush1.msra.mxu0 0.0
  %299 = vmatprep.subr.mxu0 0.0
  %300 = vmatpush1.msra.mxu0 0.0
  %301 = vmatprep.subr.mxu0 0.0
  %302 = vmatpush1.msra.mxu0 0.0
  %303 = vmatprep.subr.mxu0 0.0
  %304 = vmatpush1.msra.mxu0 0.0
  %305 = vmatprep.subr.mxu0 0.0
  %306 = vmatpush1.msra.mxu0 0.0
  %307 = vmatprep.subr.mxu0 0.0
  %308 = vmatpush1.msra.mxu0 0.0
  %309 = vmatprep.subr.mxu0 0.0
  %310 = vmatpush1.msra.mxu0 0.0
  %311 = vmatprep.subr.mxu0 0.0
  %312 = vmatpush1.msra.mxu0 0.0
  %313 = vmatprep.subr.mxu0 0.0
  %314 = vmatpush1.msra.mxu0 0.0
  %315 = vmatprep.subr.mxu0 0.0
  %316 = vmatpush1.msra.mxu0 %v283
  %317 = vmatprep.subr.mxu0 0.0
  %318 = vmatpush1.msra.mxu0 %v282
  %319 = vmatprep.subr.mxu0 0.0
  %320 = vmatpush1.msra.mxu0 %v281
  %321 = vmatprep.subr.mxu0 0.0
  %322 = vmatpush1.msra.mxu0 %v280
  %323 = vmatprep.subr.mxu0 0.0
  %324 = vmatpush2.msra.mxu0 0.0
  %325 = vmatprep.subr.mxu0 0.0
  %326 = vmatpush2.msra.mxu0 0.0
  %327 = vmatprep.subr.mxu0 0.0
  %328 = vmatpush2.msra.mxu0 0.0
  %329 = vmatprep.subr.mxu0 0.0
  %330 = vmatpush2.msra.mxu0 0.0
  %331 = vmatprep.subr.mxu0 0.0
  %332 = vmatpush2.msra.mxu0 0.0
  %333 = vmatprep.subr.mxu0 0.0
  %334 = vmatpush2.msra.mxu0 0.0
  %335 = vmatprep.subr.mxu0 0.0
  %336 = vmatpush2.msra.mxu0 0.0
  %337 = vmatprep.subr.mxu0 0.0
  %338 = vmatpush2.msra.mxu0 0.0
  %339 = vmatprep.subr.mxu0 0.0
  %340 = vmatpush2.msra.mxu0 0.0
  %341 = vmatprep.subr.mxu0 0.0
  %342 = vmatpush2.msra.mxu0 0.0
  %343 = vmatprep.subr.mxu0 0.0
  %344 = vmatpush2.msra.mxu0 0.0
  %345 = vmatprep.subr.mxu0 0.0
  %346 = vmatpush2.msra.mxu0 0.0
  %347 = vmatprep.subr.mxu0 0.0
  %348 = vmatpush2.msra.mxu0 0.0
  %349 = vmatprep.subr.mxu0 0.0
  %350 = vmatpush2.msra.mxu0 0.0
  %351 = vmatprep.subr.mxu0 0.0
  %352 = vmatpush2.msra.mxu0 0.0
  %353 = vmatprep.subr.mxu0 0.0
  %354 = vmatpush2.msra.mxu0 0.0
  %355 = vmatprep.mubr.f32.mxu0 0.0
  %356 = vmatmul.mubr.f32.gmra.mxu0 %v110
  %v357 = vpop.f32.mrf.mxu0
  %v358 = vadd.f32 %v289, %v357
  %v359 = vpop.f32.mrf.mxu0
  %360 = vmatprep.mubr.f32.mxu0 0.0
  %361 = vmatmul.mubr.f32.gmra.mxu0 %v113
  %v362 = vpop.f32.mrf.mxu0
  %v363 = vadd.f32 %v289, %v362
  %v364 = vpop.f32.mrf.mxu0
  %365 = vdwg.mxu0
  %366 = vst.msk [vmem:[%s11] sm:$0xff] %vm37, %v358
  %367 = vst.msk [vmem:[%s11 + $0x8] sm:$0xff] %vm37, %v363
  // Predicated region
  $region38: #{encoder.13} parent=0 // pred_check
    _
  $region39: #{encoder.13} parent=0 // pred_check_branch
    %369 = sbr.rel (0) target = $region41
  $region40: #{encoder.13} parent=0 // pred_region
    _
  $region41: #{encoder.13} parent=0 // pred_fallthru
    _
  // Predicated region
  $region42: #{encoder.13} parent=0 // pred_check
    _
  $region43: #{encoder.13} parent=0 // pred_check_branch
    %371 = sbr.rel (0) target = $region45
  $region44: #{encoder.13} parent=0 // pred_region
    _
  $region45: #{encoder.13} parent=0 // pred_fallthru
    _
  // Predicated region
  $region46: #{encoder.13} parent=0 // pred_check
    _
  $region47: #{encoder.13} parent=0 // pred_check_branch
    %373 = sbr.rel (0) target = $region49
  $region48: #{encoder.13} parent=0 // pred_region
    _
  $region49: #{encoder.13} parent=0 // pred_fallthru
    _
  // Predicated region
  $region50: #{encoder.13} parent=0 // pred_check
    _
  $region51: #{encoder.13} parent=0 // pred_check_branch
    %375 = sbr.rel (0) target = $region53
  $region52: #{encoder.13} parent=0 // pred_region
    _
  $region53: #{encoder.13} parent=0 // pred_fallthru
    _
  // Predicated region
  $region54: #{encoder.13} parent=0 // pred_check
    _
  $region55: #{encoder.13} parent=0 // pred_check_branch
    %377 = sbr.rel (0) target = $region57
  $region56: #{encoder.13} parent=0 // pred_region
    _
  $region57: #{encoder.13} parent=0 // pred_fallthru
    _
  // Predicated region
  $region58: #{encoder.13} parent=0 // pred_check
    _
  $region59: #{encoder.13} parent=0 // pred_check_branch
    %379 = sbr.rel (0) target = $region61
  $region60: #{encoder.13} parent=0 // pred_region
    _
  $region61: #{encoder.13} parent=0 // pred_fallthru
    _

</llo_original>
